<compile_context>
chip_gen: v6e
topology: v6e:2x2x1
jax: 0.10.0
libtpu: 0.0.40
codegen_flags: <defaults>
</compile_context>

<pallas_src>
import jax
import jax.numpy as jnp
from jax.experimental import pallas as pl
from jax.experimental.pallas import tpu as pltpu

V = 128        # vertices (small synthetic mesh)
K = 64         # eigenpairs (stand-in for k_eig=512)
C_IN = 7       # verts(3) + norm(3) + geo(1)
C_IN_PAD = 8   # pad contracting dim of first linear
C_W = 32
C_OUT = 3
OUT_PAD = 128  # lane-dense padded output width
N_BLOCK = 4


def diffusionnet_kernel(feat_ref, evecsTm_ref, evecs_ref, gxy_ref, coef_ref,
                        arot_ref,
                        wf_ref, bf_ref,
                        w1_ref, b1_ref, w2_ref, b2_ref,
                        wl_ref, bl_ref,
                        out_ref):
    f32 = jnp.float32

    # first_lin: (V, C_IN) -> (V, C_W)
    x = jnp.dot(feat_ref[...], wf_ref[...], preferred_element_type=f32) + bf_ref[...]

    for b in range(N_BLOCK):
        # --- LearnedTimeDiffusion (spectral); mass folded into evecs^T,
        #     exp(-evals * clamp(t)) precomputed per block in the wrapper ---
        x_spec = jnp.dot(evecsTm_ref[...], x, preferred_element_type=f32)     # (K, C_W)
        x_diff = jnp.dot(evecs_ref[...], coef_ref[b] * x_spec,
                         preferred_element_type=f32)                          # (V, C_W)

        # --- SpatialGradientFeatures: one M=2V matmul for both gradients,
        #     one 2C_W x 2C_W matmul for the fused complex rotation ---
        gxy = jnp.dot(gxy_ref[...], x_diff, preferred_element_type=f32)       # (2V, C_W)
        g = jnp.concatenate([gxy[:V], gxy[V:]], axis=-1)                      # (V, 2C_W) = [gx|gy]
        rb = jnp.dot(g, arot_ref[b], preferred_element_type=f32)              # (V, 2C_W) = [bre|bim]
        gb = g * rb
        grad_feat = jnp.tanh(gb[:, :C_W] + gb[:, C_W:])                       # (V, C_W)

        # --- MiniMLP([3*C_W, C_W, C_W]): single fused K=3*C_W first matmul ---
        xcat = jnp.concatenate([x, x_diff, grad_feat], axis=-1)               # (V, 3*C_W)
        h = jnp.maximum(
            jnp.dot(xcat, w1_ref[b], preferred_element_type=f32) + b1_ref[b], 0.0)
        # TODO(synk): nn.Dropout(p=0.5) omitted -- eval-mode forward.
        x = jnp.dot(h, w2_ref[b], preferred_element_type=f32) + b2_ref[b] + x  # residual

    # last_lin (lane-dense: padded to 128 channels); last_activation=None
    out_ref[...] = jnp.dot(x, wl_ref[...], preferred_element_type=f32) + bl_ref[...]


def diffusionnet_forward(features, mass, evals, evecs, gradX, gradY, params):
    f32 = jnp.float32
    feat_pad = jnp.pad(features.astype(f32), ((0, 0), (0, C_IN_PAD - C_IN)))
    wf_pad = jnp.pad(params["w_first"], ((0, C_IN_PAD - C_IN), (0, 0)))

    # Fold mass into evecs^T (constant-operator algebra, not per-call rescaling).
    evecsT_m = evecs.T.astype(f32) * mass[None, :].astype(f32)                 # (K, V)

    # Stack gradX/gradY on sublanes -> single (2V, V) matmul operand.
    gradXY = jnp.concatenate([gradX, gradY], axis=0).astype(f32)               # (2V, V)

    # Precompute spectral diffusion coefficients exp(-evals * max(t, 1e-8)).
    t = jnp.maximum(params["t"], 1e-8)                                         # (NB, 1, C_W)
    diff_coef = jnp.exp(-evals[None, :, None].astype(f32) * t)                 # (NB, K, C_W)

    # Fused complex-rotation matrix: [gx|gy] @ A = [bre|bim].
    a_re, a_im = params["a_re"], params["a_im"]
    a_rot = jnp.concatenate(
        [jnp.concatenate([a_re, a_im], axis=-1),
         jnp.concatenate([-a_im, a_re], axis=-1)], axis=-2)                    # (NB, 2C_W, 2C_W)

    # Stack the split MiniMLP first-layer weights -> (NB, 3*C_W, C_W).
    w1_cat = params["w1"].reshape(N_BLOCK, 3 * C_W, C_W)

    # Lane-dense output: pad last linear to 128 output channels.
    wl_pad = jnp.pad(params["w_last"], ((0, 0), (0, OUT_PAD - C_OUT)))
    bl_pad = jnp.pad(params["b_last"], ((0, 0), (0, OUT_PAD - C_OUT)))

    inputs = (
        feat_pad, evecsT_m, evecs.astype(f32), gradXY, diff_coef, a_rot,
        wf_pad, params["b_first"],
        w1_cat, params["b1"], params["w2"], params["b2"],
        wl_pad, bl_pad,
    )
    vmem = pl.BlockSpec(memory_space=pltpu.MemorySpace.VMEM)
    out = pl.pallas_call(
        diffusionnet_kernel,
        out_shape=jax.ShapeDtypeStruct((V, OUT_PAD), jnp.float32),
        in_specs=[vmem] * len(inputs),
        out_specs=vmem,
    )(*inputs)
    return out[:, :C_OUT]


def diffusionnet_reference(features, mass, evals, evecs, gradX, gradY, params):
    """Pure-JAX reference mirroring diffusion_net.layers.DiffusionNet (eval mode)."""
    x = features @ params["w_first"] + params["b_first"]
    for b in range(N_BLOCK):
        t = jnp.maximum(params["t"][b], 1e-8)
        x_spec = evecs.T @ (mass[:, None] * x)
        x_diff = evecs @ (jnp.exp(-evals[:, None] * t) * x_spec)
        gx = gradX @ x_diff
        gy = gradY @ x_diff
        bre = gx @ params["a_re"][b] - gy @ params["a_im"][b]
        bim = gy @ params["a_re"][b] + gx @ params["a_im"][b]
        gf = jnp.tanh(gx * bre + gy * bim)
        h = (x @ params["w1"][b, 0] + x_diff @ params["w1"][b, 1]
             + gf @ params["w1"][b, 2] + params["b1"][b])
        h = jnp.maximum(h, 0.0)
        x = h @ params["w2"][b] + params["b2"][b] + x
    return x @ params["w_last"] + params["b_last"]


def _uniform(key, shape, fan_in):
    lim = 1.0 / float(fan_in) ** 0.5
    return jax.random.uniform(key, shape, minval=-lim, maxval=lim, dtype=jnp.float32)


if __name__ == "__main__":
    key = jax.random.PRNGKey(0)
    ks = jax.random.split(key, 10)

    # ---- synthetic "data" (pos / norm / geo) + normalize_positions ----
    pos = jax.random.normal(ks[0], (V, 3), dtype=jnp.float32)
    pos = pos - jnp.mean(pos, axis=0, keepdims=True)
    pos = pos / jnp.max(jnp.linalg.norm(pos, axis=1))
    norm = jax.random.normal(ks[1], (V, 3), dtype=jnp.float32)
    norm = norm / jnp.linalg.norm(norm, axis=1, keepdims=True)
    geo = jax.random.uniform(ks[2], (V,), dtype=jnp.float32)
    features = jnp.concatenate([pos, norm, geo[:, None]], axis=1)  # (V, 7)

    # ---- synthetic geometry operators (get_operators stand-ins) ----
    # TODO(synk): real mass/evals/evecs/gradX/gradY come from a sparse Laplacian
    # eigensolve + tangent-frame gradient operators; synthesized dense here.
    mass = jax.random.uniform(ks[3], (V,), minval=0.5, maxval=1.5, dtype=jnp.float32)
    evals = jnp.sort(jax.random.uniform(ks[4], (K,), minval=0.0, maxval=10.0,
                                        dtype=jnp.float32))
    evecs = jax.random.normal(ks[5], (V, K), dtype=jnp.float32) / jnp.sqrt(float(V))
    gradX = jax.random.normal(ks[6], (V, V), dtype=jnp.float32) * 0.05
    gradY = jax.random.normal(ks[7], (V, V), dtype=jnp.float32) * 0.05

    # ---- deterministic parameter init (PyTorch Linear-style uniform) ----
    pk = jax.random.split(ks[8], 16)
    params = dict(
        w_first=_uniform(pk[0], (C_IN, C_W), C_IN),
        b_first=_uniform(pk[1], (1, C_W), C_IN),
        t=jnp.abs(jax.random.normal(pk[2], (N_BLOCK, 1, C_W), dtype=jnp.float32)) * 0.1
          + 1e-3,
        a_re=_uniform(pk[3], (N_BLOCK, C_W, C_W), C_W),
        a_im=_uniform(pk[4], (N_BLOCK, C_W, C_W), C_W),
        w1=_uniform(pk[5], (N_BLOCK, 3, C_W, C_W), 3 * C_W),
        b1=_uniform(pk[6], (N_BLOCK, 1, C_W), 3 * C_W),
        w2=_uniform(pk[7], (N_BLOCK, C_W, C_W), C_W),
        b2=_uniform(pk[8], (N_BLOCK, 1, C_W), C_W),
        w_last=_uniform(pk[9], (C_W, C_OUT), C_W),
        b_last=_uniform(pk[10], (1, C_OUT), C_W),
    )

    out = diffusionnet_forward(features, mass, evals, evecs, gradX, gradY, params)
    out = jax.block_until_ready(out)
    assert out.shape == (V, C_OUT) and out.dtype == jnp.float32

    ref = diffusionnet_reference(features, mass, evals, evecs, gradX, gradY, params)
    assert jnp.allclose(out, ref, rtol=1e-2, atol=1e-2), "kernel/ref mismatch"

    print("KERNEL_OK")
</pallas_src>

<mosaic_0001>
module attributes {stable_mosaic.version = 11 : i64} {
  func.func @diffusionnet_kernel(%arg0: memref<128x8xf32, #tpu.memory_space<vmem>>, %arg1: memref<64x128xf32, #tpu.memory_space<vmem>>, %arg2: memref<128x64xf32, #tpu.memory_space<vmem>>, %arg3: memref<256x128xf32, #tpu.memory_space<vmem>>, %arg4: memref<4x64x32xf32, #tpu.memory_space<vmem>>, %arg5: memref<4x64x64xf32, #tpu.memory_space<vmem>>, %arg6: memref<8x32xf32, #tpu.memory_space<vmem>>, %arg7: memref<1x32xf32, #tpu.memory_space<vmem>>, %arg8: memref<4x96x32xf32, #tpu.memory_space<vmem>>, %arg9: memref<4x1x32xf32, #tpu.memory_space<vmem>>, %arg10: memref<4x32x32xf32, #tpu.memory_space<vmem>>, %arg11: memref<4x1x32xf32, #tpu.memory_space<vmem>>, %arg12: memref<32x128xf32, #tpu.memory_space<vmem>>, %arg13: memref<1x128xf32, #tpu.memory_space<vmem>>, %arg14: memref<128x128xf32, #tpu.memory_space<vmem>>) attributes {dimension_semantics = [], scalar_prefetch = 0 : i64, scratch_operands = 0 : i64, tpu.core_type = #tpu.core_type<tc>} {
    %c0 = arith.constant 0 : index
    %c0_0 = arith.constant 0 : index
    %0 = vector.load %arg0[%c0, %c0_0] : memref<128x8xf32, #tpu.memory_space<vmem>>, vector<128x8xf32>
    %c0_1 = arith.constant 0 : index
    %c0_2 = arith.constant 0 : index
    %1 = vector.load %arg6[%c0_1, %c0_2] : memref<8x32xf32, #tpu.memory_space<vmem>>, vector<8x32xf32>
    %cst = arith.constant dense<0.000000e+00> : vector<128x32xf32>
    %2 = tpu.matmul %0, %1, %cst {dimension_numbers = #tpu.dot_dimension_numbers<[1], [0], [0], [1], [0, 0, 1, 1], [], []>} : vector<128x8xf32>, vector<8x32xf32>, vector<128x32xf32> -> vector<128x32xf32>
    %c0_3 = arith.constant 0 : index
    %c0_4 = arith.constant 0 : index
    %3 = vector.load %arg7[%c0_3, %c0_4] : memref<1x32xf32, #tpu.memory_space<vmem>>, vector<1x32xf32>
    %4 = vector.broadcast %3 : vector<1x32xf32> to vector<128x32xf32>
    %5 = arith.addf %2, %4 : vector<128x32xf32>
    %c0_5 = arith.constant 0 : index
    %c0_6 = arith.constant 0 : index
    %6 = vector.load %arg1[%c0_5, %c0_6] : memref<64x128xf32, #tpu.memory_space<vmem>>, vector<64x128xf32>
    %cst_7 = arith.constant dense<0.000000e+00> : vector<64x32xf32>
    %7 = tpu.matmul %6, %5, %cst_7 {dimension_numbers = #tpu.dot_dimension_numbers<[1], [0], [0], [1], [0, 0, 1, 1], [], []>} : vector<64x128xf32>, vector<128x32xf32>, vector<64x32xf32> -> vector<64x32xf32>
    %c0_8 = arith.constant 0 : index
    %c0_9 = arith.constant 0 : index
    %8 = vector.load %arg2[%c0_8, %c0_9] : memref<128x64xf32, #tpu.memory_space<vmem>>, vector<128x64xf32>
    %c0_10 = arith.constant 0 : index
    %c0_11 = arith.constant 0 : index
    %c0_12 = arith.constant 0 : index
    %9 = vector.load %arg4[%c0_10, %c0_11, %c0_12] : memref<4x64x32xf32, #tpu.memory_space<vmem>>, vector<1x64x32xf32>
    %10 = vector.shape_cast %9 : vector<1x64x32xf32> to vector<64x32xf32>
    %11 = arith.mulf %10, %7 : vector<64x32xf32>
    %cst_13 = arith.constant dense<0.000000e+00> : vector<128x32xf32>
    %12 = tpu.matmul %8, %11, %cst_13 {dimension_numbers = #tpu.dot_dimension_numbers<[1], [0], [0], [1], [0, 0, 1, 1], [], []>} : vector<128x64xf32>, vector<64x32xf32>, vector<128x32xf32> -> vector<128x32xf32>
    %c0_14 = arith.constant 0 : index
    %c0_15 = arith.constant 0 : index
    %13 = vector.load %arg3[%c0_14, %c0_15] : memref<256x128xf32, #tpu.memory_space<vmem>>, vector<256x128xf32>
    %cst_16 = arith.constant dense<0.000000e+00> : vector<256x32xf32>
    %14 = tpu.matmul %13, %12, %cst_16 {dimension_numbers = #tpu.dot_dimension_numbers<[1], [0], [0], [1], [0, 0, 1, 1], [], []>} : vector<256x128xf32>, vector<128x32xf32>, vector<256x32xf32> -> vector<256x32xf32>
    %15 = vector.extract_strided_slice %14 {offsets = [0, 0], sizes = [128, 32], strides = [1, 1]} : vector<256x32xf32> to vector<128x32xf32>
    %16 = vector.extract_strided_slice %14 {offsets = [128, 0], sizes = [128, 32], strides = [1, 1]} : vector<256x32xf32> to vector<128x32xf32>
    %17 = tpu.concatenate %15, %16 in 1 : vector<128x32xf32>, vector<128x32xf32> -> vector<128x64xf32>
    %c0_17 = arith.constant 0 : index
    %c0_18 = arith.constant 0 : index
    %c0_19 = arith.constant 0 : index
    %18 = vector.load %arg5[%c0_17, %c0_18, %c0_19] : memref<4x64x64xf32, #tpu.memory_space<vmem>>, vector<1x64x64xf32>
    %19 = vector.shape_cast %18 : vector<1x64x64xf32> to vector<64x64xf32>
    %cst_20 = arith.constant dense<0.000000e+00> : vector<128x64xf32>
    %20 = tpu.matmul %17, %19, %cst_20 {dimension_numbers = #tpu.dot_dimension_numbers<[1], [0], [0], [1], [0, 0, 1, 1], [], []>} : vector<128x64xf32>, vector<64x64xf32>, vector<128x64xf32> -> vector<128x64xf32>
    %21 = arith.mulf %17, %20 : vector<128x64xf32>
    %22 = vector.extract_strided_slice %21 {offsets = [0, 0], sizes = [128, 32], strides = [1, 1]} : vector<128x64xf32> to vector<128x32xf32>
    %23 = vector.extract_strided_slice %21 {offsets = [0, 32], sizes = [128, 32], strides = [1, 1]} : vector<128x64xf32> to vector<128x32xf32>
    %24 = arith.addf %22, %23 : vector<128x32xf32>
    %25 = math.tanh %24 : vector<128x32xf32>
    %26 = tpu.concatenate %5, %12, %25 in 1 : vector<128x32xf32>, vector<128x32xf32>, vector<128x32xf32> -> vector<128x96xf32>
    %c0_21 = arith.constant 0 : index
    %c0_22 = arith.constant 0 : index
    %c0_23 = arith.constant 0 : index
    %27 = vector.load %arg8[%c0_21, %c0_22, %c0_23] : memref<4x96x32xf32, #tpu.memory_space<vmem>>, vector<1x96x32xf32>
    %28 = vector.shape_cast %27 : vector<1x96x32xf32> to vector<96x32xf32>
    %cst_24 = arith.constant dense<0.000000e+00> : vector<128x32xf32>
    %29 = tpu.matmul %26, %28, %cst_24 {dimension_numbers = #tpu.dot_dimension_numbers<[1], [0], [0], [1], [0, 0, 1, 1], [], []>} : vector<128x96xf32>, vector<96x32xf32>, vector<128x32xf32> -> vector<128x32xf32>
    %c0_25 = arith.constant 0 : index
    %c0_26 = arith.constant 0 : index
    %c0_27 = arith.constant 0 : index
    %30 = vector.load %arg9[%c0_25, %c0_26, %c0_27] : memref<4x1x32xf32, #tpu.memory_space<vmem>>, vector<1x1x32xf32>
    %31 = vector.shape_cast %30 : vector<1x1x32xf32> to vector<1x32xf32>
    %32 = vector.broadcast %31 : vector<1x32xf32> to vector<128x32xf32>
    %33 = arith.addf %29, %32 : vector<128x32xf32>
    %cst_28 = arith.constant 0.000000e+00 : f32
    %34 = vector.broadcast %cst_28 : f32 to vector<128x32xf32>
    %35 = arith.maximumf %33, %34 : vector<128x32xf32>
    %c0_29 = arith.constant 0 : index
    %c0_30 = arith.constant 0 : index
    %c0_31 = arith.constant 0 : index
    %36 = vector.load %arg10[%c0_29, %c0_30, %c0_31] : memref<4x32x32xf32, #tpu.memory_space<vmem>>, vector<1x32x32xf32>
    %37 = vector.shape_cast %36 : vector<1x32x32xf32> to vector<32x32xf32>
    %cst_32 = arith.constant dense<0.000000e+00> : vector<128x32xf32>
    %38 = tpu.matmul %35, %37, %cst_32 {dimension_numbers = #tpu.dot_dimension_numbers<[1], [0], [0], [1], [0, 0, 1, 1], [], []>} : vector<128x32xf32>, vector<32x32xf32>, vector<128x32xf32> -> vector<128x32xf32>
    %c0_33 = arith.constant 0 : index
    %c0_34 = arith.constant 0 : index
    %c0_35 = arith.constant 0 : index
    %39 = vector.load %arg11[%c0_33, %c0_34, %c0_35] : memref<4x1x32xf32, #tpu.memory_space<vmem>>, vector<1x1x32xf32>
    %40 = vector.shape_cast %39 : vector<1x1x32xf32> to vector<1x32xf32>
    %41 = vector.broadcast %40 : vector<1x32xf32> to vector<128x32xf32>
    %42 = arith.addf %38, %41 : vector<128x32xf32>
    %43 = arith.addf %42, %5 : vector<128x32xf32>
    %c0_36 = arith.constant 0 : index
    %c0_37 = arith.constant 0 : index
    %44 = vector.load %arg1[%c0_36, %c0_37] : memref<64x128xf32, #tpu.memory_space<vmem>>, vector<64x128xf32>
    %cst_38 = arith.constant dense<0.000000e+00> : vector<64x32xf32>
    %45 = tpu.matmul %44, %43, %cst_38 {dimension_numbers = #tpu.dot_dimension_numbers<[1], [0], [0], [1], [0, 0, 1, 1], [], []>} : vector<64x128xf32>, vector<128x32xf32>, vector<64x32xf32> -> vector<64x32xf32>
    %c0_39 = arith.constant 0 : index
    %c0_40 = arith.constant 0 : index
    %46 = vector.load %arg2[%c0_39, %c0_40] : memref<128x64xf32, #tpu.memory_space<vmem>>, vector<128x64xf32>
    %c1 = arith.constant 1 : index
    %c0_41 = arith.constant 0 : index
    %c0_42 = arith.constant 0 : index
    %47 = vector.load %arg4[%c1, %c0_41, %c0_42] : memref<4x64x32xf32, #tpu.memory_space<vmem>>, vector<1x64x32xf32>
    %48 = vector.shape_cast %47 : vector<1x64x32xf32> to vector<64x32xf32>
    %49 = arith.mulf %48, %45 : vector<64x32xf32>
    %cst_43 = arith.constant dense<0.000000e+00> : vector<128x32xf32>
    %50 = tpu.matmul %46, %49, %cst_43 {dimension_numbers = #tpu.dot_dimension_numbers<[1], [0], [0], [1], [0, 0, 1, 1], [], []>} : vector<128x64xf32>, vector<64x32xf32>, vector<128x32xf32> -> vector<128x32xf32>
    %c0_44 = arith.constant 0 : index
    %c0_45 = arith.constant 0 : index
    %51 = vector.load %arg3[%c0_44, %c0_45] : memref<256x128xf32, #tpu.memory_space<vmem>>, vector<256x128xf32>
    %cst_46 = arith.constant dense<0.000000e+00> : vector<256x32xf32>
    %52 = tpu.matmul %51, %50, %cst_46 {dimension_numbers = #tpu.dot_dimension_numbers<[1], [0], [0], [1], [0, 0, 1, 1], [], []>} : vector<256x128xf32>, vector<128x32xf32>, vector<256x32xf32> -> vector<256x32xf32>
    %53 = vector.extract_strided_slice %52 {offsets = [0, 0], sizes = [128, 32], strides = [1, 1]} : vector<256x32xf32> to vector<128x32xf32>
    %54 = vector.extract_strided_slice %52 {offsets = [128, 0], sizes = [128, 32], strides = [1, 1]} : vector<256x32xf32> to vector<128x32xf32>
    %55 = tpu.concatenate %53, %54 in 1 : vector<128x32xf32>, vector<128x32xf32> -> vector<128x64xf32>
    %c1_47 = arith.constant 1 : index
    %c0_48 = arith.constant 0 : index
    %c0_49 = arith.constant 0 : index
    %56 = vector.load %arg5[%c1_47, %c0_48, %c0_49] : memref<4x64x64xf32, #tpu.memory_space<vmem>>, vector<1x64x64xf32>
    %57 = vector.shape_cast %56 : vector<1x64x64xf32> to vector<64x64xf32>
    %cst_50 = arith.constant dense<0.000000e+00> : vector<128x64xf32>
    %58 = tpu.matmul %55, %57, %cst_50 {dimension_numbers = #tpu.dot_dimension_numbers<[1], [0], [0], [1], [0, 0, 1, 1], [], []>} : vector<128x64xf32>, vector<64x64xf32>, vector<128x64xf32> -> vector<128x64xf32>
    %59 = arith.mulf %55, %58 : vector<128x64xf32>
    %60 = vector.extract_strided_slice %59 {offsets = [0, 0], sizes = [128, 32], strides = [1, 1]} : vector<128x64xf32> to vector<128x32xf32>
    %61 = vector.extract_strided_slice %59 {offsets = [0, 32], sizes = [128, 32], strides = [1, 1]} : vector<128x64xf32> to vector<128x32xf32>
    %62 = arith.addf %60, %61 : vector<128x32xf32>
    %63 = math.tanh %62 : vector<128x32xf32>
    %64 = tpu.concatenate %43, %50, %63 in 1 : vector<128x32xf32>, vector<128x32xf32>, vector<128x32xf32> -> vector<128x96xf32>
    %c1_51 = arith.constant 1 : index
    %c0_52 = arith.constant 0 : index
    %c0_53 = arith.constant 0 : index
    %65 = vector.load %arg8[%c1_51, %c0_52, %c0_53] : memref<4x96x32xf32, #tpu.memory_space<vmem>>, vector<1x96x32xf32>
    %66 = vector.shape_cast %65 : vector<1x96x32xf32> to vector<96x32xf32>
    %cst_54 = arith.constant dense<0.000000e+00> : vector<128x32xf32>
    %67 = tpu.matmul %64, %66, %cst_54 {dimension_numbers = #tpu.dot_dimension_numbers<[1], [0], [0], [1], [0, 0, 1, 1], [], []>} : vector<128x96xf32>, vector<96x32xf32>, vector<128x32xf32> -> vector<128x32xf32>
    %c1_55 = arith.constant 1 : index
    %c0_56 = arith.constant 0 : index
    %c0_57 = arith.constant 0 : index
    %68 = vector.load %arg9[%c1_55, %c0_56, %c0_57] : memref<4x1x32xf32, #tpu.memory_space<vmem>>, vector<1x1x32xf32>
    %69 = vector.shape_cast %68 : vector<1x1x32xf32> to vector<1x32xf32>
    %70 = vector.broadcast %69 : vector<1x32xf32> to vector<128x32xf32>
    %71 = arith.addf %67, %70 : vector<128x32xf32>
    %cst_58 = arith.constant 0.000000e+00 : f32
    %72 = vector.broadcast %cst_58 : f32 to vector<128x32xf32>
    %73 = arith.maximumf %71, %72 : vector<128x32xf32>
    %c1_59 = arith.constant 1 : index
    %c0_60 = arith.constant 0 : index
    %c0_61 = arith.constant 0 : index
    %74 = vector.load %arg10[%c1_59, %c0_60, %c0_61] : memref<4x32x32xf32, #tpu.memory_space<vmem>>, vector<1x32x32xf32>
    %75 = vector.shape_cast %74 : vector<1x32x32xf32> to vector<32x32xf32>
    %cst_62 = arith.constant dense<0.000000e+00> : vector<128x32xf32>
    %76 = tpu.matmul %73, %75, %cst_62 {dimension_numbers = #tpu.dot_dimension_numbers<[1], [0], [0], [1], [0, 0, 1, 1], [], []>} : vector<128x32xf32>, vector<32x32xf32>, vector<128x32xf32> -> vector<128x32xf32>
    %c1_63 = arith.constant 1 : index
    %c0_64 = arith.constant 0 : index
    %c0_65 = arith.constant 0 : index
    %77 = vector.load %arg11[%c1_63, %c0_64, %c0_65] : memref<4x1x32xf32, #tpu.memory_space<vmem>>, vector<1x1x32xf32>
    %78 = vector.shape_cast %77 : vector<1x1x32xf32> to vector<1x32xf32>
    %79 = vector.broadcast %78 : vector<1x32xf32> to vector<128x32xf32>
    %80 = arith.addf %76, %79 : vector<128x32xf32>
    %81 = arith.addf %80, %43 : vector<128x32xf32>
    %c0_66 = arith.constant 0 : index
    %c0_67 = arith.constant 0 : index
    %82 = vector.load %arg1[%c0_66, %c0_67] : memref<64x128xf32, #tpu.memory_space<vmem>>, vector<64x128xf32>
    %cst_68 = arith.constant dense<0.000000e+00> : vector<64x32xf32>
    %83 = tpu.matmul %82, %81, %cst_68 {dimension_numbers = #tpu.dot_dimension_numbers<[1], [0], [0], [1], [0, 0, 1, 1], [], []>} : vector<64x128xf32>, vector<128x32xf32>, vector<64x32xf32> -> vector<64x32xf32>
    %c0_69 = arith.constant 0 : index
    %c0_70 = arith.constant 0 : index
    %84 = vector.load %arg2[%c0_69, %c0_70] : memref<128x64xf32, #tpu.memory_space<vmem>>, vector<128x64xf32>
    %c2 = arith.constant 2 : index
    %c0_71 = arith.constant 0 : index
    %c0_72 = arith.constant 0 : index
    %85 = vector.load %arg4[%c2, %c0_71, %c0_72] : memref<4x64x32xf32, #tpu.memory_space<vmem>>, vector<1x64x32xf32>
    %86 = vector.shape_cast %85 : vector<1x64x32xf32> to vector<64x32xf32>
    %87 = arith.mulf %86, %83 : vector<64x32xf32>
    %cst_73 = arith.constant dense<0.000000e+00> : vector<128x32xf32>
    %88 = tpu.matmul %84, %87, %cst_73 {dimension_numbers = #tpu.dot_dimension_numbers<[1], [0], [0], [1], [0, 0, 1, 1], [], []>} : vector<128x64xf32>, vector<64x32xf32>, vector<128x32xf32> -> vector<128x32xf32>
    %c0_74 = arith.constant 0 : index
    %c0_75 = arith.constant 0 : index
    %89 = vector.load %arg3[%c0_74, %c0_75] : memref<256x128xf32, #tpu.memory_space<vmem>>, vector<256x128xf32>
    %cst_76 = arith.constant dense<0.000000e+00> : vector<256x32xf32>
    %90 = tpu.matmul %89, %88, %cst_76 {dimension_numbers = #tpu.dot_dimension_numbers<[1], [0], [0], [1], [0, 0, 1, 1], [], []>} : vector<256x128xf32>, vector<128x32xf32>, vector<256x32xf32> -> vector<256x32xf32>
    %91 = vector.extract_strided_slice %90 {offsets = [0, 0], sizes = [128, 32], strides = [1, 1]} : vector<256x32xf32> to vector<128x32xf32>
    %92 = vector.extract_strided_slice %90 {offsets = [128, 0], sizes = [128, 32], strides = [1, 1]} : vector<256x32xf32> to vector<128x32xf32>
    %93 = tpu.concatenate %91, %92 in 1 : vector<128x32xf32>, vector<128x32xf32> -> vector<128x64xf32>
    %c2_77 = arith.constant 2 : index
    %c0_78 = arith.constant 0 : index
    %c0_79 = arith.constant 0 : index
    %94 = vector.load %arg5[%c2_77, %c0_78, %c0_79] : memref<4x64x64xf32, #tpu.memory_space<vmem>>, vector<1x64x64xf32>
    %95 = vector.shape_cast %94 : vector<1x64x64xf32> to vector<64x64xf32>
    %cst_80 = arith.constant dense<0.000000e+00> : vector<128x64xf32>
    %96 = tpu.matmul %93, %95, %cst_80 {dimension_numbers = #tpu.dot_dimension_numbers<[1], [0], [0], [1], [0, 0, 1, 1], [], []>} : vector<128x64xf32>, vector<64x64xf32>, vector<128x64xf32> -> vector<128x64xf32>
    %97 = arith.mulf %93, %96 : vector<128x64xf32>
    %98 = vector.extract_strided_slice %97 {offsets = [0, 0], sizes = [128, 32], strides = [1, 1]} : vector<128x64xf32> to vector<128x32xf32>
    %99 = vector.extract_strided_slice %97 {offsets = [0, 32], sizes = [128, 32], strides = [1, 1]} : vector<128x64xf32> to vector<128x32xf32>
    %100 = arith.addf %98, %99 : vector<128x32xf32>
    %101 = math.tanh %100 : vector<128x32xf32>
    %102 = tpu.concatenate %81, %88, %101 in 1 : vector<128x32xf32>, vector<128x32xf32>, vector<128x32xf32> -> vector<128x96xf32>
    %c2_81 = arith.constant 2 : index
    %c0_82 = arith.constant 0 : index
    %c0_83 = arith.constant 0 : index
    %103 = vector.load %arg8[%c2_81, %c0_82, %c0_83] : memref<4x96x32xf32, #tpu.memory_space<vmem>>, vector<1x96x32xf32>
    %104 = vector.shape_cast %103 : vector<1x96x32xf32> to vector<96x32xf32>
    %cst_84 = arith.constant dense<0.000000e+00> : vector<128x32xf32>
    %105 = tpu.matmul %102, %104, %cst_84 {dimension_numbers = #tpu.dot_dimension_numbers<[1], [0], [0], [1], [0, 0, 1, 1], [], []>} : vector<128x96xf32>, vector<96x32xf32>, vector<128x32xf32> -> vector<128x32xf32>
    %c2_85 = arith.constant 2 : index
    %c0_86 = arith.constant 0 : index
    %c0_87 = arith.constant 0 : index
    %106 = vector.load %arg9[%c2_85, %c0_86, %c0_87] : memref<4x1x32xf32, #tpu.memory_space<vmem>>, vector<1x1x32xf32>
    %107 = vector.shape_cast %106 : vector<1x1x32xf32> to vector<1x32xf32>
    %108 = vector.broadcast %107 : vector<1x32xf32> to vector<128x32xf32>
    %109 = arith.addf %105, %108 : vector<128x32xf32>
    %cst_88 = arith.constant 0.000000e+00 : f32
    %110 = vector.broadcast %cst_88 : f32 to vector<128x32xf32>
    %111 = arith.maximumf %109, %110 : vector<128x32xf32>
    %c2_89 = arith.constant 2 : index
    %c0_90 = arith.constant 0 : index
    %c0_91 = arith.constant 0 : index
    %112 = vector.load %arg10[%c2_89, %c0_90, %c0_91] : memref<4x32x32xf32, #tpu.memory_space<vmem>>, vector<1x32x32xf32>
    %113 = vector.shape_cast %112 : vector<1x32x32xf32> to vector<32x32xf32>
    %cst_92 = arith.constant dense<0.000000e+00> : vector<128x32xf32>
    %114 = tpu.matmul %111, %113, %cst_92 {dimension_numbers = #tpu.dot_dimension_numbers<[1], [0], [0], [1], [0, 0, 1, 1], [], []>} : vector<128x32xf32>, vector<32x32xf32>, vector<128x32xf32> -> vector<128x32xf32>
    %c2_93 = arith.constant 2 : index
    %c0_94 = arith.constant 0 : index
    %c0_95 = arith.constant 0 : index
    %115 = vector.load %arg11[%c2_93, %c0_94, %c0_95] : memref<4x1x32xf32, #tpu.memory_space<vmem>>, vector<1x1x32xf32>
    %116 = vector.shape_cast %115 : vector<1x1x32xf32> to vector<1x32xf32>
    %117 = vector.broadcast %116 : vector<1x32xf32> to vector<128x32xf32>
    %118 = arith.addf %114, %117 : vector<128x32xf32>
    %119 = arith.addf %118, %81 : vector<128x32xf32>
    %c0_96 = arith.constant 0 : index
    %c0_97 = arith.constant 0 : index
    %120 = vector.load %arg1[%c0_96, %c0_97] : memref<64x128xf32, #tpu.memory_space<vmem>>, vector<64x128xf32>
    %cst_98 = arith.constant dense<0.000000e+00> : vector<64x32xf32>
    %121 = tpu.matmul %120, %119, %cst_98 {dimension_numbers = #tpu.dot_dimension_numbers<[1], [0], [0], [1], [0, 0, 1, 1], [], []>} : vector<64x128xf32>, vector<128x32xf32>, vector<64x32xf32> -> vector<64x32xf32>
    %c0_99 = arith.constant 0 : index
    %c0_100 = arith.constant 0 : index
    %122 = vector.load %arg2[%c0_99, %c0_100] : memref<128x64xf32, #tpu.memory_space<vmem>>, vector<128x64xf32>
    %c3 = arith.constant 3 : index
    %c0_101 = arith.constant 0 : index
    %c0_102 = arith.constant 0 : index
    %123 = vector.load %arg4[%c3, %c0_101, %c0_102] : memref<4x64x32xf32, #tpu.memory_space<vmem>>, vector<1x64x32xf32>
    %124 = vector.shape_cast %123 : vector<1x64x32xf32> to vector<64x32xf32>
    %125 = arith.mulf %124, %121 : vector<64x32xf32>
    %cst_103 = arith.constant dense<0.000000e+00> : vector<128x32xf32>
    %126 = tpu.matmul %122, %125, %cst_103 {dimension_numbers = #tpu.dot_dimension_numbers<[1], [0], [0], [1], [0, 0, 1, 1], [], []>} : vector<128x64xf32>, vector<64x32xf32>, vector<128x32xf32> -> vector<128x32xf32>
    %c0_104 = arith.constant 0 : index
    %c0_105 = arith.constant 0 : index
    %127 = vector.load %arg3[%c0_104, %c0_105] : memref<256x128xf32, #tpu.memory_space<vmem>>, vector<256x128xf32>
    %cst_106 = arith.constant dense<0.000000e+00> : vector<256x32xf32>
    %128 = tpu.matmul %127, %126, %cst_106 {dimension_numbers = #tpu.dot_dimension_numbers<[1], [0], [0], [1], [0, 0, 1, 1], [], []>} : vector<256x128xf32>, vector<128x32xf32>, vector<256x32xf32> -> vector<256x32xf32>
    %129 = vector.extract_strided_slice %128 {offsets = [0, 0], sizes = [128, 32], strides = [1, 1]} : vector<256x32xf32> to vector<128x32xf32>
    %130 = vector.extract_strided_slice %128 {offsets = [128, 0], sizes = [128, 32], strides = [1, 1]} : vector<256x32xf32> to vector<128x32xf32>
    %131 = tpu.concatenate %129, %130 in 1 : vector<128x32xf32>, vector<128x32xf32> -> vector<128x64xf32>
    %c3_107 = arith.constant 3 : index
    %c0_108 = arith.constant 0 : index
    %c0_109 = arith.constant 0 : index
    %132 = vector.load %arg5[%c3_107, %c0_108, %c0_109] : memref<4x64x64xf32, #tpu.memory_space<vmem>>, vector<1x64x64xf32>
    %133 = vector.shape_cast %132 : vector<1x64x64xf32> to vector<64x64xf32>
    %cst_110 = arith.constant dense<0.000000e+00> : vector<128x64xf32>
    %134 = tpu.matmul %131, %133, %cst_110 {dimension_numbers = #tpu.dot_dimension_numbers<[1], [0], [0], [1], [0, 0, 1, 1], [], []>} : vector<128x64xf32>, vector<64x64xf32>, vector<128x64xf32> -> vector<128x64xf32>
    %135 = arith.mulf %131, %134 : vector<128x64xf32>
    %136 = vector.extract_strided_slice %135 {offsets = [0, 0], sizes = [128, 32], strides = [1, 1]} : vector<128x64xf32> to vector<128x32xf32>
    %137 = vector.extract_strided_slice %135 {offsets = [0, 32], sizes = [128, 32], strides = [1, 1]} : vector<128x64xf32> to vector<128x32xf32>
    %138 = arith.addf %136, %137 : vector<128x32xf32>
    %139 = math.tanh %138 : vector<128x32xf32>
    %140 = tpu.concatenate %119, %126, %139 in 1 : vector<128x32xf32>, vector<128x32xf32>, vector<128x32xf32> -> vector<128x96xf32>
    %c3_111 = arith.constant 3 : index
    %c0_112 = arith.constant 0 : index
    %c0_113 = arith.constant 0 : index
    %141 = vector.load %arg8[%c3_111, %c0_112, %c0_113] : memref<4x96x32xf32, #tpu.memory_space<vmem>>, vector<1x96x32xf32>
    %142 = vector.shape_cast %141 : vector<1x96x32xf32> to vector<96x32xf32>
    %cst_114 = arith.constant dense<0.000000e+00> : vector<128x32xf32>
    %143 = tpu.matmul %140, %142, %cst_114 {dimension_numbers = #tpu.dot_dimension_numbers<[1], [0], [0], [1], [0, 0, 1, 1], [], []>} : vector<128x96xf32>, vector<96x32xf32>, vector<128x32xf32> -> vector<128x32xf32>
    %c3_115 = arith.constant 3 : index
    %c0_116 = arith.constant 0 : index
    %c0_117 = arith.constant 0 : index
    %144 = vector.load %arg9[%c3_115, %c0_116, %c0_117] : memref<4x1x32xf32, #tpu.memory_space<vmem>>, vector<1x1x32xf32>
    %145 = vector.shape_cast %144 : vector<1x1x32xf32> to vector<1x32xf32>
    %146 = vector.broadcast %145 : vector<1x32xf32> to vector<128x32xf32>
    %147 = arith.addf %143, %146 : vector<128x32xf32>
    %cst_118 = arith.constant 0.000000e+00 : f32
    %148 = vector.broadcast %cst_118 : f32 to vector<128x32xf32>
    %149 = arith.maximumf %147, %148 : vector<128x32xf32>
    %c3_119 = arith.constant 3 : index
    %c0_120 = arith.constant 0 : index
    %c0_121 = arith.constant 0 : index
    %150 = vector.load %arg10[%c3_119, %c0_120, %c0_121] : memref<4x32x32xf32, #tpu.memory_space<vmem>>, vector<1x32x32xf32>
    %151 = vector.shape_cast %150 : vector<1x32x32xf32> to vector<32x32xf32>
    %cst_122 = arith.constant dense<0.000000e+00> : vector<128x32xf32>
    %152 = tpu.matmul %149, %151, %cst_122 {dimension_numbers = #tpu.dot_dimension_numbers<[1], [0], [0], [1], [0, 0, 1, 1], [], []>} : vector<128x32xf32>, vector<32x32xf32>, vector<128x32xf32> -> vector<128x32xf32>
    %c3_123 = arith.constant 3 : index
    %c0_124 = arith.constant 0 : index
    %c0_125 = arith.constant 0 : index
    %153 = vector.load %arg11[%c3_123, %c0_124, %c0_125] : memref<4x1x32xf32, #tpu.memory_space<vmem>>, vector<1x1x32xf32>
    %154 = vector.shape_cast %153 : vector<1x1x32xf32> to vector<1x32xf32>
    %155 = vector.broadcast %154 : vector<1x32xf32> to vector<128x32xf32>
    %156 = arith.addf %152, %155 : vector<128x32xf32>
    %157 = arith.addf %156, %119 : vector<128x32xf32>
    %c0_126 = arith.constant 0 : index
    %c0_127 = arith.constant 0 : index
    %158 = vector.load %arg12[%c0_126, %c0_127] : memref<32x128xf32, #tpu.memory_space<vmem>>, vector<32x128xf32>
    %cst_128 = arith.constant dense<0.000000e+00> : vector<128x128xf32>
    %159 = tpu.matmul %157, %158, %cst_128 {dimension_numbers = #tpu.dot_dimension_numbers<[1], [0], [0], [1], [0, 0, 1, 1], [], []>} : vector<128x32xf32>, vector<32x128xf32>, vector<128x128xf32> -> vector<128x128xf32>
    %c0_129 = arith.constant 0 : index
    %c0_130 = arith.constant 0 : index
    %160 = vector.load %arg13[%c0_129, %c0_130] : memref<1x128xf32, #tpu.memory_space<vmem>>, vector<1x128xf32>
    %161 = vector.broadcast %160 : vector<1x128xf32> to vector<128x128xf32>
    %162 = arith.addf %159, %161 : vector<128x128xf32>
    %c0_131 = arith.constant 0 : index
    %c0_132 = arith.constant 0 : index
    %163 = vector.load %arg14[%c0_131, %c0_132] : memref<128x128xf32, #tpu.memory_space<vmem>>, vector<128x128xf32>
    tpu.vector_store %arg14[%c0_131, %c0_132], %162 {strides = array<i32>} : memref<128x128xf32, #tpu.memory_space<vmem>>, vector<128x128xf32>,
    return
  }
}

</mosaic_0001>

<llo_original>
// kernel: tpu_custom_call.1
$region0: #{tpu_custom_call.1}
  #allocation0 [shape = 'u32[]', space=smem, size = 0x4, offset = 0x4, fixed_abs, tag = 'smem constant byte address 0x4 - core index']
  #allocation1 [shape = 'u32[144,128]{1,0:T(1,128)}', space=vmem, size = 0x12000, scoped, tag = 'internal scratch']
  %s0 = inlined_call_operand.vmem [shape: f32[128,8], index: 0, kind: input, shape index: {}]
  %s1 = inlined_call_operand.vmem [shape: f32[64,128], index: 1, kind: input, shape index: {}]
  %s2 = inlined_call_operand.vmem [shape: f32[128,64], index: 2, kind: input, shape index: {}]
  %s3 = inlined_call_operand.vmem [shape: f32[256,128], index: 3, kind: input, shape index: {}]
  %s4 = inlined_call_operand.vmem [shape: f32[4,64,32], index: 4, kind: input, shape index: {}]
  %s5 = inlined_call_operand.vmem [shape: f32[4,64,64], index: 5, kind: input, shape index: {}]
  %s6 = inlined_call_operand.vmem [shape: f32[8,32], index: 6, kind: input, shape index: {}]
  %s7 = inlined_call_operand.vmem [shape: f32[1,32], index: 7, kind: input, shape index: {}]
  %s8 = inlined_call_operand.vmem [shape: f32[4,96,32], index: 8, kind: input, shape index: {}]
  %s9 = inlined_call_operand.vmem [shape: f32[4,1,32], index: 9, kind: input, shape index: {}]
  %s10 = inlined_call_operand.vmem [shape: f32[4,32,32], index: 10, kind: input, shape index: {}]
  %s11 = inlined_call_operand.vmem [shape: f32[4,1,32], index: 11, kind: input, shape index: {}]
  %s12 = inlined_call_operand.vmem [shape: f32[32,128], index: 12, kind: input, shape index: {}]
  %s13 = inlined_call_operand.vmem [shape: f32[1,128], index: 13, kind: input, shape index: {}]
  %s14 = inlined_call_operand.hbm [shape: f32[128,128], index: 14, kind: output, shape index: {}]
  %s15 = sld [smem:[#allocation0]]
  $region66: #{tpu_custom_call.1} parent=0
    _
  %s17 = ssub.s32 1, %s15
  %s18 = scalar_select 0, %s17, %s15
  $region1: #{tpu_custom_call.1} parent=0
    #allocation2 [shape = 'u8[65536]{0}', space=vmem, size = 0x10000, scoped, tag = 'output window, operand 0, single buffered']
    #allocation3 [shape = 's32[1]{0}', space=sflag, size = 0x4, scoped, tag = 'scoped memory for tpu_custom_call.1']
    %19 = vsyncpa [#allocation3], 0
    // Predicated region
    $region2: #{tpu_custom_call.1} parent=1 // pred_check
      _
    $region3: #{tpu_custom_call.1} parent=1 // pred_check_branch
      %21 = sbr.rel (0) target = $region5
    $region4: #{tpu_custom_call.1} parent=1 // pred_region
      _
    $region5: #{tpu_custom_call.1} parent=1 // pred_fallthru
      _
    // Predicated region
    $region6: #{tpu_custom_call.1} parent=1 // pred_check
      _
    $region7: #{tpu_custom_call.1} parent=1 // pred_check_branch
      %23 = sbr.rel (0) target = $region9
    $region8: #{tpu_custom_call.1} parent=1 // pred_region
      _
    $region9: #{tpu_custom_call.1} parent=1 // pred_fallthru
      _
    // Predicated region
    $region10: #{tpu_custom_call.1} parent=1 // pred_check
      _
    $region11: #{tpu_custom_call.1} parent=1 // pred_check_branch
      %25 = sbr.rel (0) target = $region13
    $region12: #{tpu_custom_call.1} parent=1 // pred_region
      _
    $region13: #{tpu_custom_call.1} parent=1 // pred_fallthru
      _
    // Predicated region
    $region14: #{tpu_custom_call.1} parent=1 // pred_check
      _
    $region15: #{tpu_custom_call.1} parent=1 // pred_check_branch
      %27 = sbr.rel (0) target = $region17
    $region16: #{tpu_custom_call.1} parent=1 // pred_region
      _
    $region17: #{tpu_custom_call.1} parent=1 // pred_fallthru
      _
    // Predicated region
    $region18: #{tpu_custom_call.1} parent=1 // pred_check
      _
    $region19: #{tpu_custom_call.1} parent=1 // pred_check_branch
      %29 = sbr.rel (0) target = $region21
    $region20: #{tpu_custom_call.1} parent=1 // pred_region
      _
    $region21: #{tpu_custom_call.1} parent=1 // pred_fallthru
      _
    // Predicated region
    $region22: #{tpu_custom_call.1} parent=1 // pred_check
      _
    $region23: #{tpu_custom_call.1} parent=1 // pred_check_branch
      %31 = sbr.rel (0) target = $region25
    $region24: #{tpu_custom_call.1} parent=1 // pred_region
      _
    $region25: #{tpu_custom_call.1} parent=1 // pred_fallthru
      _
    // Predicated region
    $region26: #{tpu_custom_call.1} parent=1 // pred_check
      _
    $region27: #{tpu_custom_call.1} parent=1 // pred_check_branch
      %33 = sbr.rel (0) target = $region29
    $region28: #{tpu_custom_call.1} parent=1 // pred_region
      _
    $region29: #{tpu_custom_call.1} parent=1 // pred_fallthru
      _
    // Predicated region
    $region30: #{tpu_custom_call.1} parent=1 // pred_check
      _
    $region31: #{tpu_custom_call.1} parent=1 // pred_check_branch
      %35 = sbr.rel (0) target = $region33
    $region32: #{tpu_custom_call.1} parent=1 // pred_region
      _
    $region33: #{tpu_custom_call.1} parent=1 // pred_fallthru
      _
    // Predicated region
    $region34: #{tpu_custom_call.1} parent=1 // pred_check
      _
    $region35: #{tpu_custom_call.1} parent=1 // pred_check_branch
      %37 = sbr.rel (0) target = $region37
    $region36: #{tpu_custom_call.1} parent=1 // pred_region
      _
    $region37: #{tpu_custom_call.1} parent=1 // pred_fallthru
      _
    // Predicated region
    $region38: #{tpu_custom_call.1} parent=1 // pred_check
      _
    $region39: #{tpu_custom_call.1} parent=1 // pred_check_branch
      %39 = sbr.rel (0) target = $region41
    $region40: #{tpu_custom_call.1} parent=1 // pred_region
      _
    $region41: #{tpu_custom_call.1} parent=1 // pred_fallthru
      _
    // Predicated region
    $region42: #{tpu_custom_call.1} parent=1 // pred_check
      _
    $region43: #{tpu_custom_call.1} parent=1 // pred_check_branch
      %41 = sbr.rel (0) target = $region45
    $region44: #{tpu_custom_call.1} parent=1 // pred_region
      _
    $region45: #{tpu_custom_call.1} parent=1 // pred_fallthru
      _
    // Predicated region
    $region46: #{tpu_custom_call.1} parent=1 // pred_check
      _
    $region47: #{tpu_custom_call.1} parent=1 // pred_check_branch
      %43 = sbr.rel (0) target = $region49
    $region48: #{tpu_custom_call.1} parent=1 // pred_region
      _
    $region49: #{tpu_custom_call.1} parent=1 // pred_fallthru
      _
    // Predicated region
    $region50: #{tpu_custom_call.1} parent=1 // pred_check
      _
    $region51: #{tpu_custom_call.1} parent=1 // pred_check_branch
      %45 = sbr.rel (0) target = $region53
    $region52: #{tpu_custom_call.1} parent=1 // pred_region
      _
    $region53: #{tpu_custom_call.1} parent=1 // pred_fallthru
      _
    // Predicated region
    $region54: #{tpu_custom_call.1} parent=1 // pred_check
      _
    $region55: #{tpu_custom_call.1} parent=1 // pred_check_branch
      %47 = sbr.rel (0) target = $region57
    $region56: #{tpu_custom_call.1} parent=1 // pred_region
      _
    $region57: #{tpu_custom_call.1} parent=1 // pred_fallthru
      _
    %v48 = vld [vmem:[%s0] sm:$0xff]
    %v49 = vld [vmem:[%s0 + $0x8] sm:$0xff]
    %v50 = vld [vmem:[%s0 + $0x10] sm:$0xff]
    %v51 = vld [vmem:[%s0 + $0x18] sm:$0xff]
    %v52 = vld [vmem:[%s0 + $0x20] sm:$0xff]
    %v53 = vld [vmem:[%s0 + $0x28] sm:$0xff]
    %v54 = vld [vmem:[%s0 + $0x30] sm:$0xff]
    %v55 = vld [vmem:[%s0 + $0x38] sm:$0xff]
    %v56 = vld [vmem:[%s0 + $0x40] sm:$0xff]
    %v57 = vld [vmem:[%s0 + $0x48] sm:$0xff]
    %v58 = vld [vmem:[%s0 + $0x50] sm:$0xff]
    %v59 = vld [vmem:[%s0 + $0x58] sm:$0xff]
    %v60 = vld [vmem:[%s0 + $0x60] sm:$0xff]
    %v61 = vld [vmem:[%s0 + $0x68] sm:$0xff]
    %v62 = vld [vmem:[%s0 + $0x70] sm:$0xff]
    %v63 = vld [vmem:[%s0 + $0x78] sm:$0xff]
    %v64 = vld [vmem:[%s6] sm:$0xff]
    %v65 = vld [vmem:[%s7] sm:$0x1]
    %v67 = vlaneseq
    %v68 = vshrl.u32 %v67, 7
    %v69 = vsub.s32 0, %v68
    %v70 = vrot.slane %v65, %v69
    %vm72 = vcmask 64512
    %v74 = vsel %vm72, %v48, 0
    %v77 = vsel %vm72, %v49, 0
    %v80 = vsel %vm72, %v50, 0
    %v83 = vsel %vm72, %v51, 0
    %v86 = vsel %vm72, %v52, 0
    %v89 = vsel %vm72, %v53, 0
    %v92 = vsel %vm72, %v54, 0
    %v95 = vsel %vm72, %v55, 0
    %v98 = vsel %vm72, %v56, 0
    %v101 = vsel %vm72, %v57, 0
    %v104 = vsel %vm72, %v58, 0
    %v107 = vsel %vm72, %v59, 0
    %v110 = vsel %vm72, %v60, 0
    %v113 = vsel %vm72, %v61, 0
    %v116 = vsel %vm72, %v62, 0
    %v119 = vsel %vm72, %v63, 0
    %121 = vmatprep.subr.mxu0 0.0
    %122 = vmatpush1.msra.mxu0 0.0
    %123 = vmatprep.subr.mxu0 0.0
    %124 = vmatpush1.msra.mxu0 0.0
    %125 = vmatprep.subr.mxu0 0.0
    %126 = vmatpush1.msra.mxu0 0.0
    %127 = vmatprep.subr.mxu0 0.0
    %128 = vmatpush1.msra.mxu0 0.0
    %129 = vmatprep.subr.mxu0 0.0
    %130 = vmatpush1.msra.mxu0 0.0
    %131 = vmatprep.subr.mxu0 0.0
    %132 = vmatpush1.msra.mxu0 0.0
    %133 = vmatprep.subr.mxu0 0.0
    %134 = vmatpush1.msra.mxu0 0.0
    %135 = vmatprep.subr.mxu0 0.0
    %136 = vmatpush1.msra.mxu0 0.0
    %137 = vmatprep.subr.mxu0 0.0
    %138 = vmatpush1.msra.mxu0 0.0
    %139 = vmatprep.subr.mxu0 0.0
    %140 = vmatpush1.msra.mxu0 0.0
    %141 = vmatprep.subr.mxu0 0.0
    %142 = vmatpush1.msra.mxu0 0.0
    %143 = vmatprep.subr.mxu0 0.0
    %144 = vmatpush1.msra.mxu0 0.0
    %145 = vmatprep.subr.mxu0 0.0
    %146 = vmatpush1.msra.mxu0 0.0
    %147 = vmatprep.subr.mxu0 0.0
    %148 = vmatpush1.msra.mxu0 0.0
    %149 = vmatprep.subr.mxu0 0.0
    %150 = vmatpush1.msra.mxu0 0.0
    %151 = vmatprep.subr.mxu0 0.0
    %152 = vmatpush1.msra.mxu0 %v64
    %153 = vmatprep.subr.mxu0 0.0
    %154 = vmatpush2.msra.mxu0 0.0
    %155 = vmatprep.subr.mxu0 0.0
    %156 = vmatpush2.msra.mxu0 0.0
    %157 = vmatprep.subr.mxu0 0.0
    %158 = vmatpush2.msra.mxu0 0.0
    %159 = vmatprep.subr.mxu0 0.0
    %160 = vmatpush2.msra.mxu0 0.0
    %161 = vmatprep.subr.mxu0 0.0
    %162 = vmatpush2.msra.mxu0 0.0
    %163 = vmatprep.subr.mxu0 0.0
    %164 = vmatpush2.msra.mxu0 0.0
    %165 = vmatprep.subr.mxu0 0.0
    %166 = vmatpush2.msra.mxu0 0.0
    %167 = vmatprep.subr.mxu0 0.0
    %168 = vmatpush2.msra.mxu0 0.0
    %169 = vmatprep.subr.mxu0 0.0
    %170 = vmatpush2.msra.mxu0 0.0
    %171 = vmatprep.subr.mxu0 0.0
    %172 = vmatpush2.msra.mxu0 0.0
    %173 = vmatprep.subr.mxu0 0.0
    %174 = vmatpush2.msra.mxu0 0.0
    %175 = vmatprep.subr.mxu0 0.0
    %176 = vmatpush2.msra.mxu0 0.0
    %177 = vmatprep.subr.mxu0 0.0
    %178 = vmatpush2.msra.mxu0 0.0
    %179 = vmatprep.subr.mxu0 0.0
    %180 = vmatpush2.msra.mxu0 0.0
    %181 = vmatprep.subr.mxu0 0.0
    %182 = vmatpush2.msra.mxu0 0.0
    %183 = vmatprep.subr.mxu0 0.0
    %184 = vmatpush2.msra.mxu0 0.0
    %185 = vmatprep.mubr.f32.mxu0 0.0
    %186 = vmatmul.mubr.f32.gmra.mxu0 %v74
    %v187 = vpop.f32.mrf.mxu0
    %v188 = vadd.f32 %v70, %v187
    %v189 = vpop.f32.mrf.mxu0
    %190 = vmatprep.mubr.f32.mxu0 0.0
    %191 = vmatmul.mubr.f32.gmra.mxu0 %v77
    %v192 = vpop.f32.mrf.mxu0
    %v193 = vadd.f32 %v70, %v192
    %v194 = vpop.f32.mrf.mxu0
    %195 = vmatprep.mubr.f32.mxu0 0.0
    %196 = vmatmul.mubr.f32.gmra.mxu0 %v80
    %v197 = vpop.f32.mrf.mxu0
    %v198 = vadd.f32 %v70, %v197
    %v199 = vpop.f32.mrf.mxu0
    %200 = vmatprep.mubr.f32.mxu0 0.0
    %201 = vmatmul.mubr.f32.gmra.mxu0 %v83
    %v202 = vpop.f32.mrf.mxu0
    %v203 = vadd.f32 %v70, %v202
    %v204 = vpop.f32.mrf.mxu0
    %205 = vmatprep.mubr.f32.mxu0 0.0
    %206 = vmatmul.mubr.f32.gmra.mxu0 %v86
    %v207 = vpop.f32.mrf.mxu0
    %v208 = vadd.f32 %v70, %v207
    %v209 = vpop.f32.mrf.mxu0
    %210 = vmatprep.mubr.f32.mxu0 0.0
    %211 = vmatmul.mubr.f32.gmra.mxu0 %v89
    %v212 = vpop.f32.mrf.mxu0
    %v213 = vadd.f32 %v70, %v212
    %v214 = vpop.f32.mrf.mxu0
    %215 = vmatprep.mubr.f32.mxu0 0.0
    %216 = vmatmul.mubr.f32.gmra.mxu0 %v92
    %v217 = vpop.f32.mrf.mxu0
    %v218 = vadd.f32 %v70, %v217
    %v219 = vpop.f32.mrf.mxu0
    %220 = vmatprep.mubr.f32.mxu0 0.0
    %221 = vmatmul.mubr.f32.gmra.mxu0 %v95
    %v222 = vpop.f32.mrf.mxu0
    %v223 = vadd.f32 %v70, %v222
    %v224 = vpop.f32.mrf.mxu0
    %225 = vmatprep.mubr.f32.mxu0 0.0
    %226 = vmatmul.mubr.f32.gmra.mxu0 %v98
    %v227 = vpop.f32.mrf.mxu0
    %v228 = vadd.f32 %v70, %v227
    %v229 = vpop.f32.mrf.mxu0
    %230 = vmatprep.mubr.f32.mxu0 0.0
    %231 = vmatmul.mubr.f32.gmra.mxu0 %v101
    %v232 = vpop.f32.mrf.mxu0
    %v233 = vadd.f32 %v70, %v232
    %v234 = vpop.f32.mrf.mxu0
    %235 = vmatprep.mubr.f32.mxu0 0.0
    %236 = vmatmul.mubr.f32.gmra.mxu0 %v104
    %v237 = vpop.f32.mrf.mxu0
    %v238 = vadd.f32 %v70, %v237
    %v239 = vpop.f32.mrf.mxu0
    %240 = vmatprep.mubr.f32.mxu0 0.0
    %241 = vmatmul.mubr.f32.gmra.mxu0 %v107
    %v242 = vpop.f32.mrf.mxu0
    %v243 = vadd.f32 %v70, %v242
    %v244 = vpop.f32.mrf.mxu0
    %245 = vmatprep.mubr.f32.mxu0 0.0
    %246 = vmatmul.mubr.f32.gmra.mxu0 %v110
    %v247 = vpop.f32.mrf.mxu0
    %v248 = vadd.f32 %v70, %v247
    %v249 = vpop.f32.mrf.mxu0
    %250 = vmatprep.mubr.f32.mxu0 0.0
    %251 = vmatmul.mubr.f32.gmra.mxu0 %v113
    %v252 = vpop.f32.mrf.mxu0
    %v253 = vadd.f32 %v70, %v252
    %v254 = vpop.f32.mrf.mxu0
    %255 = vmatprep.mubr.f32.mxu0 0.0
    %256 = vmatmul.mubr.f32.gmra.mxu0 %v116
    %v257 = vpop.f32.mrf.mxu0
    %v258 = vadd.f32 %v70, %v257
    %v259 = vpop.f32.mrf.mxu0
    %260 = vmatprep.mubr.f32.mxu0 0.0
    %261 = vmatmul.mubr.f32.gmra.mxu0 %v119
    %v262 = vpop.f32.mrf.mxu0
    %v263 = vadd.f32 %v70, %v262
    %v264 = vpop.f32.mrf.mxu0
    %265 = vdwg.mxu0
    %v266 = vld [vmem:[%s1] sm:$0xff]
    %v267 = vld [vmem:[%s1 + $0x8] sm:$0xff]
    %v268 = vld [vmem:[%s1 + $0x10] sm:$0xff]
    %v269 = vld [vmem:[%s1 + $0x18] sm:$0xff]
    %v270 = vld [vmem:[%s1 + $0x20] sm:$0xff]
    %v271 = vld [vmem:[%s1 + $0x28] sm:$0xff]
    %v272 = vld [vmem:[%s1 + $0x30] sm:$0xff]
    %v273 = vld [vmem:[%s1 + $0x38] sm:$0xff]
    %274 = vmatprep.subr.mxu0 0.0
    %275 = vmatpush1.msra.mxu0 %v263
    %276 = vmatprep.subr.mxu0 0.0
    %277 = vmatpush1.msra.mxu0 %v258
    %278 = vmatprep.subr.mxu0 0.0
    %279 = vmatpush1.msra.mxu0 %v253
    %280 = vmatprep.subr.mxu0 0.0
    %281 = vmatpush1.msra.mxu0 %v248
    %282 = vmatprep.subr.mxu0 0.0
    %283 = vmatpush1.msra.mxu0 %v243
    %284 = vmatprep.subr.mxu0 0.0
    %285 = vmatpush1.msra.mxu0 %v238
    %286 = vmatprep.subr.mxu0 0.0
    %287 = vmatpush1.msra.mxu0 %v233
    %288 = vmatprep.subr.mxu0 0.0
    %289 = vmatpush1.msra.mxu0 %v228
    %290 = vmatprep.subr.mxu0 0.0
    %291 = vmatpush1.msra.mxu0 %v223
    %292 = vmatprep.subr.mxu0 0.0
    %293 = vmatpush1.msra.mxu0 %v218
    %294 = vmatprep.subr.mxu0 0.0
    %295 = vmatpush1.msra.mxu0 %v213
    %296 = vmatprep.subr.mxu0 0.0
    %297 = vmatpush1.msra.mxu0 %v208
    %298 = vmatprep.subr.mxu0 0.0
    %299 = vmatpush1.msra.mxu0 %v203
    %300 = vmatprep.subr.mxu0 0.0
    %301 = vmatpush1.msra.mxu0 %v198
    %302 = vmatprep.subr.mxu0 0.0
    %303 = vmatpush1.msra.mxu0 %v193
    %304 = vmatprep.subr.mxu0 0.0
    %305 = vmatpush1.msra.mxu0 %v188
    %306 = vmatprep.subr.mxu0 0.0
    %307 = vmatpush2.msra.mxu0 0.0
    %308 = vmatprep.subr.mxu0 0.0
    %309 = vmatpush2.msra.mxu0 0.0
    %310 = vmatprep.subr.mxu0 0.0
    %311 = vmatpush2.msra.mxu0 0.0
    %312 = vmatprep.subr.mxu0 0.0
    %313 = vmatpush2.msra.mxu0 0.0
    %314 = vmatprep.subr.mxu0 0.0
    %315 = vmatpush2.msra.mxu0 0.0
    %316 = vmatprep.subr.mxu0 0.0
    %317 = vmatpush2.msra.mxu0 0.0
    %318 = vmatprep.subr.mxu0 0.0
    %319 = vmatpush2.msra.mxu0 0.0
    %320 = vmatprep.subr.mxu0 0.0
    %321 = vmatpush2.msra.mxu0 0.0
    %322 = vmatprep.subr.mxu0 0.0
    %323 = vmatpush2.msra.mxu0 0.0
    %324 = vmatprep.subr.mxu0 0.0
    %325 = vmatpush2.msra.mxu0 0.0
    %326 = vmatprep.subr.mxu0 0.0
    %327 = vmatpush2.msra.mxu0 0.0
    %328 = vmatprep.subr.mxu0 0.0
    %329 = vmatpush2.msra.mxu0 0.0
    %330 = vmatprep.subr.mxu0 0.0
    %331 = vmatpush2.msra.mxu0 0.0
    %332 = vmatprep.subr.mxu0 0.0
    %333 = vmatpush2.msra.mxu0 0.0
    %334 = vmatprep.subr.mxu0 0.0
    %335 = vmatpush2.msra.mxu0 0.0
    %336 = vmatprep.subr.mxu0 0.0
    %337 = vmatpush2.msra.mxu0 0.0
    %338 = vmatprep.mubr.f32.mxu0 0.0
    %339 = vmatmul.mubr.f32.gmra.mxu0 %v266
    %v340 = vpop.f32.mrf.mxu0
    %v341 = vadd.f32 0.0, %v340
    %v342 = vpop.f32.mrf.mxu0
    %343 = vmatprep.mubr.f32.mxu0 0.0
    %344 = vmatmul.mubr.f32.gmra.mxu0 %v267
    %v345 = vpop.f32.mrf.mxu0
    %v346 = vadd.f32 0.0, %v345
    %v347 = vpop.f32.mrf.mxu0
    %348 = vmatprep.mubr.f32.mxu0 0.0
    %349 = vmatmul.mubr.f32.gmra.mxu0 %v268
    %v350 = vpop.f32.mrf.mxu0
    %v351 = vadd.f32 0.0, %v350
    %v352 = vpop.f32.mrf.mxu0
    %353 = vmatprep.mubr.f32.mxu0 0.0
    %354 = vmatmul.mubr.f32.gmra.mxu0 %v269
    %v355 = vpop.f32.mrf.mxu0
    %v356 = vadd.f32 0.0, %v355
    %v357 = vpop.f32.mrf.mxu0
    %358 = vmatprep.mubr.f32.mxu0 0.0
    %359 = vmatmul.mubr.f32.gmra.mxu0 %v270
    %v360 = vpop.f32.mrf.mxu0
    %v361 = vadd.f32 0.0, %v360
    %v362 = vpop.f32.mrf.mxu0
    %363 = vmatprep.mubr.f32.mxu0 0.0
    %364 = vmatmul.mubr.f32.gmra.mxu0 %v271
    %v365 = vpop.f32.mrf.mxu0
    %v366 = vadd.f32 0.0, %v365
    %v367 = vpop.f32.mrf.mxu0
    %368 = vmatprep.mubr.f32.mxu0 0.0
    %369 = vmatmul.mubr.f32.gmra.mxu0 %v272
    %v370 = vpop.f32.mrf.mxu0
    %v371 = vadd.f32 0.0, %v370
    %v372 = vpop.f32.mrf.mxu0
    %373 = vmatprep.mubr.f32.mxu0 0.0
    %374 = vmatmul.mubr.f32.gmra.mxu0 %v273
    %v375 = vpop.f32.mrf.mxu0
    %v376 = vadd.f32 0.0, %v375
    %v377 = vpop.f32.mrf.mxu0
    %378 = vdwg.mxu0
    %v379 = vld [vmem:[%s2] sm:$0xff]
    %v380 = vld [vmem:[%s2 + $0x8] sm:$0xff]
    %v381 = vld [vmem:[%s2 + $0x10] sm:$0xff]
    %v382 = vld [vmem:[%s2 + $0x18] sm:$0xff]
    %v383 = vld [vmem:[%s2 + $0x20] sm:$0xff]
    %v384 = vld [vmem:[%s2 + $0x28] sm:$0xff]
    %v385 = vld [vmem:[%s2 + $0x30] sm:$0xff]
    %v386 = vld [vmem:[%s2 + $0x38] sm:$0xff]
    %v387 = vld [vmem:[%s2 + $0x40] sm:$0xff]
    %v388 = vld [vmem:[%s2 + $0x48] sm:$0xff]
    %v389 = vld [vmem:[%s2 + $0x50] sm:$0xff]
    %v390 = vld [vmem:[%s2 + $0x58] sm:$0xff]
    %v391 = vld [vmem:[%s2 + $0x60] sm:$0xff]
    %v392 = vld [vmem:[%s2 + $0x68] sm:$0xff]
    %v393 = vld [vmem:[%s2 + $0x70] sm:$0xff]
    %v394 = vld [vmem:[%s2 + $0x78] sm:$0xff]
    %v395 = vld [vmem:[%s4] sm:$0xff]
    %v396 = vld [vmem:[%s4 + $0x8] sm:$0xff]
    %v397 = vld [vmem:[%s4 + $0x10] sm:$0xff]
    %v398 = vld [vmem:[%s4 + $0x18] sm:$0xff]
    %v399 = vld [vmem:[%s4 + $0x20] sm:$0xff]
    %v400 = vld [vmem:[%s4 + $0x28] sm:$0xff]
    %v401 = vld [vmem:[%s4 + $0x30] sm:$0xff]
    %v402 = vld [vmem:[%s4 + $0x38] sm:$0xff]
    %v403 = vmul.f32 %v395, %v341
    %v404 = vmul.f32 %v396, %v346
    %v405 = vmul.f32 %v397, %v351
    %v406 = vmul.f32 %v398, %v356
    %v407 = vmul.f32 %v399, %v361
    %v408 = vmul.f32 %v400, %v366
    %v409 = vmul.f32 %v401, %v371
    %v410 = vmul.f32 %v402, %v376
    %vm411 = vcmask 523264
    %v413 = vsel %vm411, %v379, 0
    %v416 = vsel %vm411, %v380, 0
    %v419 = vsel %vm411, %v381, 0
    %v422 = vsel %vm411, %v382, 0
    %v425 = vsel %vm411, %v383, 0
    %v428 = vsel %vm411, %v384, 0
    %v431 = vsel %vm411, %v385, 0
    %v434 = vsel %vm411, %v386, 0
    %v437 = vsel %vm411, %v387, 0
    %v440 = vsel %vm411, %v388, 0
    %v443 = vsel %vm411, %v389, 0
    %v446 = vsel %vm411, %v390, 0
    %v449 = vsel %vm411, %v391, 0
    %v452 = vsel %vm411, %v392, 0
    %v455 = vsel %vm411, %v393, 0
    %v458 = vsel %vm411, %v394, 0
    %460 = vmatprep.subr.mxu0 0.0
    %461 = vmatpush1.msra.mxu0 0.0
    %462 = vmatprep.subr.mxu0 0.0
    %463 = vmatpush1.msra.mxu0 0.0
    %464 = vmatprep.subr.mxu0 0.0
    %465 = vmatpush1.msra.mxu0 0.0
    %466 = vmatprep.subr.mxu0 0.0
    %467 = vmatpush1.msra.mxu0 0.0
    %468 = vmatprep.subr.mxu0 0.0
    %469 = vmatpush1.msra.mxu0 0.0
    %470 = vmatprep.subr.mxu0 0.0
    %471 = vmatpush1.msra.mxu0 0.0
    %472 = vmatprep.subr.mxu0 0.0
    %473 = vmatpush1.msra.mxu0 0.0
    %474 = vmatprep.subr.mxu0 0.0
    %475 = vmatpush1.msra.mxu0 0.0
    %476 = vmatprep.subr.mxu0 0.0
    %477 = vmatpush1.msra.mxu0 %v410
    %478 = vmatprep.subr.mxu0 0.0
    %479 = vmatpush1.msra.mxu0 %v409
    %480 = vmatprep.subr.mxu0 0.0
    %481 = vmatpush1.msra.mxu0 %v408
    %482 = vmatprep.subr.mxu0 0.0
    %483 = vmatpush1.msra.mxu0 %v407
    %484 = vmatprep.subr.mxu0 0.0
    %485 = vmatpush1.msra.mxu0 %v406
    %486 = vmatprep.subr.mxu0 0.0
    %487 = vmatpush1.msra.mxu0 %v405
    %488 = vmatprep.subr.mxu0 0.0
    %489 = vmatpush1.msra.mxu0 %v404
    %490 = vmatprep.subr.mxu0 0.0
    %491 = vmatpush1.msra.mxu0 %v403
    %492 = vmatprep.subr.mxu0 0.0
    %493 = vmatpush2.msra.mxu0 0.0
    %494 = vmatprep.subr.mxu0 0.0
    %495 = vmatpush2.msra.mxu0 0.0
    %496 = vmatprep.subr.mxu0 0.0
    %497 = vmatpush2.msra.mxu0 0.0
    %498 = vmatprep.subr.mxu0 0.0
    %499 = vmatpush2.msra.mxu0 0.0
    %500 = vmatprep.subr.mxu0 0.0
    %501 = vmatpush2.msra.mxu0 0.0
    %502 = vmatprep.subr.mxu0 0.0
    %503 = vmatpush2.msra.mxu0 0.0
    %504 = vmatprep.subr.mxu0 0.0
    %505 = vmatpush2.msra.mxu0 0.0
    %506 = vmatprep.subr.mxu0 0.0
    %507 = vmatpush2.msra.mxu0 0.0
    %508 = vmatprep.subr.mxu0 0.0
    %509 = vmatpush2.msra.mxu0 0.0
    %510 = vmatprep.subr.mxu0 0.0
    %511 = vmatpush2.msra.mxu0 0.0
    %512 = vmatprep.subr.mxu0 0.0
    %513 = vmatpush2.msra.mxu0 0.0
    %514 = vmatprep.subr.mxu0 0.0
    %515 = vmatpush2.msra.mxu0 0.0
    %516 = vmatprep.subr.mxu0 0.0
    %517 = vmatpush2.msra.mxu0 0.0
    %518 = vmatprep.subr.mxu0 0.0
    %519 = vmatpush2.msra.mxu0 0.0
    %520 = vmatprep.subr.mxu0 0.0
    %521 = vmatpush2.msra.mxu0 0.0
    %522 = vmatprep.subr.mxu0 0.0
    %523 = vmatpush2.msra.mxu0 0.0
    %524 = vmatprep.mubr.f32.mxu0 0.0
    %525 = vmatmul.mubr.f32.gmra.mxu0 %v413
    %v526 = vpop.f32.mrf.mxu0
    %v527 = vadd.f32 0.0, %v526
    %v528 = vpop.f32.mrf.mxu0
    %529 = vmatprep.mubr.f32.mxu0 0.0
    %530 = vmatmul.mubr.f32.gmra.mxu0 %v416
    %v531 = vpop.f32.mrf.mxu0
    %v532 = vadd.f32 0.0, %v531
    %v533 = vpop.f32.mrf.mxu0
    %534 = vmatprep.mubr.f32.mxu0 0.0
    %535 = vmatmul.mubr.f32.gmra.mxu0 %v419
    %v536 = vpop.f32.mrf.mxu0
    %v537 = vadd.f32 0.0, %v536
    %v538 = vpop.f32.mrf.mxu0
    %539 = vmatprep.mubr.f32.mxu0 0.0
    %540 = vmatmul.mubr.f32.gmra.mxu0 %v422
    %v541 = vpop.f32.mrf.mxu0
    %v542 = vadd.f32 0.0, %v541
    %v543 = vpop.f32.mrf.mxu0
    %544 = vmatprep.mubr.f32.mxu0 0.0
    %545 = vmatmul.mubr.f32.gmra.mxu0 %v425
    %v546 = vpop.f32.mrf.mxu0
    %v547 = vadd.f32 0.0, %v546
    %v548 = vpop.f32.mrf.mxu0
    %549 = vmatprep.mubr.f32.mxu0 0.0
    %550 = vmatmul.mubr.f32.gmra.mxu0 %v428
    %v551 = vpop.f32.mrf.mxu0
    %v552 = vadd.f32 0.0, %v551
    %v553 = vpop.f32.mrf.mxu0
    %554 = vmatprep.mubr.f32.mxu0 0.0
    %555 = vmatmul.mubr.f32.gmra.mxu0 %v431
    %v556 = vpop.f32.mrf.mxu0
    %v557 = vadd.f32 0.0, %v556
    %v558 = vpop.f32.mrf.mxu0
    %559 = vmatprep.mubr.f32.mxu0 0.0
    %560 = vmatmul.mubr.f32.gmra.mxu0 %v434
    %v561 = vpop.f32.mrf.mxu0
    %v562 = vadd.f32 0.0, %v561
    %v563 = vpop.f32.mrf.mxu0
    %564 = vmatprep.mubr.f32.mxu0 0.0
    %565 = vmatmul.mubr.f32.gmra.mxu0 %v437
    %v566 = vpop.f32.mrf.mxu0
    %v567 = vadd.f32 0.0, %v566
    %v568 = vpop.f32.mrf.mxu0
    %569 = vmatprep.mubr.f32.mxu0 0.0
    %570 = vmatmul.mubr.f32.gmra.mxu0 %v440
    %v571 = vpop.f32.mrf.mxu0
    %v572 = vadd.f32 0.0, %v571
    %v573 = vpop.f32.mrf.mxu0
    %574 = vmatprep.mubr.f32.mxu0 0.0
    %575 = vmatmul.mubr.f32.gmra.mxu0 %v443
    %v576 = vpop.f32.mrf.mxu0
    %v577 = vadd.f32 0.0, %v576
    %v578 = vpop.f32.mrf.mxu0
    %579 = vmatprep.mubr.f32.mxu0 0.0
    %580 = vmatmul.mubr.f32.gmra.mxu0 %v446
    %v581 = vpop.f32.mrf.mxu0
    %v582 = vadd.f32 0.0, %v581
    %v583 = vpop.f32.mrf.mxu0
    %584 = vmatprep.mubr.f32.mxu0 0.0
    %585 = vmatmul.mubr.f32.gmra.mxu0 %v449
    %v586 = vpop.f32.mrf.mxu0
    %v587 = vadd.f32 0.0, %v586
    %v588 = vpop.f32.mrf.mxu0
    %589 = vmatprep.mubr.f32.mxu0 0.0
    %590 = vmatmul.mubr.f32.gmra.mxu0 %v452
    %v591 = vpop.f32.mrf.mxu0
    %v592 = vadd.f32 0.0, %v591
    %v593 = vpop.f32.mrf.mxu0
    %594 = vmatprep.mubr.f32.mxu0 0.0
    %595 = vmatmul.mubr.f32.gmra.mxu0 %v455
    %v596 = vpop.f32.mrf.mxu0
    %v597 = vadd.f32 0.0, %v596
    %v598 = vpop.f32.mrf.mxu0
    %599 = vmatprep.mubr.f32.mxu0 0.0
    %600 = vmatmul.mubr.f32.gmra.mxu0 %v458
    %v601 = vpop.f32.mrf.mxu0
    %v602 = vadd.f32 0.0, %v601
    %v603 = vpop.f32.mrf.mxu0
    %604 = vdwg.mxu0
    %v605 = vld [vmem:[%s3] sm:$0xff]
    %v606 = vld [vmem:[%s3 + $0x8] sm:$0xff]
    %v607 = vld [vmem:[%s3 + $0x10] sm:$0xff]
    %v608 = vld [vmem:[%s3 + $0x18] sm:$0xff]
    %v609 = vld [vmem:[%s3 + $0x20] sm:$0xff]
    %v610 = vld [vmem:[%s3 + $0x28] sm:$0xff]
    %v611 = vld [vmem:[%s3 + $0x30] sm:$0xff]
    %v612 = vld [vmem:[%s3 + $0x38] sm:$0xff]
    %v613 = vld [vmem:[%s3 + $0x40] sm:$0xff]
    %v614 = vld [vmem:[%s3 + $0x48] sm:$0xff]
    %v615 = vld [vmem:[%s3 + $0x50] sm:$0xff]
    %v616 = vld [vmem:[%s3 + $0x58] sm:$0xff]
    %v617 = vld [vmem:[%s3 + $0x60] sm:$0xff]
    %v618 = vld [vmem:[%s3 + $0x68] sm:$0xff]
    %v619 = vld [vmem:[%s3 + $0x70] sm:$0xff]
    %v620 = vld [vmem:[%s3 + $0x78] sm:$0xff]
    %v621 = vld [vmem:[%s3 + $0x80] sm:$0xff]
    %v622 = vld [vmem:[%s3 + $0x88] sm:$0xff]
    %v623 = vld [vmem:[%s3 + $0x90] sm:$0xff]
    %v624 = vld [vmem:[%s3 + $0x98] sm:$0xff]
    %v625 = vld [vmem:[%s3 + $0xa0] sm:$0xff]
    %v626 = vld [vmem:[%s3 + $0xa8] sm:$0xff]
    %v627 = vld [vmem:[%s3 + $0xb0] sm:$0xff]
    %v628 = vld [vmem:[%s3 + $0xb8] sm:$0xff]
    %v629 = vld [vmem:[%s3 + $0xc0] sm:$0xff]
    %v630 = vld [vmem:[%s3 + $0xc8] sm:$0xff]
    %v631 = vld [vmem:[%s3 + $0xd0] sm:$0xff]
    %v632 = vld [vmem:[%s3 + $0xd8] sm:$0xff]
    %v633 = vld [vmem:[%s3 + $0xe0] sm:$0xff]
    %v634 = vld [vmem:[%s3 + $0xe8] sm:$0xff]
    %v635 = vld [vmem:[%s3 + $0xf0] sm:$0xff]
    %v636 = vld [vmem:[%s3 + $0xf8] sm:$0xff]
    %637 = vmatprep.subr.mxu0 0.0
    %638 = vmatpush1.msra.mxu0 %v602
    %639 = vmatprep.subr.mxu0 0.0
    %640 = vmatpush1.msra.mxu0 %v597
    %641 = vmatprep.subr.mxu0 0.0
    %642 = vmatpush1.msra.mxu0 %v592
    %643 = vmatprep.subr.mxu0 0.0
    %644 = vmatpush1.msra.mxu0 %v587
    %645 = vmatprep.subr.mxu0 0.0
    %646 = vmatpush1.msra.mxu0 %v582
    %647 = vmatprep.subr.mxu0 0.0
    %648 = vmatpush1.msra.mxu0 %v577
    %649 = vmatprep.subr.mxu0 0.0
    %650 = vmatpush1.msra.mxu0 %v572
    %651 = vmatprep.subr.mxu0 0.0
    %652 = vmatpush1.msra.mxu0 %v567
    %653 = vmatprep.subr.mxu0 0.0
    %654 = vmatpush1.msra.mxu0 %v562
    %655 = vmatprep.subr.mxu0 0.0
    %656 = vmatpush1.msra.mxu0 %v557
    %657 = vmatprep.subr.mxu0 0.0
    %658 = vmatpush1.msra.mxu0 %v552
    %659 = vmatprep.subr.mxu0 0.0
    %660 = vmatpush1.msra.mxu0 %v547
    %661 = vmatprep.subr.mxu0 0.0
    %662 = vmatpush1.msra.mxu0 %v542
    %663 = vmatprep.subr.mxu0 0.0
    %664 = vmatpush1.msra.mxu0 %v537
    %665 = vmatprep.subr.mxu0 0.0
    %666 = vmatpush1.msra.mxu0 %v532
    %667 = vmatprep.subr.mxu0 0.0
    %668 = vmatpush1.msra.mxu0 %v527
    %669 = vmatprep.subr.mxu0 0.0
    %670 = vmatpush2.msra.mxu0 0.0
    %671 = vmatprep.subr.mxu0 0.0
    %672 = vmatpush2.msra.mxu0 0.0
    %673 = vmatprep.subr.mxu0 0.0
    %674 = vmatpush2.msra.mxu0 0.0
    %675 = vmatprep.subr.mxu0 0.0
    %676 = vmatpush2.msra.mxu0 0.0
    %677 = vmatprep.subr.mxu0 0.0
    %678 = vmatpush2.msra.mxu0 0.0
    %679 = vmatprep.subr.mxu0 0.0
    %680 = vmatpush2.msra.mxu0 0.0
    %681 = vmatprep.subr.mxu0 0.0
    %682 = vmatpush2.msra.mxu0 0.0
    %683 = vmatprep.subr.mxu0 0.0
    %684 = vmatpush2.msra.mxu0 0.0
    %685 = vmatprep.subr.mxu0 0.0
    %686 = vmatpush2.msra.mxu0 0.0
    %687 = vmatprep.subr.mxu0 0.0
    %688 = vmatpush2.msra.mxu0 0.0
    %689 = vmatprep.subr.mxu0 0.0
    %690 = vmatpush2.msra.mxu0 0.0
    %691 = vmatprep.subr.mxu0 0.0
    %692 = vmatpush2.msra.mxu0 0.0
    %693 = vmatprep.subr.mxu0 0.0
    %694 = vmatpush2.msra.mxu0 0.0
    %695 = vmatprep.subr.mxu0 0.0
    %696 = vmatpush2.msra.mxu0 0.0
    %697 = vmatprep.subr.mxu0 0.0
    %698 = vmatpush2.msra.mxu0 0.0
    %699 = vmatprep.subr.mxu0 0.0
    %700 = vmatpush2.msra.mxu0 0.0
    %701 = vmatprep.mubr.f32.mxu0 0.0
    %702 = vmatmul.mubr.f32.gmra.mxu0 %v605
    %v703 = vpop.f32.mrf.mxu0
    %v704 = vadd.f32 0.0, %v703
    %v705 = vpop.f32.mrf.mxu0
    %706 = vmatprep.mubr.f32.mxu0 0.0
    %707 = vmatmul.mubr.f32.gmra.mxu0 %v606
    %v708 = vpop.f32.mrf.mxu0
    %v709 = vadd.f32 0.0, %v708
    %v710 = vpop.f32.mrf.mxu0
    %711 = vmatprep.mubr.f32.mxu0 0.0
    %712 = vmatmul.mubr.f32.gmra.mxu0 %v607
    %v713 = vpop.f32.mrf.mxu0
    %v714 = vadd.f32 0.0, %v713
    %v715 = vpop.f32.mrf.mxu0
    %716 = vmatprep.mubr.f32.mxu0 0.0
    %717 = vmatmul.mubr.f32.gmra.mxu0 %v608
    %v718 = vpop.f32.mrf.mxu0
    %v719 = vadd.f32 0.0, %v718
    %v720 = vpop.f32.mrf.mxu0
    %721 = vmatprep.mubr.f32.mxu0 0.0
    %722 = vmatmul.mubr.f32.gmra.mxu0 %v609
    %v723 = vpop.f32.mrf.mxu0
    %v724 = vadd.f32 0.0, %v723
    %v725 = vpop.f32.mrf.mxu0
    %726 = vmatprep.mubr.f32.mxu0 0.0
    %727 = vmatmul.mubr.f32.gmra.mxu0 %v610
    %v728 = vpop.f32.mrf.mxu0
    %v729 = vadd.f32 0.0, %v728
    %v730 = vpop.f32.mrf.mxu0
    %731 = vmatprep.mubr.f32.mxu0 0.0
    %732 = vmatmul.mubr.f32.gmra.mxu0 %v611
    %v733 = vpop.f32.mrf.mxu0
    %v734 = vadd.f32 0.0, %v733
    %v735 = vpop.f32.mrf.mxu0
    %736 = vmatprep.mubr.f32.mxu0 0.0
    %737 = vmatmul.mubr.f32.gmra.mxu0 %v612
    %v738 = vpop.f32.mrf.mxu0
    %v739 = vadd.f32 0.0, %v738
    %v740 = vpop.f32.mrf.mxu0
    %741 = vmatprep.mubr.f32.mxu0 0.0
    %742 = vmatmul.mubr.f32.gmra.mxu0 %v613
    %v743 = vpop.f32.mrf.mxu0
    %v744 = vadd.f32 0.0, %v743
    %v745 = vpop.f32.mrf.mxu0
    %746 = vmatprep.mubr.f32.mxu0 0.0
    %747 = vmatmul.mubr.f32.gmra.mxu0 %v614
    %v748 = vpop.f32.mrf.mxu0
    %v749 = vadd.f32 0.0, %v748
    %v750 = vpop.f32.mrf.mxu0
    %751 = vmatprep.mubr.f32.mxu0 0.0
    %752 = vmatmul.mubr.f32.gmra.mxu0 %v615
    %v753 = vpop.f32.mrf.mxu0
    %v754 = vadd.f32 0.0, %v753
    %v755 = vpop.f32.mrf.mxu0
    %756 = vmatprep.mubr.f32.mxu0 0.0
    %757 = vmatmul.mubr.f32.gmra.mxu0 %v616
    %v758 = vpop.f32.mrf.mxu0
    %v759 = vadd.f32 0.0, %v758
    %v760 = vpop.f32.mrf.mxu0
    %761 = vmatprep.mubr.f32.mxu0 0.0
    %762 = vmatmul.mubr.f32.gmra.mxu0 %v617
    %v763 = vpop.f32.mrf.mxu0
    %v764 = vadd.f32 0.0, %v763
    %v765 = vpop.f32.mrf.mxu0
    %766 = vmatprep.mubr.f32.mxu0 0.0
    %767 = vmatmul.mubr.f32.gmra.mxu0 %v618
    %v768 = vpop.f32.mrf.mxu0
    %v769 = vadd.f32 0.0, %v768
    %v770 = vpop.f32.mrf.mxu0
    %771 = vmatprep.mubr.f32.mxu0 0.0
    %772 = vmatmul.mubr.f32.gmra.mxu0 %v619
    %v773 = vpop.f32.mrf.mxu0
    %v774 = vadd.f32 0.0, %v773
    %v775 = vpop.f32.mrf.mxu0
    %776 = vmatprep.mubr.f32.mxu0 0.0
    %777 = vmatmul.mubr.f32.gmra.mxu0 %v620
    %v778 = vpop.f32.mrf.mxu0
    %v779 = vadd.f32 0.0, %v778
    %v780 = vpop.f32.mrf.mxu0
    %781 = vmatprep.mubr.f32.mxu0 0.0
    %782 = vmatmul.mubr.f32.gmra.mxu0 %v621
    %v783 = vpop.f32.mrf.mxu0
    %v784 = vadd.f32 0.0, %v783
    %v785 = vpop.f32.mrf.mxu0
    %786 = vmatprep.mubr.f32.mxu0 0.0
    %787 = vmatmul.mubr.f32.gmra.mxu0 %v622
    %v788 = vpop.f32.mrf.mxu0
    %v789 = vadd.f32 0.0, %v788
    %v790 = vpop.f32.mrf.mxu0
    %791 = vmatprep.mubr.f32.mxu0 0.0
    %792 = vmatmul.mubr.f32.gmra.mxu0 %v623
    %v793 = vpop.f32.mrf.mxu0
    %v794 = vadd.f32 0.0, %v793
    %v795 = vpop.f32.mrf.mxu0
    %796 = vmatprep.mubr.f32.mxu0 0.0
    %797 = vmatmul.mubr.f32.gmra.mxu0 %v624
    %v798 = vpop.f32.mrf.mxu0
    %v799 = vadd.f32 0.0, %v798
    %v800 = vpop.f32.mrf.mxu0
    %801 = vmatprep.mubr.f32.mxu0 0.0
    %802 = vmatmul.mubr.f32.gmra.mxu0 %v625
    %v803 = vpop.f32.mrf.mxu0
    %v804 = vadd.f32 0.0, %v803
    %v805 = vpop.f32.mrf.mxu0
    %806 = vmatprep.mubr.f32.mxu0 0.0
    %807 = vmatmul.mubr.f32.gmra.mxu0 %v626
    %v808 = vpop.f32.mrf.mxu0
    %v809 = vadd.f32 0.0, %v808
    %v810 = vpop.f32.mrf.mxu0
    %811 = vmatprep.mubr.f32.mxu0 0.0
    %812 = vmatmul.mubr.f32.gmra.mxu0 %v627
    %v813 = vpop.f32.mrf.mxu0
    %v814 = vadd.f32 0.0, %v813
    %v815 = vpop.f32.mrf.mxu0
    %816 = vmatprep.mubr.f32.mxu0 0.0
    %817 = vmatmul.mubr.f32.gmra.mxu0 %v628
    %v818 = vpop.f32.mrf.mxu0
    %v819 = vadd.f32 0.0, %v818
    %v820 = vpop.f32.mrf.mxu0
    %821 = vmatprep.mubr.f32.mxu0 0.0
    %822 = vmatmul.mubr.f32.gmra.mxu0 %v629
    %v823 = vpop.f32.mrf.mxu0
    %v824 = vadd.f32 0.0, %v823
    %v825 = vpop.f32.mrf.mxu0
    %826 = vmatprep.mubr.f32.mxu0 0.0
    %827 = vmatmul.mubr.f32.gmra.mxu0 %v630
    %v828 = vpop.f32.mrf.mxu0
    %v829 = vadd.f32 0.0, %v828
    %v830 = vpop.f32.mrf.mxu0
    %831 = vmatprep.mubr.f32.mxu0 0.0
    %832 = vmatmul.mubr.f32.gmra.mxu0 %v631
    %v833 = vpop.f32.mrf.mxu0
    %v834 = vadd.f32 0.0, %v833
    %v835 = vpop.f32.mrf.mxu0
    %836 = vmatprep.mubr.f32.mxu0 0.0
    %837 = vmatmul.mubr.f32.gmra.mxu0 %v632
    %v838 = vpop.f32.mrf.mxu0
    %v839 = vadd.f32 0.0, %v838
    %v840 = vpop.f32.mrf.mxu0
    %841 = vmatprep.mubr.f32.mxu0 0.0
    %842 = vmatmul.mubr.f32.gmra.mxu0 %v633
    %v843 = vpop.f32.mrf.mxu0
    %v844 = vadd.f32 0.0, %v843
    %v845 = vpop.f32.mrf.mxu0
    %846 = vmatprep.mubr.f32.mxu0 0.0
    %847 = vmatmul.mubr.f32.gmra.mxu0 %v634
    %v848 = vpop.f32.mrf.mxu0
    %v849 = vadd.f32 0.0, %v848
    %v850 = vpop.f32.mrf.mxu0
    %851 = vmatprep.mubr.f32.mxu0 0.0
    %852 = vmatmul.mubr.f32.gmra.mxu0 %v635
    %v853 = vpop.f32.mrf.mxu0
    %v854 = vadd.f32 0.0, %v853
    %v855 = vpop.f32.mrf.mxu0
    %856 = vmatprep.mubr.f32.mxu0 0.0
    %857 = vmatmul.mubr.f32.gmra.mxu0 %v636
    %v858 = vpop.f32.mrf.mxu0
    %v859 = vadd.f32 0.0, %v858
    %v860 = vpop.f32.mrf.mxu0
    %861 = vdwg.mxu0
    %878 = vrot.lane.b32.xlu0 %v784, 32
    %v879 = vpop.permute.xlu0 %878
    %880 = vrot.lane.b32.xlu0 %v789, 32
    %v881 = vpop.permute.xlu0 %880
    %882 = vrot.lane.b32.xlu0 %v794, 32
    %v883 = vpop.permute.xlu0 %882
    %884 = vrot.lane.b32.xlu0 %v799, 32
    %v885 = vpop.permute.xlu0 %884
    %886 = vrot.lane.b32.xlu0 %v804, 32
    %v887 = vpop.permute.xlu0 %886
    %888 = vrot.lane.b32.xlu0 %v809, 32
    %v889 = vpop.permute.xlu0 %888
    %890 = vrot.lane.b32.xlu0 %v814, 32
    %v891 = vpop.permute.xlu0 %890
    %892 = vrot.lane.b32.xlu0 %v819, 32
    %v893 = vpop.permute.xlu0 %892
    %894 = vrot.lane.b32.xlu0 %v824, 32
    %v895 = vpop.permute.xlu0 %894
    %896 = vrot.lane.b32.xlu0 %v829, 32
    %v897 = vpop.permute.xlu0 %896
    %898 = vrot.lane.b32.xlu0 %v834, 32
    %v899 = vpop.permute.xlu0 %898
    %900 = vrot.lane.b32.xlu0 %v839, 32
    %v901 = vpop.permute.xlu0 %900
    %902 = vrot.lane.b32.xlu0 %v844, 32
    %v903 = vpop.permute.xlu0 %902
    %904 = vrot.lane.b32.xlu0 %v849, 32
    %v905 = vpop.permute.xlu0 %904
    %906 = vrot.lane.b32.xlu0 %v854, 32
    %v907 = vpop.permute.xlu0 %906
    %908 = vrot.lane.b32.xlu0 %v859, 32
    %v909 = vpop.permute.xlu0 %908
    %vm926 = vcmask 261120
    %v927 = vsel %vm926, %v704, %v879
    %v928 = vsel %vm926, %v709, %v881
    %v929 = vsel %vm926, %v714, %v883
    %v930 = vsel %vm926, %v719, %v885
    %v931 = vsel %vm926, %v724, %v887
    %v932 = vsel %vm926, %v729, %v889
    %v933 = vsel %vm926, %v734, %v891
    %v934 = vsel %vm926, %v739, %v893
    %v935 = vsel %vm926, %v744, %v895
    %v936 = vsel %vm926, %v749, %v897
    %v937 = vsel %vm926, %v754, %v899
    %v938 = vsel %vm926, %v759, %v901
    %v939 = vsel %vm926, %v764, %v903
    %v940 = vsel %vm926, %v769, %v905
    %v941 = vsel %vm926, %v774, %v907
    %v942 = vsel %vm926, %v779, %v909
    %v943 = vld [vmem:[%s5] sm:$0xff]
    %v944 = vld [vmem:[%s5 + $0x8] sm:$0xff]
    %v945 = vld [vmem:[%s5 + $0x10] sm:$0xff]
    %v946 = vld [vmem:[%s5 + $0x18] sm:$0xff]
    %v947 = vld [vmem:[%s5 + $0x20] sm:$0xff]
    %v948 = vld [vmem:[%s5 + $0x28] sm:$0xff]
    %v949 = vld [vmem:[%s5 + $0x30] sm:$0xff]
    %v950 = vld [vmem:[%s5 + $0x38] sm:$0xff]
    %v952 = vsel %vm411, %v927, 0
    %v955 = vsel %vm411, %v928, 0
    %v958 = vsel %vm411, %v929, 0
    %v961 = vsel %vm411, %v930, 0
    %v964 = vsel %vm411, %v931, 0
    %v967 = vsel %vm411, %v932, 0
    %v970 = vsel %vm411, %v933, 0
    %v973 = vsel %vm411, %v934, 0
    %v976 = vsel %vm411, %v935, 0
    %v979 = vsel %vm411, %v936, 0
    %v982 = vsel %vm411, %v937, 0
    %v985 = vsel %vm411, %v938, 0
    %v988 = vsel %vm411, %v939, 0
    %v991 = vsel %vm411, %v940, 0
    %v994 = vsel %vm411, %v941, 0
    %v997 = vsel %vm411, %v942, 0
    %999 = vmatprep.subr.mxu0 0.0
    %1000 = vmatpush1.msra.mxu0 0.0
    %1001 = vmatprep.subr.mxu0 0.0
    %1002 = vmatpush1.msra.mxu0 0.0
    %1003 = vmatprep.subr.mxu0 0.0
    %1004 = vmatpush1.msra.mxu0 0.0
    %1005 = vmatprep.subr.mxu0 0.0
    %1006 = vmatpush1.msra.mxu0 0.0
    %1007 = vmatprep.subr.mxu0 0.0
    %1008 = vmatpush1.msra.mxu0 0.0
    %1009 = vmatprep.subr.mxu0 0.0
    %1010 = vmatpush1.msra.mxu0 0.0
    %1011 = vmatprep.subr.mxu0 0.0
    %1012 = vmatpush1.msra.mxu0 0.0
    %1013 = vmatprep.subr.mxu0 0.0
    %1014 = vmatpush1.msra.mxu0 0.0
    %1015 = vmatprep.subr.mxu0 0.0
    %1016 = vmatpush1.msra.mxu0 %v950
    %1017 = vmatprep.subr.mxu0 0.0
    %1018 = vmatpush1.msra.mxu0 %v949
    %1019 = vmatprep.subr.mxu0 0.0
    %1020 = vmatpush1.msra.mxu0 %v948
    %1021 = vmatprep.subr.mxu0 0.0
    %1022 = vmatpush1.msra.mxu0 %v947
    %1023 = vmatprep.subr.mxu0 0.0
    %1024 = vmatpush1.msra.mxu0 %v946
    %1025 = vmatprep.subr.mxu0 0.0
    %1026 = vmatpush1.msra.mxu0 %v945
    %1027 = vmatprep.subr.mxu0 0.0
    %1028 = vmatpush1.msra.mxu0 %v944
    %1029 = vmatprep.subr.mxu0 0.0
    %1030 = vmatpush1.msra.mxu0 %v943
    %1031 = vmatprep.subr.mxu0 0.0
    %1032 = vmatpush2.msra.mxu0 0.0
    %1033 = vmatprep.subr.mxu0 0.0
    %1034 = vmatpush2.msra.mxu0 0.0
    %1035 = vmatprep.subr.mxu0 0.0
    %1036 = vmatpush2.msra.mxu0 0.0
    %1037 = vmatprep.subr.mxu0 0.0
    %1038 = vmatpush2.msra.mxu0 0.0
    %1039 = vmatprep.subr.mxu0 0.0
    %1040 = vmatpush2.msra.mxu0 0.0
    %1041 = vmatprep.subr.mxu0 0.0
    %1042 = vmatpush2.msra.mxu0 0.0
    %1043 = vmatprep.subr.mxu0 0.0
    %1044 = vmatpush2.msra.mxu0 0.0
    %1045 = vmatprep.subr.mxu0 0.0
    %1046 = vmatpush2.msra.mxu0 0.0
    %1047 = vmatprep.subr.mxu0 0.0
    %1048 = vmatpush2.msra.mxu0 0.0
    %1049 = vmatprep.subr.mxu0 0.0
    %1050 = vmatpush2.msra.mxu0 0.0
    %1051 = vmatprep.subr.mxu0 0.0
    %1052 = vmatpush2.msra.mxu0 0.0
    %1053 = vmatprep.subr.mxu0 0.0
    %1054 = vmatpush2.msra.mxu0 0.0
    %1055 = vmatprep.subr.mxu0 0.0
    %1056 = vmatpush2.msra.mxu0 0.0
    %1057 = vmatprep.subr.mxu0 0.0
    %1058 = vmatpush2.msra.mxu0 0.0
    %1059 = vmatprep.subr.mxu0 0.0
    %1060 = vmatpush2.msra.mxu0 0.0
    %1061 = vmatprep.subr.mxu0 0.0
    %1062 = vmatpush2.msra.mxu0 0.0
    %1063 = vmatprep.mubr.f32.mxu0 0.0
    %1064 = vmatmul.mubr.f32.gmra.mxu0 %v952
    %v1065 = vpop.f32.mrf.mxu0
    %v1066 = vadd.f32 0.0, %v1065
    %v1067 = vpop.f32.mrf.mxu0
    %1068 = vmatprep.mubr.f32.mxu0 0.0
    %1069 = vmatmul.mubr.f32.gmra.mxu0 %v955
    %v1070 = vpop.f32.mrf.mxu0
    %v1071 = vadd.f32 0.0, %v1070
    %v1072 = vpop.f32.mrf.mxu0
    %1073 = vmatprep.mubr.f32.mxu0 0.0
    %1074 = vmatmul.mubr.f32.gmra.mxu0 %v958
    %v1075 = vpop.f32.mrf.mxu0
    %v1076 = vadd.f32 0.0, %v1075
    %v1077 = vpop.f32.mrf.mxu0
    %1078 = vmatprep.mubr.f32.mxu0 0.0
    %1079 = vmatmul.mubr.f32.gmra.mxu0 %v961
    %v1080 = vpop.f32.mrf.mxu0
    %v1081 = vadd.f32 0.0, %v1080
    %v1082 = vpop.f32.mrf.mxu0
    %1083 = vmatprep.mubr.f32.mxu0 0.0
    %1084 = vmatmul.mubr.f32.gmra.mxu0 %v964
    %v1085 = vpop.f32.mrf.mxu0
    %v1086 = vadd.f32 0.0, %v1085
    %v1087 = vpop.f32.mrf.mxu0
    %1088 = vmatprep.mubr.f32.mxu0 0.0
    %1089 = vmatmul.mubr.f32.gmra.mxu0 %v967
    %v1090 = vpop.f32.mrf.mxu0
    %v1091 = vadd.f32 0.0, %v1090
    %v1092 = vpop.f32.mrf.mxu0
    %1093 = vmatprep.mubr.f32.mxu0 0.0
    %1094 = vmatmul.mubr.f32.gmra.mxu0 %v970
    %v1095 = vpop.f32.mrf.mxu0
    %v1096 = vadd.f32 0.0, %v1095
    %v1097 = vpop.f32.mrf.mxu0
    %1098 = vmatprep.mubr.f32.mxu0 0.0
    %1099 = vmatmul.mubr.f32.gmra.mxu0 %v973
    %v1100 = vpop.f32.mrf.mxu0
    %v1101 = vadd.f32 0.0, %v1100
    %v1102 = vpop.f32.mrf.mxu0
    %1103 = vmatprep.mubr.f32.mxu0 0.0
    %1104 = vmatmul.mubr.f32.gmra.mxu0 %v976
    %v1105 = vpop.f32.mrf.mxu0
    %v1106 = vadd.f32 0.0, %v1105
    %v1107 = vpop.f32.mrf.mxu0
    %1108 = vmatprep.mubr.f32.mxu0 0.0
    %1109 = vmatmul.mubr.f32.gmra.mxu0 %v979
    %v1110 = vpop.f32.mrf.mxu0
    %v1111 = vadd.f32 0.0, %v1110
    %v1112 = vpop.f32.mrf.mxu0
    %1113 = vmatprep.mubr.f32.mxu0 0.0
    %1114 = vmatmul.mubr.f32.gmra.mxu0 %v982
    %v1115 = vpop.f32.mrf.mxu0
    %v1116 = vadd.f32 0.0, %v1115
    %v1117 = vpop.f32.mrf.mxu0
    %1118 = vmatprep.mubr.f32.mxu0 0.0
    %1119 = vmatmul.mubr.f32.gmra.mxu0 %v985
    %v1120 = vpop.f32.mrf.mxu0
    %v1121 = vadd.f32 0.0, %v1120
    %v1122 = vpop.f32.mrf.mxu0
    %1123 = vmatprep.mubr.f32.mxu0 0.0
    %1124 = vmatmul.mubr.f32.gmra.mxu0 %v988
    %v1125 = vpop.f32.mrf.mxu0
    %v1126 = vadd.f32 0.0, %v1125
    %v1127 = vpop.f32.mrf.mxu0
    %1128 = vmatprep.mubr.f32.mxu0 0.0
    %1129 = vmatmul.mubr.f32.gmra.mxu0 %v991
    %v1130 = vpop.f32.mrf.mxu0
    %v1131 = vadd.f32 0.0, %v1130
    %v1132 = vpop.f32.mrf.mxu0
    %1133 = vmatprep.mubr.f32.mxu0 0.0
    %1134 = vmatmul.mubr.f32.gmra.mxu0 %v994
    %v1135 = vpop.f32.mrf.mxu0
    %v1136 = vadd.f32 0.0, %v1135
    %v1137 = vpop.f32.mrf.mxu0
    %1138 = vmatprep.mubr.f32.mxu0 0.0
    %1139 = vmatmul.mubr.f32.gmra.mxu0 %v997
    %v1140 = vpop.f32.mrf.mxu0
    %v1141 = vadd.f32 0.0, %v1140
    %v1142 = vpop.f32.mrf.mxu0
    %1143 = vdwg.mxu0
    %v1144 = vmul.f32 %v927, %v1066
    %v1145 = vmul.f32 %v928, %v1071
    %v1146 = vmul.f32 %v929, %v1076
    %v1147 = vmul.f32 %v930, %v1081
    %v1148 = vmul.f32 %v931, %v1086
    %v1149 = vmul.f32 %v932, %v1091
    %v1150 = vmul.f32 %v933, %v1096
    %v1151 = vmul.f32 %v934, %v1101
    %v1152 = vmul.f32 %v935, %v1106
    %v1153 = vmul.f32 %v936, %v1111
    %v1154 = vmul.f32 %v937, %v1116
    %v1155 = vmul.f32 %v938, %v1121
    %v1156 = vmul.f32 %v939, %v1126
    %v1157 = vmul.f32 %v940, %v1131
    %v1158 = vmul.f32 %v941, %v1136
    %v1159 = vmul.f32 %v942, %v1141
    %1176 = vrot.lane.b32.xlu0 %v1144, 96
    %v1177 = vpop.permute.xlu0 %1176
    %1178 = vrot.lane.b32.xlu0 %v1145, 96
    %v1179 = vpop.permute.xlu0 %1178
    %1180 = vrot.lane.b32.xlu0 %v1146, 96
    %v1181 = vpop.permute.xlu0 %1180
    %1182 = vrot.lane.b32.xlu0 %v1147, 96
    %v1183 = vpop.permute.xlu0 %1182
    %1184 = vrot.lane.b32.xlu0 %v1148, 96
    %v1185 = vpop.permute.xlu0 %1184
    %1186 = vrot.lane.b32.xlu0 %v1149, 96
    %v1187 = vpop.permute.xlu0 %1186
    %1188 = vrot.lane.b32.xlu0 %v1150, 96
    %v1189 = vpop.permute.xlu0 %1188
    %1190 = vrot.lane.b32.xlu0 %v1151, 96
    %v1191 = vpop.permute.xlu0 %1190
    %1192 = vrot.lane.b32.xlu0 %v1152, 96
    %v1193 = vpop.permute.xlu0 %1192
    %1194 = vrot.lane.b32.xlu0 %v1153, 96
    %v1195 = vpop.permute.xlu0 %1194
    %1196 = vrot.lane.b32.xlu0 %v1154, 96
    %v1197 = vpop.permute.xlu0 %1196
    %1198 = vrot.lane.b32.xlu0 %v1155, 96
    %v1199 = vpop.permute.xlu0 %1198
    %1200 = vrot.lane.b32.xlu0 %v1156, 96
    %v1201 = vpop.permute.xlu0 %1200
    %1202 = vrot.lane.b32.xlu0 %v1157, 96
    %v1203 = vpop.permute.xlu0 %1202
    %1204 = vrot.lane.b32.xlu0 %v1158, 96
    %v1205 = vpop.permute.xlu0 %1204
    %1206 = vrot.lane.b32.xlu0 %v1159, 96
    %v1207 = vpop.permute.xlu0 %1206
    %v1224 = vadd.f32 %v1144, %v1177
    %v1225 = vadd.f32 %v1145, %v1179
    %v1226 = vadd.f32 %v1146, %v1181
    %v1227 = vadd.f32 %v1147, %v1183
    %v1228 = vadd.f32 %v1148, %v1185
    %v1229 = vadd.f32 %v1149, %v1187
    %v1230 = vadd.f32 %v1150, %v1189
    %v1231 = vadd.f32 %v1151, %v1191
    %v1232 = vadd.f32 %v1152, %v1193
    %v1233 = vadd.f32 %v1153, %v1195
    %v1234 = vadd.f32 %v1154, %v1197
    %v1235 = vadd.f32 %v1155, %v1199
    %v1236 = vadd.f32 %v1156, %v1201
    %v1237 = vadd.f32 %v1157, %v1203
    %v1238 = vadd.f32 %v1158, %v1205
    %v1239 = vadd.f32 %v1159, %v1207
    %v1240 = vtanh.pop %v1224
    %v1241 = vtanh.pop %v1225
    %v1242 = vtanh.pop %v1226
    %v1243 = vtanh.pop %v1227
    %v1244 = vtanh.pop %v1228
    %v1245 = vtanh.pop %v1229
    %v1246 = vtanh.pop %v1230
    %v1247 = vtanh.pop %v1231
    %v1248 = vtanh.pop %v1232
    %v1249 = vtanh.pop %v1233
    %v1250 = vtanh.pop %v1234
    %v1251 = vtanh.pop %v1235
    %v1252 = vtanh.pop %v1236
    %v1253 = vtanh.pop %v1237
    %v1254 = vtanh.pop %v1238
    %v1255 = vtanh.pop %v1239
    %1272 = vrot.lane.b32.xlu0 %v527, 32
    %v1273 = vpop.permute.xlu0 %1272
    %1274 = vrot.lane.b32.xlu0 %v532, 32
    %v1275 = vpop.permute.xlu0 %1274
    %1276 = vrot.lane.b32.xlu0 %v537, 32
    %v1277 = vpop.permute.xlu0 %1276
    %1278 = vrot.lane.b32.xlu0 %v542, 32
    %v1279 = vpop.permute.xlu0 %1278
    %1280 = vrot.lane.b32.xlu0 %v547, 32
    %v1281 = vpop.permute.xlu0 %1280
    %1282 = vrot.lane.b32.xlu0 %v552, 32
    %v1283 = vpop.permute.xlu0 %1282
    %1284 = vrot.lane.b32.xlu0 %v557, 32
    %v1285 = vpop.permute.xlu0 %1284
    %1286 = vrot.lane.b32.xlu0 %v562, 32
    %v1287 = vpop.permute.xlu0 %1286
    %1288 = vrot.lane.b32.xlu0 %v567, 32
    %v1289 = vpop.permute.xlu0 %1288
    %1290 = vrot.lane.b32.xlu0 %v572, 32
    %v1291 = vpop.permute.xlu0 %1290
    %1292 = vrot.lane.b32.xlu0 %v577, 32
    %v1293 = vpop.permute.xlu0 %1292
    %1294 = vrot.lane.b32.xlu0 %v582, 32
    %v1295 = vpop.permute.xlu0 %1294
    %1296 = vrot.lane.b32.xlu0 %v587, 32
    %v1297 = vpop.permute.xlu0 %1296
    %1298 = vrot.lane.b32.xlu0 %v592, 32
    %v1299 = vpop.permute.xlu0 %1298
    %1300 = vrot.lane.b32.xlu0 %v597, 32
    %v1301 = vpop.permute.xlu0 %1300
    %1302 = vrot.lane.b32.xlu0 %v602, 32
    %v1303 = vpop.permute.xlu0 %1302
    %1336 = vrot.lane.b32.xlu0 %v1240, 64
    %v1337 = vpop.permute.xlu0 %1336
    %1338 = vrot.lane.b32.xlu0 %v1241, 64
    %v1339 = vpop.permute.xlu0 %1338
    %1340 = vrot.lane.b32.xlu0 %v1242, 64
    %v1341 = vpop.permute.xlu0 %1340
    %1342 = vrot.lane.b32.xlu0 %v1243, 64
    %v1343 = vpop.permute.xlu0 %1342
    %1344 = vrot.lane.b32.xlu0 %v1244, 64
    %v1345 = vpop.permute.xlu0 %1344
    %1346 = vrot.lane.b32.xlu0 %v1245, 64
    %v1347 = vpop.permute.xlu0 %1346
    %1348 = vrot.lane.b32.xlu0 %v1246, 64
    %v1349 = vpop.permute.xlu0 %1348
    %1350 = vrot.lane.b32.xlu0 %v1247, 64
    %v1351 = vpop.permute.xlu0 %1350
    %1352 = vrot.lane.b32.xlu0 %v1248, 64
    %v1353 = vpop.permute.xlu0 %1352
    %1354 = vrot.lane.b32.xlu0 %v1249, 64
    %v1355 = vpop.permute.xlu0 %1354
    %1356 = vrot.lane.b32.xlu0 %v1250, 64
    %v1357 = vpop.permute.xlu0 %1356
    %1358 = vrot.lane.b32.xlu0 %v1251, 64
    %v1359 = vpop.permute.xlu0 %1358
    %1360 = vrot.lane.b32.xlu0 %v1252, 64
    %v1361 = vpop.permute.xlu0 %1360
    %1362 = vrot.lane.b32.xlu0 %v1253, 64
    %v1363 = vpop.permute.xlu0 %1362
    %1364 = vrot.lane.b32.xlu0 %v1254, 64
    %v1365 = vpop.permute.xlu0 %1364
    %1366 = vrot.lane.b32.xlu0 %v1255, 64
    %v1367 = vpop.permute.xlu0 %1366
    %v1384 = vsel %vm926, %v188, %v1273
    %v1385 = vsel %vm926, %v193, %v1275
    %v1386 = vsel %vm926, %v198, %v1277
    %v1387 = vsel %vm926, %v203, %v1279
    %v1388 = vsel %vm926, %v208, %v1281
    %v1389 = vsel %vm926, %v213, %v1283
    %v1390 = vsel %vm926, %v218, %v1285
    %v1391 = vsel %vm926, %v223, %v1287
    %v1392 = vsel %vm926, %v228, %v1289
    %v1393 = vsel %vm926, %v233, %v1291
    %v1394 = vsel %vm926, %v238, %v1293
    %v1395 = vsel %vm926, %v243, %v1295
    %v1396 = vsel %vm926, %v248, %v1297
    %v1397 = vsel %vm926, %v253, %v1299
    %v1398 = vsel %vm926, %v258, %v1301
    %v1399 = vsel %vm926, %v263, %v1303
    %v1400 = vsel %vm411, %v1384, %v1337
    %v1401 = vsel %vm411, %v1385, %v1339
    %v1402 = vsel %vm411, %v1386, %v1341
    %v1403 = vsel %vm411, %v1387, %v1343
    %v1404 = vsel %vm411, %v1388, %v1345
    %v1405 = vsel %vm411, %v1389, %v1347
    %v1406 = vsel %vm411, %v1390, %v1349
    %v1407 = vsel %vm411, %v1391, %v1351
    %v1408 = vsel %vm411, %v1392, %v1353
    %v1409 = vsel %vm411, %v1393, %v1355
    %v1410 = vsel %vm411, %v1394, %v1357
    %v1411 = vsel %vm411, %v1395, %v1359
    %v1412 = vsel %vm411, %v1396, %v1361
    %v1413 = vsel %vm411, %v1397, %v1363
    %v1414 = vsel %vm411, %v1398, %v1365
    %v1415 = vsel %vm411, %v1399, %v1367
    %v1416 = vld [vmem:[%s8] sm:$0xff]
    %v1417 = vld [vmem:[%s8 + $0x8] sm:$0xff]
    %v1418 = vld [vmem:[%s8 + $0x10] sm:$0xff]
    %v1419 = vld [vmem:[%s8 + $0x18] sm:$0xff]
    %v1420 = vld [vmem:[%s8 + $0x20] sm:$0xff]
    %v1421 = vld [vmem:[%s8 + $0x28] sm:$0xff]
    %v1422 = vld [vmem:[%s8 + $0x30] sm:$0xff]
    %v1423 = vld [vmem:[%s8 + $0x38] sm:$0xff]
    %v1424 = vld [vmem:[%s8 + $0x40] sm:$0xff]
    %v1425 = vld [vmem:[%s8 + $0x48] sm:$0xff]
    %v1426 = vld [vmem:[%s8 + $0x50] sm:$0xff]
    %v1427 = vld [vmem:[%s8 + $0x58] sm:$0xff]
    %v1428 = vld [vmem:[%s9] sm:$0x1]
    %v1430 = vlaneseq
    %v1431 = vshrl.u32 %v1430, 7
    %v1432 = vsub.s32 0, %v1431
    %v1433 = vrot.slane %v1428, %v1432
    %vm1435 = vcmask 785408
    %v1437 = vsel %vm1435, %v1400, 0
    %v1440 = vsel %vm1435, %v1401, 0
    %v1443 = vsel %vm1435, %v1402, 0
    %v1446 = vsel %vm1435, %v1403, 0
    %v1449 = vsel %vm1435, %v1404, 0
    %v1452 = vsel %vm1435, %v1405, 0
    %v1455 = vsel %vm1435, %v1406, 0
    %v1458 = vsel %vm1435, %v1407, 0
    %v1461 = vsel %vm1435, %v1408, 0
    %v1464 = vsel %vm1435, %v1409, 0
    %v1467 = vsel %vm1435, %v1410, 0
    %v1470 = vsel %vm1435, %v1411, 0
    %v1473 = vsel %vm1435, %v1412, 0
    %v1476 = vsel %vm1435, %v1413, 0
    %v1479 = vsel %vm1435, %v1414, 0
    %v1482 = vsel %vm1435, %v1415, 0
    %1484 = vmatprep.subr.mxu0 0.0
    %1485 = vmatpush1.msra.mxu0 0.0
    %1486 = vmatprep.subr.mxu0 0.0
    %1487 = vmatpush1.msra.mxu0 0.0
    %1488 = vmatprep.subr.mxu0 0.0
    %1489 = vmatpush1.msra.mxu0 0.0
    %1490 = vmatprep.subr.mxu0 0.0
    %1491 = vmatpush1.msra.mxu0 0.0
    %1492 = vmatprep.subr.mxu0 0.0
    %1493 = vmatpush1.msra.mxu0 %v1427
    %1494 = vmatprep.subr.mxu0 0.0
    %1495 = vmatpush1.msra.mxu0 %v1426
    %1496 = vmatprep.subr.mxu0 0.0
    %1497 = vmatpush1.msra.mxu0 %v1425
    %1498 = vmatprep.subr.mxu0 0.0
    %1499 = vmatpush1.msra.mxu0 %v1424
    %1500 = vmatprep.subr.mxu0 0.0
    %1501 = vmatpush1.msra.mxu0 %v1423
    %1502 = vmatprep.subr.mxu0 0.0
    %1503 = vmatpush1.msra.mxu0 %v1422
    %1504 = vmatprep.subr.mxu0 0.0
    %1505 = vmatpush1.msra.mxu0 %v1421
    %1506 = vmatprep.subr.mxu0 0.0
    %1507 = vmatpush1.msra.mxu0 %v1420
    %1508 = vmatprep.subr.mxu0 0.0
    %1509 = vmatpush1.msra.mxu0 %v1419
    %1510 = vmatprep.subr.mxu0 0.0
    %1511 = vmatpush1.msra.mxu0 %v1418
    %1512 = vmatprep.subr.mxu0 0.0
    %1513 = vmatpush1.msra.mxu0 %v1417
    %1514 = vmatprep.subr.mxu0 0.0
    %1515 = vmatpush1.msra.mxu0 %v1416
    %1516 = vmatprep.subr.mxu0 0.0
    %1517 = vmatpush2.msra.mxu0 0.0
    %1518 = vmatprep.subr.mxu0 0.0
    %1519 = vmatpush2.msra.mxu0 0.0
    %1520 = vmatprep.subr.mxu0 0.0
    %1521 = vmatpush2.msra.mxu0 0.0
    %1522 = vmatprep.subr.mxu0 0.0
    %1523 = vmatpush2.msra.mxu0 0.0
    %1524 = vmatprep.subr.mxu0 0.0
    %1525 = vmatpush2.msra.mxu0 0.0
    %1526 = vmatprep.subr.mxu0 0.0
    %1527 = vmatpush2.msra.mxu0 0.0
    %1528 = vmatprep.subr.mxu0 0.0
    %1529 = vmatpush2.msra.mxu0 0.0
    %1530 = vmatprep.subr.mxu0 0.0
    %1531 = vmatpush2.msra.mxu0 0.0
    %1532 = vmatprep.subr.mxu0 0.0
    %1533 = vmatpush2.msra.mxu0 0.0
    %1534 = vmatprep.subr.mxu0 0.0
    %1535 = vmatpush2.msra.mxu0 0.0
    %1536 = vmatprep.subr.mxu0 0.0
    %1537 = vmatpush2.msra.mxu0 0.0
    %1538 = vmatprep.subr.mxu0 0.0
    %1539 = vmatpush2.msra.mxu0 0.0
    %1540 = vmatprep.subr.mxu0 0.0
    %1541 = vmatpush2.msra.mxu0 0.0
    %1542 = vmatprep.subr.mxu0 0.0
    %1543 = vmatpush2.msra.mxu0 0.0
    %1544 = vmatprep.subr.mxu0 0.0
    %1545 = vmatpush2.msra.mxu0 0.0
    %1546 = vmatprep.subr.mxu0 0.0
    %1547 = vmatpush2.msra.mxu0 0.0
    %1548 = vmatprep.mubr.f32.mxu0 0.0
    %1549 = vmatmul.mubr.f32.gmra.mxu0 %v1437
    %v1550 = vpop.f32.mrf.mxu0
    %v1551 = vadd.f32 %v1433, %v1550
    %v1552 = vpop.f32.mrf.mxu0
    %1553 = vmatprep.mubr.f32.mxu0 0.0
    %1554 = vmatmul.mubr.f32.gmra.mxu0 %v1440
    %v1555 = vpop.f32.mrf.mxu0
    %v1556 = vadd.f32 %v1433, %v1555
    %v1557 = vpop.f32.mrf.mxu0
    %1558 = vmatprep.mubr.f32.mxu0 0.0
    %1559 = vmatmul.mubr.f32.gmra.mxu0 %v1443
    %v1560 = vpop.f32.mrf.mxu0
    %v1561 = vadd.f32 %v1433, %v1560
    %v1562 = vpop.f32.mrf.mxu0
    %1563 = vmatprep.mubr.f32.mxu0 0.0
    %1564 = vmatmul.mubr.f32.gmra.mxu0 %v1446
    %v1565 = vpop.f32.mrf.mxu0
    %v1566 = vadd.f32 %v1433, %v1565
    %v1567 = vpop.f32.mrf.mxu0
    %1568 = vmatprep.mubr.f32.mxu0 0.0
    %1569 = vmatmul.mubr.f32.gmra.mxu0 %v1449
    %v1570 = vpop.f32.mrf.mxu0
    %v1571 = vadd.f32 %v1433, %v1570
    %v1572 = vpop.f32.mrf.mxu0
    %1573 = vmatprep.mubr.f32.mxu0 0.0
    %1574 = vmatmul.mubr.f32.gmra.mxu0 %v1452
    %v1575 = vpop.f32.mrf.mxu0
    %v1576 = vadd.f32 %v1433, %v1575
    %v1577 = vpop.f32.mrf.mxu0
    %1578 = vmatprep.mubr.f32.mxu0 0.0
    %1579 = vmatmul.mubr.f32.gmra.mxu0 %v1455
    %v1580 = vpop.f32.mrf.mxu0
    %v1581 = vadd.f32 %v1433, %v1580
    %v1582 = vpop.f32.mrf.mxu0
    %1583 = vmatprep.mubr.f32.mxu0 0.0
    %1584 = vmatmul.mubr.f32.gmra.mxu0 %v1458
    %v1585 = vpop.f32.mrf.mxu0
    %v1586 = vadd.f32 %v1433, %v1585
    %v1587 = vpop.f32.mrf.mxu0
    %1588 = vmatprep.mubr.f32.mxu0 0.0
    %1589 = vmatmul.mubr.f32.gmra.mxu0 %v1461
    %v1590 = vpop.f32.mrf.mxu0
    %v1591 = vadd.f32 %v1433, %v1590
    %v1592 = vpop.f32.mrf.mxu0
    %1593 = vmatprep.mubr.f32.mxu0 0.0
    %1594 = vmatmul.mubr.f32.gmra.mxu0 %v1464
    %v1595 = vpop.f32.mrf.mxu0
    %v1596 = vadd.f32 %v1433, %v1595
    %v1597 = vpop.f32.mrf.mxu0
    %1598 = vmatprep.mubr.f32.mxu0 0.0
    %1599 = vmatmul.mubr.f32.gmra.mxu0 %v1467
    %v1600 = vpop.f32.mrf.mxu0
    %v1601 = vadd.f32 %v1433, %v1600
    %v1602 = vpop.f32.mrf.mxu0
    %1603 = vmatprep.mubr.f32.mxu0 0.0
    %1604 = vmatmul.mubr.f32.gmra.mxu0 %v1470
    %v1605 = vpop.f32.mrf.mxu0
    %v1606 = vadd.f32 %v1433, %v1605
    %v1607 = vpop.f32.mrf.mxu0
    %1608 = vmatprep.mubr.f32.mxu0 0.0
    %1609 = vmatmul.mubr.f32.gmra.mxu0 %v1473
    %v1610 = vpop.f32.mrf.mxu0
    %v1611 = vadd.f32 %v1433, %v1610
    %v1612 = vpop.f32.mrf.mxu0
    %1613 = vmatprep.mubr.f32.mxu0 0.0
    %1614 = vmatmul.mubr.f32.gmra.mxu0 %v1476
    %v1615 = vpop.f32.mrf.mxu0
    %v1616 = vadd.f32 %v1433, %v1615
    %v1617 = vpop.f32.mrf.mxu0
    %1618 = vmatprep.mubr.f32.mxu0 0.0
    %1619 = vmatmul.mubr.f32.gmra.mxu0 %v1479
    %v1620 = vpop.f32.mrf.mxu0
    %v1621 = vadd.f32 %v1433, %v1620
    %v1622 = vpop.f32.mrf.mxu0
    %1623 = vmatprep.mubr.f32.mxu0 0.0
    %1624 = vmatmul.mubr.f32.gmra.mxu0 %v1482
    %v1625 = vpop.f32.mrf.mxu0
    %v1626 = vadd.f32 %v1433, %v1625
    %v1627 = vpop.f32.mrf.mxu0
    %1628 = vdwg.mxu0
    %v1629 = vmax.f32 %v1551, 0.0
    %v1630 = vmax.f32 %v1556, 0.0
    %v1631 = vmax.f32 %v1561, 0.0
    %v1632 = vmax.f32 %v1566, 0.0
    %v1633 = vmax.f32 %v1571, 0.0
    %v1634 = vmax.f32 %v1576, 0.0
    %v1635 = vmax.f32 %v1581, 0.0
    %v1636 = vmax.f32 %v1586, 0.0
    %v1637 = vmax.f32 %v1591, 0.0
    %v1638 = vmax.f32 %v1596, 0.0
    %v1639 = vmax.f32 %v1601, 0.0
    %v1640 = vmax.f32 %v1606, 0.0
    %v1641 = vmax.f32 %v1611, 0.0
    %v1642 = vmax.f32 %v1616, 0.0
    %v1643 = vmax.f32 %v1621, 0.0
    %v1644 = vmax.f32 %v1626, 0.0
    %v1645 = vld [vmem:[%s10] sm:$0xff]
    %v1646 = vld [vmem:[%s10 + $0x8] sm:$0xff]
    %v1647 = vld [vmem:[%s10 + $0x10] sm:$0xff]
    %v1648 = vld [vmem:[%s10 + $0x18] sm:$0xff]
    %v1649 = vld [vmem:[%s11] sm:$0x1]
    %v1651 = vlaneseq
    %v1652 = vshrl.u32 %v1651, 7
    %v1653 = vsub.s32 0, %v1652
    %v1654 = vrot.slane %v1649, %v1653
    %v1657 = vsel %vm926, %v1629, 0
    %v1660 = vsel %vm926, %v1630, 0
    %v1663 = vsel %vm926, %v1631, 0
    %v1666 = vsel %vm926, %v1632, 0
    %v1669 = vsel %vm926, %v1633, 0
    %v1672 = vsel %vm926, %v1634, 0
    %v1675 = vsel %vm926, %v1635, 0
    %v1678 = vsel %vm926, %v1636, 0
    %v1681 = vsel %vm926, %v1637, 0
    %v1684 = vsel %vm926, %v1638, 0
    %v1687 = vsel %vm926, %v1639, 0
    %v1690 = vsel %vm926, %v1640, 0
    %v1693 = vsel %vm926, %v1641, 0
    %v1696 = vsel %vm926, %v1642, 0
    %v1699 = vsel %vm926, %v1643, 0
    %v1702 = vsel %vm926, %v1644, 0
    %1704 = vmatprep.subr.mxu0 0.0
    %1705 = vmatpush1.msra.mxu0 0.0
    %1706 = vmatprep.subr.mxu0 0.0
    %1707 = vmatpush1.msra.mxu0 0.0
    %1708 = vmatprep.subr.mxu0 0.0
    %1709 = vmatpush1.msra.mxu0 0.0
    %1710 = vmatprep.subr.mxu0 0.0
    %1711 = vmatpush1.msra.mxu0 0.0
    %1712 = vmatprep.subr.mxu0 0.0
    %1713 = vmatpush1.msra.mxu0 0.0
    %1714 = vmatprep.subr.mxu0 0.0
    %1715 = vmatpush1.msra.mxu0 0.0
    %1716 = vmatprep.subr.mxu0 0.0
    %1717 = vmatpush1.msra.mxu0 0.0
    %1718 = vmatprep.subr.mxu0 0.0
    %1719 = vmatpush1.msra.mxu0 0.0
    %1720 = vmatprep.subr.mxu0 0.0
    %1721 = vmatpush1.msra.mxu0 0.0
    %1722 = vmatprep.subr.mxu0 0.0
    %1723 = vmatpush1.msra.mxu0 0.0
    %1724 = vmatprep.subr.mxu0 0.0
    %1725 = vmatpush1.msra.mxu0 0.0
    %1726 = vmatprep.subr.mxu0 0.0
    %1727 = vmatpush1.msra.mxu0 0.0
    %1728 = vmatprep.subr.mxu0 0.0
    %1729 = vmatpush1.msra.mxu0 %v1648
    %1730 = vmatprep.subr.mxu0 0.0
    %1731 = vmatpush1.msra.mxu0 %v1647
    %1732 = vmatprep.subr.mxu0 0.0
    %1733 = vmatpush1.msra.mxu0 %v1646
    %1734 = vmatprep.subr.mxu0 0.0
    %1735 = vmatpush1.msra.mxu0 %v1645
    %1736 = vmatprep.subr.mxu0 0.0
    %1737 = vmatpush2.msra.mxu0 0.0
    %1738 = vmatprep.subr.mxu0 0.0
    %1739 = vmatpush2.msra.mxu0 0.0
    %1740 = vmatprep.subr.mxu0 0.0
    %1741 = vmatpush2.msra.mxu0 0.0
    %1742 = vmatprep.subr.mxu0 0.0
    %1743 = vmatpush2.msra.mxu0 0.0
    %1744 = vmatprep.subr.mxu0 0.0
    %1745 = vmatpush2.msra.mxu0 0.0
    %1746 = vmatprep.subr.mxu0 0.0
    %1747 = vmatpush2.msra.mxu0 0.0
    %1748 = vmatprep.subr.mxu0 0.0
    %1749 = vmatpush2.msra.mxu0 0.0
    %1750 = vmatprep.subr.mxu0 0.0
    %1751 = vmatpush2.msra.mxu0 0.0
    %1752 = vmatprep.subr.mxu0 0.0
    %1753 = vmatpush2.msra.mxu0 0.0
    %1754 = vmatprep.subr.mxu0 0.0
    %1755 = vmatpush2.msra.mxu0 0.0
    %1756 = vmatprep.subr.mxu0 0.0
    %1757 = vmatpush2.msra.mxu0 0.0
    %1758 = vmatprep.subr.mxu0 0.0
    %1759 = vmatpush2.msra.mxu0 0.0
    %1760 = vmatprep.subr.mxu0 0.0
    %1761 = vmatpush2.msra.mxu0 0.0
    %1762 = vmatprep.subr.mxu0 0.0
    %1763 = vmatpush2.msra.mxu0 0.0
    %1764 = vmatprep.subr.mxu0 0.0
    %1765 = vmatpush2.msra.mxu0 0.0
    %1766 = vmatprep.subr.mxu0 0.0
    %1767 = vmatpush2.msra.mxu0 0.0
    %1768 = vmatprep.mubr.f32.mxu0 0.0
    %1769 = vmatmul.mubr.f32.gmra.mxu0 %v1657
    %v1770 = vpop.f32.mrf.mxu0
    %v1771 = vadd.f32 %v1654, %v1770
    %v1772 = vpop.f32.mrf.mxu0
    %1773 = vmatprep.mubr.f32.mxu0 0.0
    %1774 = vmatmul.mubr.f32.gmra.mxu0 %v1660
    %v1775 = vpop.f32.mrf.mxu0
    %v1776 = vadd.f32 %v1654, %v1775
    %v1777 = vpop.f32.mrf.mxu0
    %1778 = vmatprep.mubr.f32.mxu0 0.0
    %1779 = vmatmul.mubr.f32.gmra.mxu0 %v1663
    %v1780 = vpop.f32.mrf.mxu0
    %v1781 = vadd.f32 %v1654, %v1780
    %v1782 = vpop.f32.mrf.mxu0
    %1783 = vmatprep.mubr.f32.mxu0 0.0
    %1784 = vmatmul.mubr.f32.gmra.mxu0 %v1666
    %v1785 = vpop.f32.mrf.mxu0
    %v1786 = vadd.f32 %v1654, %v1785
    %v1787 = vpop.f32.mrf.mxu0
    %1788 = vmatprep.mubr.f32.mxu0 0.0
    %1789 = vmatmul.mubr.f32.gmra.mxu0 %v1669
    %v1790 = vpop.f32.mrf.mxu0
    %v1791 = vadd.f32 %v1654, %v1790
    %v1792 = vpop.f32.mrf.mxu0
    %1793 = vmatprep.mubr.f32.mxu0 0.0
    %1794 = vmatmul.mubr.f32.gmra.mxu0 %v1672
    %v1795 = vpop.f32.mrf.mxu0
    %v1796 = vadd.f32 %v1654, %v1795
    %v1797 = vpop.f32.mrf.mxu0
    %1798 = vmatprep.mubr.f32.mxu0 0.0
    %1799 = vmatmul.mubr.f32.gmra.mxu0 %v1675
    %v1800 = vpop.f32.mrf.mxu0
    %v1801 = vadd.f32 %v1654, %v1800
    %v1802 = vpop.f32.mrf.mxu0
    %1803 = vmatprep.mubr.f32.mxu0 0.0
    %1804 = vmatmul.mubr.f32.gmra.mxu0 %v1678
    %v1805 = vpop.f32.mrf.mxu0
    %v1806 = vadd.f32 %v1654, %v1805
    %v1807 = vpop.f32.mrf.mxu0
    %1808 = vmatprep.mubr.f32.mxu0 0.0
    %1809 = vmatmul.mubr.f32.gmra.mxu0 %v1681
    %v1810 = vpop.f32.mrf.mxu0
    %v1811 = vadd.f32 %v1654, %v1810
    %v1812 = vpop.f32.mrf.mxu0
    %1813 = vmatprep.mubr.f32.mxu0 0.0
    %1814 = vmatmul.mubr.f32.gmra.mxu0 %v1684
    %v1815 = vpop.f32.mrf.mxu0
    %v1816 = vadd.f32 %v1654, %v1815
    %v1817 = vpop.f32.mrf.mxu0
    %1818 = vmatprep.mubr.f32.mxu0 0.0
    %1819 = vmatmul.mubr.f32.gmra.mxu0 %v1687
    %v1820 = vpop.f32.mrf.mxu0
    %v1821 = vadd.f32 %v1654, %v1820
    %v1822 = vpop.f32.mrf.mxu0
    %1823 = vmatprep.mubr.f32.mxu0 0.0
    %1824 = vmatmul.mubr.f32.gmra.mxu0 %v1690
    %v1825 = vpop.f32.mrf.mxu0
    %v1826 = vadd.f32 %v1654, %v1825
    %v1827 = vpop.f32.mrf.mxu0
    %1828 = vmatprep.mubr.f32.mxu0 0.0
    %1829 = vmatmul.mubr.f32.gmra.mxu0 %v1693
    %v1830 = vpop.f32.mrf.mxu0
    %v1831 = vadd.f32 %v1654, %v1830
    %v1832 = vpop.f32.mrf.mxu0
    %1833 = vmatprep.mubr.f32.mxu0 0.0
    %1834 = vmatmul.mubr.f32.gmra.mxu0 %v1696
    %v1835 = vpop.f32.mrf.mxu0
    %v1836 = vadd.f32 %v1654, %v1835
    %v1837 = vpop.f32.mrf.mxu0
    %1838 = vmatprep.mubr.f32.mxu0 0.0
    %1839 = vmatmul.mubr.f32.gmra.mxu0 %v1699
    %v1840 = vpop.f32.mrf.mxu0
    %v1841 = vadd.f32 %v1654, %v1840
    %v1842 = vpop.f32.mrf.mxu0
    %1843 = vmatprep.mubr.f32.mxu0 0.0
    %1844 = vmatmul.mubr.f32.gmra.mxu0 %v1702
    %v1845 = vpop.f32.mrf.mxu0
    %v1846 = vadd.f32 %v1654, %v1845
    %v1847 = vpop.f32.mrf.mxu0
    %1848 = vdwg.mxu0
    %v1849 = vadd.f32 %v1771, %v188
    %v1850 = vadd.f32 %v1776, %v193
    %v1851 = vadd.f32 %v1781, %v198
    %v1852 = vadd.f32 %v1786, %v203
    %v1853 = vadd.f32 %v1791, %v208
    %v1854 = vadd.f32 %v1796, %v213
    %v1855 = vadd.f32 %v1801, %v218
    %v1856 = vadd.f32 %v1806, %v223
    %v1857 = vadd.f32 %v1811, %v228
    %v1858 = vadd.f32 %v1816, %v233
    %v1859 = vadd.f32 %v1821, %v238
    %v1860 = vadd.f32 %v1826, %v243
    %v1861 = vadd.f32 %v1831, %v248
    %v1862 = vadd.f32 %v1836, %v253
    %v1863 = vadd.f32 %v1841, %v258
    %v1864 = vadd.f32 %v1846, %v263
    %1865 = vmatprep.subr.mxu0 0.0
    %1866 = vmatpush1.msra.mxu0 %v1864
    %1867 = vmatprep.subr.mxu0 0.0
    %1868 = vmatpush1.msra.mxu0 %v1863
    %1869 = vmatprep.subr.mxu0 0.0
    %1870 = vmatpush1.msra.mxu0 %v1862
    %1871 = vmatprep.subr.mxu0 0.0
    %1872 = vmatpush1.msra.mxu0 %v1861
    %1873 = vmatprep.subr.mxu0 0.0
    %1874 = vmatpush1.msra.mxu0 %v1860
    %1875 = vmatprep.subr.mxu0 0.0
    %1876 = vmatpush1.msra.mxu0 %v1859
    %1877 = vmatprep.subr.mxu0 0.0
    %1878 = vmatpush1.msra.mxu0 %v1858
    %1879 = vmatprep.subr.mxu0 0.0
    %1880 = vmatpush1.msra.mxu0 %v1857
    %1881 = vmatprep.subr.mxu0 0.0
    %1882 = vmatpush1.msra.mxu0 %v1856
    %1883 = vmatprep.subr.mxu0 0.0
    %1884 = vmatpush1.msra.mxu0 %v1855
    %1885 = vmatprep.subr.mxu0 0.0
    %1886 = vmatpush1.msra.mxu0 %v1854
    %1887 = vmatprep.subr.mxu0 0.0
    %1888 = vmatpush1.msra.mxu0 %v1853
    %1889 = vmatprep.subr.mxu0 0.0
    %1890 = vmatpush1.msra.mxu0 %v1852
    %1891 = vmatprep.subr.mxu0 0.0
    %1892 = vmatpush1.msra.mxu0 %v1851
    %1893 = vmatprep.subr.mxu0 0.0
    %1894 = vmatpush1.msra.mxu0 %v1850
    %1895 = vmatprep.subr.mxu0 0.0
    %1896 = vmatpush1.msra.mxu0 %v1849
    %1897 = vmatprep.subr.mxu0 0.0
    %1898 = vmatpush2.msra.mxu0 0.0
    %1899 = vmatprep.subr.mxu0 0.0
    %1900 = vmatpush2.msra.mxu0 0.0
    %1901 = vmatprep.subr.mxu0 0.0
    %1902 = vmatpush2.msra.mxu0 0.0
    %1903 = vmatprep.subr.mxu0 0.0
    %1904 = vmatpush2.msra.mxu0 0.0
    %1905 = vmatprep.subr.mxu0 0.0
    %1906 = vmatpush2.msra.mxu0 0.0
    %1907 = vmatprep.subr.mxu0 0.0
    %1908 = vmatpush2.msra.mxu0 0.0
    %1909 = vmatprep.subr.mxu0 0.0
    %1910 = vmatpush2.msra.mxu0 0.0
    %1911 = vmatprep.subr.mxu0 0.0
    %1912 = vmatpush2.msra.mxu0 0.0
    %1913 = vmatprep.subr.mxu0 0.0
    %1914 = vmatpush2.msra.mxu0 0.0
    %1915 = vmatprep.subr.mxu0 0.0
    %1916 = vmatpush2.msra.mxu0 0.0
    %1917 = vmatprep.subr.mxu0 0.0
    %1918 = vmatpush2.msra.mxu0 0.0
    %1919 = vmatprep.subr.mxu0 0.0
    %1920 = vmatpush2.msra.mxu0 0.0
    %1921 = vmatprep.subr.mxu0 0.0
    %1922 = vmatpush2.msra.mxu0 0.0
    %1923 = vmatprep.subr.mxu0 0.0
    %1924 = vmatpush2.msra.mxu0 0.0
    %1925 = vmatprep.subr.mxu0 0.0
    %1926 = vmatpush2.msra.mxu0 0.0
    %1927 = vmatprep.subr.mxu0 0.0
    %1928 = vmatpush2.msra.mxu0 0.0
    %1929 = vmatprep.mubr.f32.mxu0 0.0
    %1930 = vmatmul.mubr.f32.gmra.mxu0 %v266
    %v1931 = vpop.f32.mrf.mxu0
    %v1932 = vadd.f32 0.0, %v1931
    %v1933 = vpop.f32.mrf.mxu0
    %1934 = vmatprep.mubr.f32.mxu0 0.0
    %1935 = vmatmul.mubr.f32.gmra.mxu0 %v267
    %v1936 = vpop.f32.mrf.mxu0
    %v1937 = vadd.f32 0.0, %v1936
    %v1938 = vpop.f32.mrf.mxu0
    %1939 = vmatprep.mubr.f32.mxu0 0.0
    %1940 = vmatmul.mubr.f32.gmra.mxu0 %v268
    %v1941 = vpop.f32.mrf.mxu0
    %v1942 = vadd.f32 0.0, %v1941
    %v1943 = vpop.f32.mrf.mxu0
    %1944 = vmatprep.mubr.f32.mxu0 0.0
    %1945 = vmatmul.mubr.f32.gmra.mxu0 %v269
    %v1946 = vpop.f32.mrf.mxu0
    %v1947 = vadd.f32 0.0, %v1946
    %v1948 = vpop.f32.mrf.mxu0
    %1949 = vmatprep.mubr.f32.mxu0 0.0
    %1950 = vmatmul.mubr.f32.gmra.mxu0 %v270
    %v1951 = vpop.f32.mrf.mxu0
    %v1952 = vadd.f32 0.0, %v1951
    %v1953 = vpop.f32.mrf.mxu0
    %1954 = vmatprep.mubr.f32.mxu0 0.0
    %1955 = vmatmul.mubr.f32.gmra.mxu0 %v271
    %v1956 = vpop.f32.mrf.mxu0
    %v1957 = vadd.f32 0.0, %v1956
    %v1958 = vpop.f32.mrf.mxu0
    %1959 = vmatprep.mubr.f32.mxu0 0.0
    %1960 = vmatmul.mubr.f32.gmra.mxu0 %v272
    %v1961 = vpop.f32.mrf.mxu0
    %v1962 = vadd.f32 0.0, %v1961
    %v1963 = vpop.f32.mrf.mxu0
    %1964 = vmatprep.mubr.f32.mxu0 0.0
    %1965 = vmatmul.mubr.f32.gmra.mxu0 %v273
    %v1966 = vpop.f32.mrf.mxu0
    %v1967 = vadd.f32 0.0, %v1966
    %v1968 = vpop.f32.mrf.mxu0
    %1969 = vdwg.mxu0
    %s1970 = scalar_lea.vmem %s4, 64
    %v1971 = vld [vmem:[%s1970] sm:$0xff]
    %v1972 = vld [vmem:[%s1970 + $0x8] sm:$0xff]
    %v1973 = vld [vmem:[%s1970 + $0x10] sm:$0xff]
    %v1974 = vld [vmem:[%s1970 + $0x18] sm:$0xff]
    %v1975 = vld [vmem:[%s1970 + $0x20] sm:$0xff]
    %v1976 = vld [vmem:[%s1970 + $0x28] sm:$0xff]
    %v1977 = vld [vmem:[%s1970 + $0x30] sm:$0xff]
    %v1978 = vld [vmem:[%s1970 + $0x38] sm:$0xff]
    %v1979 = vmul.f32 %v1971, %v1932
    %v1980 = vmul.f32 %v1972, %v1937
    %v1981 = vmul.f32 %v1973, %v1942
    %v1982 = vmul.f32 %v1974, %v1947
    %v1983 = vmul.f32 %v1975, %v1952
    %v1984 = vmul.f32 %v1976, %v1957
    %v1985 = vmul.f32 %v1977, %v1962
    %v1986 = vmul.f32 %v1978, %v1967
    %1987 = vmatprep.subr.mxu0 0.0
    %1988 = vmatpush1.msra.mxu0 0.0
    %1989 = vmatprep.subr.mxu0 0.0
    %1990 = vmatpush1.msra.mxu0 0.0
    %1991 = vmatprep.subr.mxu0 0.0
    %1992 = vmatpush1.msra.mxu0 0.0
    %1993 = vmatprep.subr.mxu0 0.0
    %1994 = vmatpush1.msra.mxu0 0.0
    %1995 = vmatprep.subr.mxu0 0.0
    %1996 = vmatpush1.msra.mxu0 0.0
    %1997 = vmatprep.subr.mxu0 0.0
    %1998 = vmatpush1.msra.mxu0 0.0
    %1999 = vmatprep.subr.mxu0 0.0
    %2000 = vmatpush1.msra.mxu0 0.0
    %2001 = vmatprep.subr.mxu0 0.0
    %2002 = vmatpush1.msra.mxu0 0.0
    %2003 = vmatprep.subr.mxu0 0.0
    %2004 = vmatpush1.msra.mxu0 %v1986
    %2005 = vmatprep.subr.mxu0 0.0
    %2006 = vmatpush1.msra.mxu0 %v1985
    %2007 = vmatprep.subr.mxu0 0.0
    %2008 = vmatpush1.msra.mxu0 %v1984
    %2009 = vmatprep.subr.mxu0 0.0
    %2010 = vmatpush1.msra.mxu0 %v1983
    %2011 = vmatprep.subr.mxu0 0.0
    %2012 = vmatpush1.msra.mxu0 %v1982
    %2013 = vmatprep.subr.mxu0 0.0
    %2014 = vmatpush1.msra.mxu0 %v1981
    %2015 = vmatprep.subr.mxu0 0.0
    %2016 = vmatpush1.msra.mxu0 %v1980
    %2017 = vmatprep.subr.mxu0 0.0
    %2018 = vmatpush1.msra.mxu0 %v1979
    %2019 = vmatprep.subr.mxu0 0.0
    %2020 = vmatpush2.msra.mxu0 0.0
    %2021 = vmatprep.subr.mxu0 0.0
    %2022 = vmatpush2.msra.mxu0 0.0
    %2023 = vmatprep.subr.mxu0 0.0
    %2024 = vmatpush2.msra.mxu0 0.0
    %2025 = vmatprep.subr.mxu0 0.0
    %2026 = vmatpush2.msra.mxu0 0.0
    %2027 = vmatprep.subr.mxu0 0.0
    %2028 = vmatpush2.msra.mxu0 0.0
    %2029 = vmatprep.subr.mxu0 0.0
    %2030 = vmatpush2.msra.mxu0 0.0
    %2031 = vmatprep.subr.mxu0 0.0
    %2032 = vmatpush2.msra.mxu0 0.0
    %2033 = vmatprep.subr.mxu0 0.0
    %2034 = vmatpush2.msra.mxu0 0.0
    %2035 = vmatprep.subr.mxu0 0.0
    %2036 = vmatpush2.msra.mxu0 0.0
    %2037 = vmatprep.subr.mxu0 0.0
    %2038 = vmatpush2.msra.mxu0 0.0
    %2039 = vmatprep.subr.mxu0 0.0
    %2040 = vmatpush2.msra.mxu0 0.0
    %2041 = vmatprep.subr.mxu0 0.0
    %2042 = vmatpush2.msra.mxu0 0.0
    %2043 = vmatprep.subr.mxu0 0.0
    %2044 = vmatpush2.msra.mxu0 0.0
    %2045 = vmatprep.subr.mxu0 0.0
    %2046 = vmatpush2.msra.mxu0 0.0
    %2047 = vmatprep.subr.mxu0 0.0
    %2048 = vmatpush2.msra.mxu0 0.0
    %2049 = vmatprep.subr.mxu0 0.0
    %2050 = vmatpush2.msra.mxu0 0.0
    %2051 = vmatprep.mubr.f32.mxu0 0.0
    %2052 = vmatmul.mubr.f32.gmra.mxu0 %v413
    %v2053 = vpop.f32.mrf.mxu0
    %v2054 = vadd.f32 0.0, %v2053
    %v2055 = vpop.f32.mrf.mxu0
    %2056 = vmatprep.mubr.f32.mxu0 0.0
    %2057 = vmatmul.mubr.f32.gmra.mxu0 %v416
    %v2058 = vpop.f32.mrf.mxu0
    %v2059 = vadd.f32 0.0, %v2058
    %v2060 = vpop.f32.mrf.mxu0
    %2061 = vmatprep.mubr.f32.mxu0 0.0
    %2062 = vmatmul.mubr.f32.gmra.mxu0 %v419
    %v2063 = vpop.f32.mrf.mxu0
    %v2064 = vadd.f32 0.0, %v2063
    %v2065 = vpop.f32.mrf.mxu0
    %2066 = vmatprep.mubr.f32.mxu0 0.0
    %2067 = vmatmul.mubr.f32.gmra.mxu0 %v422
    %v2068 = vpop.f32.mrf.mxu0
    %v2069 = vadd.f32 0.0, %v2068
    %v2070 = vpop.f32.mrf.mxu0
    %2071 = vmatprep.mubr.f32.mxu0 0.0
    %2072 = vmatmul.mubr.f32.gmra.mxu0 %v425
    %v2073 = vpop.f32.mrf.mxu0
    %v2074 = vadd.f32 0.0, %v2073
    %v2075 = vpop.f32.mrf.mxu0
    %2076 = vmatprep.mubr.f32.mxu0 0.0
    %2077 = vmatmul.mubr.f32.gmra.mxu0 %v428
    %v2078 = vpop.f32.mrf.mxu0
    %v2079 = vadd.f32 0.0, %v2078
    %v2080 = vpop.f32.mrf.mxu0
    %2081 = vmatprep.mubr.f32.mxu0 0.0
    %2082 = vmatmul.mubr.f32.gmra.mxu0 %v431
    %v2083 = vpop.f32.mrf.mxu0
    %v2084 = vadd.f32 0.0, %v2083
    %v2085 = vpop.f32.mrf.mxu0
    %2086 = vmatprep.mubr.f32.mxu0 0.0
    %2087 = vmatmul.mubr.f32.gmra.mxu0 %v434
    %v2088 = vpop.f32.mrf.mxu0
    %v2089 = vadd.f32 0.0, %v2088
    %v2090 = vpop.f32.mrf.mxu0
    %2091 = vmatprep.mubr.f32.mxu0 0.0
    %2092 = vmatmul.mubr.f32.gmra.mxu0 %v437
    %v2093 = vpop.f32.mrf.mxu0
    %v2094 = vadd.f32 0.0, %v2093
    %v2095 = vpop.f32.mrf.mxu0
    %2096 = vmatprep.mubr.f32.mxu0 0.0
    %2097 = vmatmul.mubr.f32.gmra.mxu0 %v440
    %v2098 = vpop.f32.mrf.mxu0
    %v2099 = vadd.f32 0.0, %v2098
    %v2100 = vpop.f32.mrf.mxu0
    %2101 = vmatprep.mubr.f32.mxu0 0.0
    %2102 = vmatmul.mubr.f32.gmra.mxu0 %v443
    %v2103 = vpop.f32.mrf.mxu0
    %v2104 = vadd.f32 0.0, %v2103
    %v2105 = vpop.f32.mrf.mxu0
    %2106 = vmatprep.mubr.f32.mxu0 0.0
    %2107 = vmatmul.mubr.f32.gmra.mxu0 %v446
    %v2108 = vpop.f32.mrf.mxu0
    %v2109 = vadd.f32 0.0, %v2108
    %v2110 = vpop.f32.mrf.mxu0
    %2111 = vmatprep.mubr.f32.mxu0 0.0
    %2112 = vmatmul.mubr.f32.gmra.mxu0 %v449
    %v2113 = vpop.f32.mrf.mxu0
    %v2114 = vadd.f32 0.0, %v2113
    %v2115 = vpop.f32.mrf.mxu0
    %2116 = vmatprep.mubr.f32.mxu0 0.0
    %2117 = vmatmul.mubr.f32.gmra.mxu0 %v452
    %v2118 = vpop.f32.mrf.mxu0
    %v2119 = vadd.f32 0.0, %v2118
    %v2120 = vpop.f32.mrf.mxu0
    %2121 = vmatprep.mubr.f32.mxu0 0.0
    %2122 = vmatmul.mubr.f32.gmra.mxu0 %v455
    %v2123 = vpop.f32.mrf.mxu0
    %v2124 = vadd.f32 0.0, %v2123
    %v2125 = vpop.f32.mrf.mxu0
    %2126 = vmatprep.mubr.f32.mxu0 0.0
    %2127 = vmatmul.mubr.f32.gmra.mxu0 %v458
    %v2128 = vpop.f32.mrf.mxu0
    %v2129 = vadd.f32 0.0, %v2128
    %v2130 = vpop.f32.mrf.mxu0
    %2131 = vdwg.mxu0
    %2132 = vmatprep.subr.mxu0 0.0
    %2133 = vmatpush1.msra.mxu0 %v2129
    %2134 = vmatprep.subr.mxu0 0.0
    %2135 = vmatpush1.msra.mxu0 %v2124
    %2136 = vmatprep.subr.mxu0 0.0
    %2137 = vmatpush1.msra.mxu0 %v2119
    %2138 = vmatprep.subr.mxu0 0.0
    %2139 = vmatpush1.msra.mxu0 %v2114
    %2140 = vmatprep.subr.mxu0 0.0
    %2141 = vmatpush1.msra.mxu0 %v2109
    %2142 = vmatprep.subr.mxu0 0.0
    %2143 = vmatpush1.msra.mxu0 %v2104
    %2144 = vmatprep.subr.mxu0 0.0
    %2145 = vmatpush1.msra.mxu0 %v2099
    %2146 = vmatprep.subr.mxu0 0.0
    %2147 = vmatpush1.msra.mxu0 %v2094
    %2148 = vmatprep.subr.mxu0 0.0
    %2149 = vmatpush1.msra.mxu0 %v2089
    %2150 = vmatprep.subr.mxu0 0.0
    %2151 = vmatpush1.msra.mxu0 %v2084
    %2152 = vmatprep.subr.mxu0 0.0
    %2153 = vmatpush1.msra.mxu0 %v2079
    %2154 = vmatprep.subr.mxu0 0.0
    %2155 = vmatpush1.msra.mxu0 %v2074
    %2156 = vmatprep.subr.mxu0 0.0
    %2157 = vmatpush1.msra.mxu0 %v2069
    %2158 = vmatprep.subr.mxu0 0.0
    %2159 = vmatpush1.msra.mxu0 %v2064
    %2160 = vmatprep.subr.mxu0 0.0
    %2161 = vmatpush1.msra.mxu0 %v2059
    %2162 = vmatprep.subr.mxu0 0.0
    %2163 = vmatpush1.msra.mxu0 %v2054
    %2164 = vmatprep.subr.mxu0 0.0
    %2165 = vmatpush2.msra.mxu0 0.0
    %2166 = vmatprep.subr.mxu0 0.0
    %2167 = vmatpush2.msra.mxu0 0.0
    %2168 = vmatprep.subr.mxu0 0.0
    %2169 = vmatpush2.msra.mxu0 0.0
    %2170 = vmatprep.subr.mxu0 0.0
    %2171 = vmatpush2.msra.mxu0 0.0
    %2172 = vmatprep.subr.mxu0 0.0
    %2173 = vmatpush2.msra.mxu0 0.0
    %2174 = vmatprep.subr.mxu0 0.0
    %2175 = vmatpush2.msra.mxu0 0.0
    %2176 = vmatprep.subr.mxu0 0.0
    %2177 = vmatpush2.msra.mxu0 0.0
    %2178 = vmatprep.subr.mxu0 0.0
    %2179 = vmatpush2.msra.mxu0 0.0
    %2180 = vmatprep.subr.mxu0 0.0
    %2181 = vmatpush2.msra.mxu0 0.0
    %2182 = vmatprep.subr.mxu0 0.0
    %2183 = vmatpush2.msra.mxu0 0.0
    %2184 = vmatprep.subr.mxu0 0.0
    %2185 = vmatpush2.msra.mxu0 0.0
    %2186 = vmatprep.subr.mxu0 0.0
    %2187 = vmatpush2.msra.mxu0 0.0
    %2188 = vmatprep.subr.mxu0 0.0
    %2189 = vmatpush2.msra.mxu0 0.0
    %2190 = vmatprep.subr.mxu0 0.0
    %2191 = vmatpush2.msra.mxu0 0.0
    %2192 = vmatprep.subr.mxu0 0.0
    %2193 = vmatpush2.msra.mxu0 0.0
    %2194 = vmatprep.subr.mxu0 0.0
    %2195 = vmatpush2.msra.mxu0 0.0
    %2196 = vmatprep.mubr.f32.mxu0 0.0
    %2197 = vmatmul.mubr.f32.gmra.mxu0 %v605
    %v2198 = vpop.f32.mrf.mxu0
    %v2199 = vadd.f32 0.0, %v2198
    %v2200 = vpop.f32.mrf.mxu0
    %2201 = vmatprep.mubr.f32.mxu0 0.0
    %2202 = vmatmul.mubr.f32.gmra.mxu0 %v606
    %v2203 = vpop.f32.mrf.mxu0
    %v2204 = vadd.f32 0.0, %v2203
    %v2205 = vpop.f32.mrf.mxu0
    %2206 = vmatprep.mubr.f32.mxu0 0.0
    %2207 = vmatmul.mubr.f32.gmra.mxu0 %v607
    %v2208 = vpop.f32.mrf.mxu0
    %v2209 = vadd.f32 0.0, %v2208
    %v2210 = vpop.f32.mrf.mxu0
    %2211 = vmatprep.mubr.f32.mxu0 0.0
    %2212 = vmatmul.mubr.f32.gmra.mxu0 %v608
    %v2213 = vpop.f32.mrf.mxu0
    %v2214 = vadd.f32 0.0, %v2213
    %v2215 = vpop.f32.mrf.mxu0
    %2216 = vmatprep.mubr.f32.mxu0 0.0
    %2217 = vmatmul.mubr.f32.gmra.mxu0 %v609
    %v2218 = vpop.f32.mrf.mxu0
    %v2219 = vadd.f32 0.0, %v2218
    %v2220 = vpop.f32.mrf.mxu0
    %2221 = vmatprep.mubr.f32.mxu0 0.0
    %2222 = vmatmul.mubr.f32.gmra.mxu0 %v610
    %v2223 = vpop.f32.mrf.mxu0
    %v2224 = vadd.f32 0.0, %v2223
    %v2225 = vpop.f32.mrf.mxu0
    %2226 = vmatprep.mubr.f32.mxu0 0.0
    %2227 = vmatmul.mubr.f32.gmra.mxu0 %v611
    %v2228 = vpop.f32.mrf.mxu0
    %v2229 = vadd.f32 0.0, %v2228
    %v2230 = vpop.f32.mrf.mxu0
    %2231 = vmatprep.mubr.f32.mxu0 0.0
    %2232 = vmatmul.mubr.f32.gmra.mxu0 %v612
    %v2233 = vpop.f32.mrf.mxu0
    %v2234 = vadd.f32 0.0, %v2233
    %v2235 = vpop.f32.mrf.mxu0
    %2236 = vmatprep.mubr.f32.mxu0 0.0
    %2237 = vmatmul.mubr.f32.gmra.mxu0 %v613
    %v2238 = vpop.f32.mrf.mxu0
    %v2239 = vadd.f32 0.0, %v2238
    %v2240 = vpop.f32.mrf.mxu0
    %2241 = vmatprep.mubr.f32.mxu0 0.0
    %2242 = vmatmul.mubr.f32.gmra.mxu0 %v614
    %v2243 = vpop.f32.mrf.mxu0
    %v2244 = vadd.f32 0.0, %v2243
    %v2245 = vpop.f32.mrf.mxu0
    %2246 = vmatprep.mubr.f32.mxu0 0.0
    %2247 = vmatmul.mubr.f32.gmra.mxu0 %v615
    %v2248 = vpop.f32.mrf.mxu0
    %v2249 = vadd.f32 0.0, %v2248
    %v2250 = vpop.f32.mrf.mxu0
    %2251 = vmatprep.mubr.f32.mxu0 0.0
    %2252 = vmatmul.mubr.f32.gmra.mxu0 %v616
    %v2253 = vpop.f32.mrf.mxu0
    %v2254 = vadd.f32 0.0, %v2253
    %v2255 = vpop.f32.mrf.mxu0
    %2256 = vmatprep.mubr.f32.mxu0 0.0
    %2257 = vmatmul.mubr.f32.gmra.mxu0 %v617
    %v2258 = vpop.f32.mrf.mxu0
    %v2259 = vadd.f32 0.0, %v2258
    %v2260 = vpop.f32.mrf.mxu0
    %2261 = vmatprep.mubr.f32.mxu0 0.0
    %2262 = vmatmul.mubr.f32.gmra.mxu0 %v618
    %v2263 = vpop.f32.mrf.mxu0
    %v2264 = vadd.f32 0.0, %v2263
    %v2265 = vpop.f32.mrf.mxu0
    %2266 = vmatprep.mubr.f32.mxu0 0.0
    %2267 = vmatmul.mubr.f32.gmra.mxu0 %v619
    %v2268 = vpop.f32.mrf.mxu0
    %v2269 = vadd.f32 0.0, %v2268
    %v2270 = vpop.f32.mrf.mxu0
    %2271 = vmatprep.mubr.f32.mxu0 0.0
    %2272 = vmatmul.mubr.f32.gmra.mxu0 %v620
    %v2273 = vpop.f32.mrf.mxu0
    %v2274 = vadd.f32 0.0, %v2273
    %v2275 = vpop.f32.mrf.mxu0
    %2276 = vmatprep.mubr.f32.mxu0 0.0
    %2277 = vmatmul.mubr.f32.gmra.mxu0 %v621
    %v2278 = vpop.f32.mrf.mxu0
    %v2279 = vadd.f32 0.0, %v2278
    %v2280 = vpop.f32.mrf.mxu0
    %2281 = vmatprep.mubr.f32.mxu0 0.0
    %2282 = vmatmul.mubr.f32.gmra.mxu0 %v622
    %v2283 = vpop.f32.mrf.mxu0
    %v2284 = vadd.f32 0.0, %v2283
    %v2285 = vpop.f32.mrf.mxu0
    %2286 = vmatprep.mubr.f32.mxu0 0.0
    %2287 = vmatmul.mubr.f32.gmra.mxu0 %v623
    %v2288 = vpop.f32.mrf.mxu0
    %v2289 = vadd.f32 0.0, %v2288
    %v2290 = vpop.f32.mrf.mxu0
    %2291 = vmatprep.mubr.f32.mxu0 0.0
    %2292 = vmatmul.mubr.f32.gmra.mxu0 %v624
    %v2293 = vpop.f32.mrf.mxu0
    %v2294 = vadd.f32 0.0, %v2293
    %v2295 = vpop.f32.mrf.mxu0
    %2296 = vmatprep.mubr.f32.mxu0 0.0
    %2297 = vmatmul.mubr.f32.gmra.mxu0 %v625
    %v2298 = vpop.f32.mrf.mxu0
    %v2299 = vadd.f32 0.0, %v2298
    %v2300 = vpop.f32.mrf.mxu0
    %2301 = vmatprep.mubr.f32.mxu0 0.0
    %2302 = vmatmul.mubr.f32.gmra.mxu0 %v626
    %v2303 = vpop.f32.mrf.mxu0
    %v2304 = vadd.f32 0.0, %v2303
    %v2305 = vpop.f32.mrf.mxu0
    %2306 = vmatprep.mubr.f32.mxu0 0.0
    %2307 = vmatmul.mubr.f32.gmra.mxu0 %v627
    %v2308 = vpop.f32.mrf.mxu0
    %v2309 = vadd.f32 0.0, %v2308
    %v2310 = vpop.f32.mrf.mxu0
    %2311 = vmatprep.mubr.f32.mxu0 0.0
    %2312 = vmatmul.mubr.f32.gmra.mxu0 %v628
    %v2313 = vpop.f32.mrf.mxu0
    %v2314 = vadd.f32 0.0, %v2313
    %v2315 = vpop.f32.mrf.mxu0
    %2316 = vmatprep.mubr.f32.mxu0 0.0
    %2317 = vmatmul.mubr.f32.gmra.mxu0 %v629
    %v2318 = vpop.f32.mrf.mxu0
    %v2319 = vadd.f32 0.0, %v2318
    %v2320 = vpop.f32.mrf.mxu0
    %2321 = vmatprep.mubr.f32.mxu0 0.0
    %2322 = vmatmul.mubr.f32.gmra.mxu0 %v630
    %v2323 = vpop.f32.mrf.mxu0
    %v2324 = vadd.f32 0.0, %v2323
    %v2325 = vpop.f32.mrf.mxu0
    %2326 = vmatprep.mubr.f32.mxu0 0.0
    %2327 = vmatmul.mubr.f32.gmra.mxu0 %v631
    %v2328 = vpop.f32.mrf.mxu0
    %v2329 = vadd.f32 0.0, %v2328
    %v2330 = vpop.f32.mrf.mxu0
    %2331 = vmatprep.mubr.f32.mxu0 0.0
    %2332 = vmatmul.mubr.f32.gmra.mxu0 %v632
    %v2333 = vpop.f32.mrf.mxu0
    %v2334 = vadd.f32 0.0, %v2333
    %v2335 = vpop.f32.mrf.mxu0
    %2336 = vmatprep.mubr.f32.mxu0 0.0
    %2337 = vmatmul.mubr.f32.gmra.mxu0 %v633
    %v2338 = vpop.f32.mrf.mxu0
    %v2339 = vadd.f32 0.0, %v2338
    %v2340 = vpop.f32.mrf.mxu0
    %2341 = vmatprep.mubr.f32.mxu0 0.0
    %2342 = vmatmul.mubr.f32.gmra.mxu0 %v634
    %v2343 = vpop.f32.mrf.mxu0
    %v2344 = vadd.f32 0.0, %v2343
    %v2345 = vpop.f32.mrf.mxu0
    %2346 = vmatprep.mubr.f32.mxu0 0.0
    %2347 = vmatmul.mubr.f32.gmra.mxu0 %v635
    %v2348 = vpop.f32.mrf.mxu0
    %v2349 = vadd.f32 0.0, %v2348
    %v2350 = vpop.f32.mrf.mxu0
    %2351 = vmatprep.mubr.f32.mxu0 0.0
    %2352 = vmatmul.mubr.f32.gmra.mxu0 %v636
    %v2353 = vpop.f32.mrf.mxu0
    %v2354 = vadd.f32 0.0, %v2353
    %v2355 = vpop.f32.mrf.mxu0
    %2356 = vdwg.mxu0
    %2373 = vrot.lane.b32.xlu0 %v2279, 32
    %v2374 = vpop.permute.xlu0 %2373
    %2375 = vrot.lane.b32.xlu0 %v2284, 32
    %v2376 = vpop.permute.xlu0 %2375
    %2377 = vrot.lane.b32.xlu0 %v2289, 32
    %v2378 = vpop.permute.xlu0 %2377
    %2379 = vrot.lane.b32.xlu0 %v2294, 32
    %v2380 = vpop.permute.xlu0 %2379
    %2381 = vrot.lane.b32.xlu0 %v2299, 32
    %v2382 = vpop.permute.xlu0 %2381
    %2383 = vrot.lane.b32.xlu0 %v2304, 32
    %v2384 = vpop.permute.xlu0 %2383
    %2385 = vrot.lane.b32.xlu0 %v2309, 32
    %v2386 = vpop.permute.xlu0 %2385
    %2387 = vrot.lane.b32.xlu0 %v2314, 32
    %v2388 = vpop.permute.xlu0 %2387
    %2389 = vrot.lane.b32.xlu0 %v2319, 32
    %v2390 = vpop.permute.xlu0 %2389
    %2391 = vrot.lane.b32.xlu0 %v2324, 32
    %v2392 = vpop.permute.xlu0 %2391
    %2393 = vrot.lane.b32.xlu0 %v2329, 32
    %v2394 = vpop.permute.xlu0 %2393
    %2395 = vrot.lane.b32.xlu0 %v2334, 32
    %v2396 = vpop.permute.xlu0 %2395
    %2397 = vrot.lane.b32.xlu0 %v2339, 32
    %v2398 = vpop.permute.xlu0 %2397
    %2399 = vrot.lane.b32.xlu0 %v2344, 32
    %v2400 = vpop.permute.xlu0 %2399
    %2401 = vrot.lane.b32.xlu0 %v2349, 32
    %v2402 = vpop.permute.xlu0 %2401
    %2403 = vrot.lane.b32.xlu0 %v2354, 32
    %v2404 = vpop.permute.xlu0 %2403
    %v2421 = vsel %vm926, %v2199, %v2374
    %v2422 = vsel %vm926, %v2204, %v2376
    %v2423 = vsel %vm926, %v2209, %v2378
    %v2424 = vsel %vm926, %v2214, %v2380
    %v2425 = vsel %vm926, %v2219, %v2382
    %v2426 = vsel %vm926, %v2224, %v2384
    %v2427 = vsel %vm926, %v2229, %v2386
    %v2428 = vsel %vm926, %v2234, %v2388
    %v2429 = vsel %vm926, %v2239, %v2390
    %v2430 = vsel %vm926, %v2244, %v2392
    %v2431 = vsel %vm926, %v2249, %v2394
    %v2432 = vsel %vm926, %v2254, %v2396
    %v2433 = vsel %vm926, %v2259, %v2398
    %v2434 = vsel %vm926, %v2264, %v2400
    %v2435 = vsel %vm926, %v2269, %v2402
    %v2436 = vsel %vm926, %v2274, %v2404
    %s2437 = scalar_lea.vmem %s5, 64
    %v2438 = vld [vmem:[%s2437] sm:$0xff]
    %v2439 = vld [vmem:[%s2437 + $0x8] sm:$0xff]
    %v2440 = vld [vmem:[%s2437 + $0x10] sm:$0xff]
    %v2441 = vld [vmem:[%s2437 + $0x18] sm:$0xff]
    %v2442 = vld [vmem:[%s2437 + $0x20] sm:$0xff]
    %v2443 = vld [vmem:[%s2437 + $0x28] sm:$0xff]
    %v2444 = vld [vmem:[%s2437 + $0x30] sm:$0xff]
    %v2445 = vld [vmem:[%s2437 + $0x38] sm:$0xff]
    %v2447 = vsel %vm411, %v2421, 0
    %v2450 = vsel %vm411, %v2422, 0
    %v2453 = vsel %vm411, %v2423, 0
    %v2456 = vsel %vm411, %v2424, 0
    %v2459 = vsel %vm411, %v2425, 0
    %v2462 = vsel %vm411, %v2426, 0
    %v2465 = vsel %vm411, %v2427, 0
    %v2468 = vsel %vm411, %v2428, 0
    %v2471 = vsel %vm411, %v2429, 0
    %v2474 = vsel %vm411, %v2430, 0
    %v2477 = vsel %vm411, %v2431, 0
    %v2480 = vsel %vm411, %v2432, 0
    %v2483 = vsel %vm411, %v2433, 0
    %v2486 = vsel %vm411, %v2434, 0
    %v2489 = vsel %vm411, %v2435, 0
    %v2492 = vsel %vm411, %v2436, 0
    %2494 = vmatprep.subr.mxu0 0.0
    %2495 = vmatpush1.msra.mxu0 0.0
    %2496 = vmatprep.subr.mxu0 0.0
    %2497 = vmatpush1.msra.mxu0 0.0
    %2498 = vmatprep.subr.mxu0 0.0
    %2499 = vmatpush1.msra.mxu0 0.0
    %2500 = vmatprep.subr.mxu0 0.0
    %2501 = vmatpush1.msra.mxu0 0.0
    %2502 = vmatprep.subr.mxu0 0.0
    %2503 = vmatpush1.msra.mxu0 0.0
    %2504 = vmatprep.subr.mxu0 0.0
    %2505 = vmatpush1.msra.mxu0 0.0
    %2506 = vmatprep.subr.mxu0 0.0
    %2507 = vmatpush1.msra.mxu0 0.0
    %2508 = vmatprep.subr.mxu0 0.0
    %2509 = vmatpush1.msra.mxu0 0.0
    %2510 = vmatprep.subr.mxu0 0.0
    %2511 = vmatpush1.msra.mxu0 %v2445
    %2512 = vmatprep.subr.mxu0 0.0
    %2513 = vmatpush1.msra.mxu0 %v2444
    %2514 = vmatprep.subr.mxu0 0.0
    %2515 = vmatpush1.msra.mxu0 %v2443
    %2516 = vmatprep.subr.mxu0 0.0
    %2517 = vmatpush1.msra.mxu0 %v2442
    %2518 = vmatprep.subr.mxu0 0.0
    %2519 = vmatpush1.msra.mxu0 %v2441
    %2520 = vmatprep.subr.mxu0 0.0
    %2521 = vmatpush1.msra.mxu0 %v2440
    %2522 = vmatprep.subr.mxu0 0.0
    %2523 = vmatpush1.msra.mxu0 %v2439
    %2524 = vmatprep.subr.mxu0 0.0
    %2525 = vmatpush1.msra.mxu0 %v2438
    %2526 = vmatprep.subr.mxu0 0.0
    %2527 = vmatpush2.msra.mxu0 0.0
    %2528 = vmatprep.subr.mxu0 0.0
    %2529 = vmatpush2.msra.mxu0 0.0
    %2530 = vmatprep.subr.mxu0 0.0
    %2531 = vmatpush2.msra.mxu0 0.0
    %2532 = vmatprep.subr.mxu0 0.0
    %2533 = vmatpush2.msra.mxu0 0.0
    %2534 = vmatprep.subr.mxu0 0.0
    %2535 = vmatpush2.msra.mxu0 0.0
    %2536 = vmatprep.subr.mxu0 0.0
    %2537 = vmatpush2.msra.mxu0 0.0
    %2538 = vmatprep.subr.mxu0 0.0
    %2539 = vmatpush2.msra.mxu0 0.0
    %2540 = vmatprep.subr.mxu0 0.0
    %2541 = vmatpush2.msra.mxu0 0.0
    %2542 = vmatprep.subr.mxu0 0.0
    %2543 = vmatpush2.msra.mxu0 0.0
    %2544 = vmatprep.subr.mxu0 0.0
    %2545 = vmatpush2.msra.mxu0 0.0
    %2546 = vmatprep.subr.mxu0 0.0
    %2547 = vmatpush2.msra.mxu0 0.0
    %2548 = vmatprep.subr.mxu0 0.0
    %2549 = vmatpush2.msra.mxu0 0.0
    %2550 = vmatprep.subr.mxu0 0.0
    %2551 = vmatpush2.msra.mxu0 0.0
    %2552 = vmatprep.subr.mxu0 0.0
    %2553 = vmatpush2.msra.mxu0 0.0
    %2554 = vmatprep.subr.mxu0 0.0
    %2555 = vmatpush2.msra.mxu0 0.0
    %2556 = vmatprep.subr.mxu0 0.0
    %2557 = vmatpush2.msra.mxu0 0.0
    %2558 = vmatprep.mubr.f32.mxu0 0.0
    %2559 = vmatmul.mubr.f32.gmra.mxu0 %v2447
    %v2560 = vpop.f32.mrf.mxu0
    %v2561 = vadd.f32 0.0, %v2560
    %v2562 = vpop.f32.mrf.mxu0
    %2563 = vmatprep.mubr.f32.mxu0 0.0
    %2564 = vmatmul.mubr.f32.gmra.mxu0 %v2450
    %v2565 = vpop.f32.mrf.mxu0
    %v2566 = vadd.f32 0.0, %v2565
    %v2567 = vpop.f32.mrf.mxu0
    %2568 = vmatprep.mubr.f32.mxu0 0.0
    %2569 = vmatmul.mubr.f32.gmra.mxu0 %v2453
    %v2570 = vpop.f32.mrf.mxu0
    %v2571 = vadd.f32 0.0, %v2570
    %v2572 = vpop.f32.mrf.mxu0
    %2573 = vmatprep.mubr.f32.mxu0 0.0
    %2574 = vmatmul.mubr.f32.gmra.mxu0 %v2456
    %v2575 = vpop.f32.mrf.mxu0
    %v2576 = vadd.f32 0.0, %v2575
    %v2577 = vpop.f32.mrf.mxu0
    %2578 = vmatprep.mubr.f32.mxu0 0.0
    %2579 = vmatmul.mubr.f32.gmra.mxu0 %v2459
    %v2580 = vpop.f32.mrf.mxu0
    %v2581 = vadd.f32 0.0, %v2580
    %v2582 = vpop.f32.mrf.mxu0
    %2583 = vmatprep.mubr.f32.mxu0 0.0
    %2584 = vmatmul.mubr.f32.gmra.mxu0 %v2462
    %v2585 = vpop.f32.mrf.mxu0
    %v2586 = vadd.f32 0.0, %v2585
    %v2587 = vpop.f32.mrf.mxu0
    %2588 = vmatprep.mubr.f32.mxu0 0.0
    %2589 = vmatmul.mubr.f32.gmra.mxu0 %v2465
    %v2590 = vpop.f32.mrf.mxu0
    %v2591 = vadd.f32 0.0, %v2590
    %v2592 = vpop.f32.mrf.mxu0
    %2593 = vmatprep.mubr.f32.mxu0 0.0
    %2594 = vmatmul.mubr.f32.gmra.mxu0 %v2468
    %v2595 = vpop.f32.mrf.mxu0
    %v2596 = vadd.f32 0.0, %v2595
    %v2597 = vpop.f32.mrf.mxu0
    %2598 = vmatprep.mubr.f32.mxu0 0.0
    %2599 = vmatmul.mubr.f32.gmra.mxu0 %v2471
    %v2600 = vpop.f32.mrf.mxu0
    %v2601 = vadd.f32 0.0, %v2600
    %v2602 = vpop.f32.mrf.mxu0
    %2603 = vmatprep.mubr.f32.mxu0 0.0
    %2604 = vmatmul.mubr.f32.gmra.mxu0 %v2474
    %v2605 = vpop.f32.mrf.mxu0
    %v2606 = vadd.f32 0.0, %v2605
    %v2607 = vpop.f32.mrf.mxu0
    %2608 = vmatprep.mubr.f32.mxu0 0.0
    %2609 = vmatmul.mubr.f32.gmra.mxu0 %v2477
    %v2610 = vpop.f32.mrf.mxu0
    %v2611 = vadd.f32 0.0, %v2610
    %v2612 = vpop.f32.mrf.mxu0
    %2613 = vmatprep.mubr.f32.mxu0 0.0
    %2614 = vmatmul.mubr.f32.gmra.mxu0 %v2480
    %v2615 = vpop.f32.mrf.mxu0
    %v2616 = vadd.f32 0.0, %v2615
    %v2617 = vpop.f32.mrf.mxu0
    %2618 = vmatprep.mubr.f32.mxu0 0.0
    %2619 = vmatmul.mubr.f32.gmra.mxu0 %v2483
    %v2620 = vpop.f32.mrf.mxu0
    %v2621 = vadd.f32 0.0, %v2620
    %v2622 = vpop.f32.mrf.mxu0
    %2623 = vmatprep.mubr.f32.mxu0 0.0
    %2624 = vmatmul.mubr.f32.gmra.mxu0 %v2486
    %v2625 = vpop.f32.mrf.mxu0
    %v2626 = vadd.f32 0.0, %v2625
    %v2627 = vpop.f32.mrf.mxu0
    %2628 = vmatprep.mubr.f32.mxu0 0.0
    %2629 = vmatmul.mubr.f32.gmra.mxu0 %v2489
    %v2630 = vpop.f32.mrf.mxu0
    %v2631 = vadd.f32 0.0, %v2630
    %v2632 = vpop.f32.mrf.mxu0
    %2633 = vmatprep.mubr.f32.mxu0 0.0
    %2634 = vmatmul.mubr.f32.gmra.mxu0 %v2492
    %v2635 = vpop.f32.mrf.mxu0
    %v2636 = vadd.f32 0.0, %v2635
    %v2637 = vpop.f32.mrf.mxu0
    %2638 = vdwg.mxu0
    %v2639 = vmul.f32 %v2421, %v2561
    %v2640 = vmul.f32 %v2422, %v2566
    %v2641 = vmul.f32 %v2423, %v2571
    %v2642 = vmul.f32 %v2424, %v2576
    %v2643 = vmul.f32 %v2425, %v2581
    %v2644 = vmul.f32 %v2426, %v2586
    %v2645 = vmul.f32 %v2427, %v2591
    %v2646 = vmul.f32 %v2428, %v2596
    %v2647 = vmul.f32 %v2429, %v2601
    %v2648 = vmul.f32 %v2430, %v2606
    %v2649 = vmul.f32 %v2431, %v2611
    %v2650 = vmul.f32 %v2432, %v2616
    %v2651 = vmul.f32 %v2433, %v2621
    %v2652 = vmul.f32 %v2434, %v2626
    %v2653 = vmul.f32 %v2435, %v2631
    %v2654 = vmul.f32 %v2436, %v2636
    %2671 = vrot.lane.b32.xlu0 %v2639, 96
    %v2672 = vpop.permute.xlu0 %2671
    %2673 = vrot.lane.b32.xlu0 %v2640, 96
    %v2674 = vpop.permute.xlu0 %2673
    %2675 = vrot.lane.b32.xlu0 %v2641, 96
    %v2676 = vpop.permute.xlu0 %2675
    %2677 = vrot.lane.b32.xlu0 %v2642, 96
    %v2678 = vpop.permute.xlu0 %2677
    %2679 = vrot.lane.b32.xlu0 %v2643, 96
    %v2680 = vpop.permute.xlu0 %2679
    %2681 = vrot.lane.b32.xlu0 %v2644, 96
    %v2682 = vpop.permute.xlu0 %2681
    %2683 = vrot.lane.b32.xlu0 %v2645, 96
    %v2684 = vpop.permute.xlu0 %2683
    %2685 = vrot.lane.b32.xlu0 %v2646, 96
    %v2686 = vpop.permute.xlu0 %2685
    %2687 = vrot.lane.b32.xlu0 %v2647, 96
    %v2688 = vpop.permute.xlu0 %2687
    %2689 = vrot.lane.b32.xlu0 %v2648, 96
    %v2690 = vpop.permute.xlu0 %2689
    %2691 = vrot.lane.b32.xlu0 %v2649, 96
    %v2692 = vpop.permute.xlu0 %2691
    %2693 = vrot.lane.b32.xlu0 %v2650, 96
    %v2694 = vpop.permute.xlu0 %2693
    %2695 = vrot.lane.b32.xlu0 %v2651, 96
    %v2696 = vpop.permute.xlu0 %2695
    %2697 = vrot.lane.b32.xlu0 %v2652, 96
    %v2698 = vpop.permute.xlu0 %2697
    %2699 = vrot.lane.b32.xlu0 %v2653, 96
    %v2700 = vpop.permute.xlu0 %2699
    %2701 = vrot.lane.b32.xlu0 %v2654, 96
    %v2702 = vpop.permute.xlu0 %2701
    %v2719 = vadd.f32 %v2639, %v2672
    %v2720 = vadd.f32 %v2640, %v2674
    %v2721 = vadd.f32 %v2641, %v2676
    %v2722 = vadd.f32 %v2642, %v2678
    %v2723 = vadd.f32 %v2643, %v2680
    %v2724 = vadd.f32 %v2644, %v2682
    %v2725 = vadd.f32 %v2645, %v2684
    %v2726 = vadd.f32 %v2646, %v2686
    %v2727 = vadd.f32 %v2647, %v2688
    %v2728 = vadd.f32 %v2648, %v2690
    %v2729 = vadd.f32 %v2649, %v2692
    %v2730 = vadd.f32 %v2650, %v2694
    %v2731 = vadd.f32 %v2651, %v2696
    %v2732 = vadd.f32 %v2652, %v2698
    %v2733 = vadd.f32 %v2653, %v2700
    %v2734 = vadd.f32 %v2654, %v2702
    %v2735 = vtanh.pop %v2719
    %v2736 = vtanh.pop %v2720
    %v2737 = vtanh.pop %v2721
    %v2738 = vtanh.pop %v2722
    %v2739 = vtanh.pop %v2723
    %v2740 = vtanh.pop %v2724
    %v2741 = vtanh.pop %v2725
    %v2742 = vtanh.pop %v2726
    %v2743 = vtanh.pop %v2727
    %v2744 = vtanh.pop %v2728
    %v2745 = vtanh.pop %v2729
    %v2746 = vtanh.pop %v2730
    %v2747 = vtanh.pop %v2731
    %v2748 = vtanh.pop %v2732
    %v2749 = vtanh.pop %v2733
    %v2750 = vtanh.pop %v2734
    %2767 = vrot.lane.b32.xlu0 %v2054, 32
    %v2768 = vpop.permute.xlu0 %2767
    %2769 = vrot.lane.b32.xlu0 %v2059, 32
    %v2770 = vpop.permute.xlu0 %2769
    %2771 = vrot.lane.b32.xlu0 %v2064, 32
    %v2772 = vpop.permute.xlu0 %2771
    %2773 = vrot.lane.b32.xlu0 %v2069, 32
    %v2774 = vpop.permute.xlu0 %2773
    %2775 = vrot.lane.b32.xlu0 %v2074, 32
    %v2776 = vpop.permute.xlu0 %2775
    %2777 = vrot.lane.b32.xlu0 %v2079, 32
    %v2778 = vpop.permute.xlu0 %2777
    %2779 = vrot.lane.b32.xlu0 %v2084, 32
    %v2780 = vpop.permute.xlu0 %2779
    %2781 = vrot.lane.b32.xlu0 %v2089, 32
    %v2782 = vpop.permute.xlu0 %2781
    %2783 = vrot.lane.b32.xlu0 %v2094, 32
    %v2784 = vpop.permute.xlu0 %2783
    %2785 = vrot.lane.b32.xlu0 %v2099, 32
    %v2786 = vpop.permute.xlu0 %2785
    %2787 = vrot.lane.b32.xlu0 %v2104, 32
    %v2788 = vpop.permute.xlu0 %2787
    %2789 = vrot.lane.b32.xlu0 %v2109, 32
    %v2790 = vpop.permute.xlu0 %2789
    %2791 = vrot.lane.b32.xlu0 %v2114, 32
    %v2792 = vpop.permute.xlu0 %2791
    %2793 = vrot.lane.b32.xlu0 %v2119, 32
    %v2794 = vpop.permute.xlu0 %2793
    %2795 = vrot.lane.b32.xlu0 %v2124, 32
    %v2796 = vpop.permute.xlu0 %2795
    %2797 = vrot.lane.b32.xlu0 %v2129, 32
    %v2798 = vpop.permute.xlu0 %2797
    %2831 = vrot.lane.b32.xlu0 %v2735, 64
    %v2832 = vpop.permute.xlu0 %2831
    %2833 = vrot.lane.b32.xlu0 %v2736, 64
    %v2834 = vpop.permute.xlu0 %2833
    %2835 = vrot.lane.b32.xlu0 %v2737, 64
    %v2836 = vpop.permute.xlu0 %2835
    %2837 = vrot.lane.b32.xlu0 %v2738, 64
    %v2838 = vpop.permute.xlu0 %2837
    %2839 = vrot.lane.b32.xlu0 %v2739, 64
    %v2840 = vpop.permute.xlu0 %2839
    %2841 = vrot.lane.b32.xlu0 %v2740, 64
    %v2842 = vpop.permute.xlu0 %2841
    %2843 = vrot.lane.b32.xlu0 %v2741, 64
    %v2844 = vpop.permute.xlu0 %2843
    %2845 = vrot.lane.b32.xlu0 %v2742, 64
    %v2846 = vpop.permute.xlu0 %2845
    %2847 = vrot.lane.b32.xlu0 %v2743, 64
    %v2848 = vpop.permute.xlu0 %2847
    %2849 = vrot.lane.b32.xlu0 %v2744, 64
    %v2850 = vpop.permute.xlu0 %2849
    %2851 = vrot.lane.b32.xlu0 %v2745, 64
    %v2852 = vpop.permute.xlu0 %2851
    %2853 = vrot.lane.b32.xlu0 %v2746, 64
    %v2854 = vpop.permute.xlu0 %2853
    %2855 = vrot.lane.b32.xlu0 %v2747, 64
    %v2856 = vpop.permute.xlu0 %2855
    %2857 = vrot.lane.b32.xlu0 %v2748, 64
    %v2858 = vpop.permute.xlu0 %2857
    %2859 = vrot.lane.b32.xlu0 %v2749, 64
    %v2860 = vpop.permute.xlu0 %2859
    %2861 = vrot.lane.b32.xlu0 %v2750, 64
    %v2862 = vpop.permute.xlu0 %2861
    %v2879 = vsel %vm926, %v1849, %v2768
    %v2880 = vsel %vm926, %v1850, %v2770
    %v2881 = vsel %vm926, %v1851, %v2772
    %v2882 = vsel %vm926, %v1852, %v2774
    %v2883 = vsel %vm926, %v1853, %v2776
    %v2884 = vsel %vm926, %v1854, %v2778
    %v2885 = vsel %vm926, %v1855, %v2780
    %v2886 = vsel %vm926, %v1856, %v2782
    %v2887 = vsel %vm926, %v1857, %v2784
    %v2888 = vsel %vm926, %v1858, %v2786
    %v2889 = vsel %vm926, %v1859, %v2788
    %v2890 = vsel %vm926, %v1860, %v2790
    %v2891 = vsel %vm926, %v1861, %v2792
    %v2892 = vsel %vm926, %v1862, %v2794
    %v2893 = vsel %vm926, %v1863, %v2796
    %v2894 = vsel %vm926, %v1864, %v2798
    %v2895 = vsel %vm411, %v2879, %v2832
    %v2896 = vsel %vm411, %v2880, %v2834
    %v2897 = vsel %vm411, %v2881, %v2836
    %v2898 = vsel %vm411, %v2882, %v2838
    %v2899 = vsel %vm411, %v2883, %v2840
    %v2900 = vsel %vm411, %v2884, %v2842
    %v2901 = vsel %vm411, %v2885, %v2844
    %v2902 = vsel %vm411, %v2886, %v2846
    %v2903 = vsel %vm411, %v2887, %v2848
    %v2904 = vsel %vm411, %v2888, %v2850
    %v2905 = vsel %vm411, %v2889, %v2852
    %v2906 = vsel %vm411, %v2890, %v2854
    %v2907 = vsel %vm411, %v2891, %v2856
    %v2908 = vsel %vm411, %v2892, %v2858
    %v2909 = vsel %vm411, %v2893, %v2860
    %v2910 = vsel %vm411, %v2894, %v2862
    %s2911 = scalar_lea.vmem %s8, 96
    %v2912 = vld [vmem:[%s2911] sm:$0xff]
    %v2913 = vld [vmem:[%s2911 + $0x8] sm:$0xff]
    %v2914 = vld [vmem:[%s2911 + $0x10] sm:$0xff]
    %v2915 = vld [vmem:[%s2911 + $0x18] sm:$0xff]
    %v2916 = vld [vmem:[%s2911 + $0x20] sm:$0xff]
    %v2917 = vld [vmem:[%s2911 + $0x28] sm:$0xff]
    %v2918 = vld [vmem:[%s2911 + $0x30] sm:$0xff]
    %v2919 = vld [vmem:[%s2911 + $0x38] sm:$0xff]
    %v2920 = vld [vmem:[%s2911 + $0x40] sm:$0xff]
    %v2921 = vld [vmem:[%s2911 + $0x48] sm:$0xff]
    %v2922 = vld [vmem:[%s2911 + $0x50] sm:$0xff]
    %v2923 = vld [vmem:[%s2911 + $0x58] sm:$0xff]
    %s2924 = scalar_lea.vmem %s9, 1
    %v2925 = vld [vmem:[%s2924] sm:$0x1]
    %v2927 = vlaneseq
    %v2928 = vshrl.u32 %v2927, 7
    %v2929 = vsub.s32 0, %v2928
    %v2930 = vrot.slane %v2925, %v2929
    %v2933 = vsel %vm1435, %v2895, 0
    %v2936 = vsel %vm1435, %v2896, 0
    %v2939 = vsel %vm1435, %v2897, 0
    %v2942 = vsel %vm1435, %v2898, 0
    %v2945 = vsel %vm1435, %v2899, 0
    %v2948 = vsel %vm1435, %v2900, 0
    %v2951 = vsel %vm1435, %v2901, 0
    %v2954 = vsel %vm1435, %v2902, 0
    %v2957 = vsel %vm1435, %v2903, 0
    %v2960 = vsel %vm1435, %v2904, 0
    %v2963 = vsel %vm1435, %v2905, 0
    %v2966 = vsel %vm1435, %v2906, 0
    %v2969 = vsel %vm1435, %v2907, 0
    %v2972 = vsel %vm1435, %v2908, 0
    %v2975 = vsel %vm1435, %v2909, 0
    %v2978 = vsel %vm1435, %v2910, 0
    %2980 = vmatprep.subr.mxu0 0.0
    %2981 = vmatpush1.msra.mxu0 0.0
    %2982 = vmatprep.subr.mxu0 0.0
    %2983 = vmatpush1.msra.mxu0 0.0
    %2984 = vmatprep.subr.mxu0 0.0
    %2985 = vmatpush1.msra.mxu0 0.0
    %2986 = vmatprep.subr.mxu0 0.0
    %2987 = vmatpush1.msra.mxu0 0.0
    %2988 = vmatprep.subr.mxu0 0.0
    %2989 = vmatpush1.msra.mxu0 %v2923
    %2990 = vmatprep.subr.mxu0 0.0
    %2991 = vmatpush1.msra.mxu0 %v2922
    %2992 = vmatprep.subr.mxu0 0.0
    %2993 = vmatpush1.msra.mxu0 %v2921
    %2994 = vmatprep.subr.mxu0 0.0
    %2995 = vmatpush1.msra.mxu0 %v2920
    %2996 = vmatprep.subr.mxu0 0.0
    %2997 = vmatpush1.msra.mxu0 %v2919
    %2998 = vmatprep.subr.mxu0 0.0
    %2999 = vmatpush1.msra.mxu0 %v2918
    %3000 = vmatprep.subr.mxu0 0.0
    %3001 = vmatpush1.msra.mxu0 %v2917
    %3002 = vmatprep.subr.mxu0 0.0
    %3003 = vmatpush1.msra.mxu0 %v2916
    %3004 = vmatprep.subr.mxu0 0.0
    %3005 = vmatpush1.msra.mxu0 %v2915
    %3006 = vmatprep.subr.mxu0 0.0
    %3007 = vmatpush1.msra.mxu0 %v2914
    %3008 = vmatprep.subr.mxu0 0.0
    %3009 = vmatpush1.msra.mxu0 %v2913
    %3010 = vmatprep.subr.mxu0 0.0
    %3011 = vmatpush1.msra.mxu0 %v2912
    %3012 = vmatprep.subr.mxu0 0.0
    %3013 = vmatpush2.msra.mxu0 0.0
    %3014 = vmatprep.subr.mxu0 0.0
    %3015 = vmatpush2.msra.mxu0 0.0
    %3016 = vmatprep.subr.mxu0 0.0
    %3017 = vmatpush2.msra.mxu0 0.0
    %3018 = vmatprep.subr.mxu0 0.0
    %3019 = vmatpush2.msra.mxu0 0.0
    %3020 = vmatprep.subr.mxu0 0.0
    %3021 = vmatpush2.msra.mxu0 0.0
    %3022 = vmatprep.subr.mxu0 0.0
    %3023 = vmatpush2.msra.mxu0 0.0
    %3024 = vmatprep.subr.mxu0 0.0
    %3025 = vmatpush2.msra.mxu0 0.0
    %3026 = vmatprep.subr.mxu0 0.0
    %3027 = vmatpush2.msra.mxu0 0.0
    %3028 = vmatprep.subr.mxu0 0.0
    %3029 = vmatpush2.msra.mxu0 0.0
    %3030 = vmatprep.subr.mxu0 0.0
    %3031 = vmatpush2.msra.mxu0 0.0
    %3032 = vmatprep.subr.mxu0 0.0
    %3033 = vmatpush2.msra.mxu0 0.0
    %3034 = vmatprep.subr.mxu0 0.0
    %3035 = vmatpush2.msra.mxu0 0.0
    %3036 = vmatprep.subr.mxu0 0.0
    %3037 = vmatpush2.msra.mxu0 0.0
    %3038 = vmatprep.subr.mxu0 0.0
    %3039 = vmatpush2.msra.mxu0 0.0
    %3040 = vmatprep.subr.mxu0 0.0
    %3041 = vmatpush2.msra.mxu0 0.0
    %3042 = vmatprep.subr.mxu0 0.0
    %3043 = vmatpush2.msra.mxu0 0.0
    %3044 = vmatprep.mubr.f32.mxu0 0.0
    %3045 = vmatmul.mubr.f32.gmra.mxu0 %v2933
    %v3046 = vpop.f32.mrf.mxu0
    %v3047 = vadd.f32 %v2930, %v3046
    %v3048 = vpop.f32.mrf.mxu0
    %3049 = vmatprep.mubr.f32.mxu0 0.0
    %3050 = vmatmul.mubr.f32.gmra.mxu0 %v2936
    %v3051 = vpop.f32.mrf.mxu0
    %v3052 = vadd.f32 %v2930, %v3051
    %v3053 = vpop.f32.mrf.mxu0
    %3054 = vmatprep.mubr.f32.mxu0 0.0
    %3055 = vmatmul.mubr.f32.gmra.mxu0 %v2939
    %v3056 = vpop.f32.mrf.mxu0
    %v3057 = vadd.f32 %v2930, %v3056
    %v3058 = vpop.f32.mrf.mxu0
    %3059 = vmatprep.mubr.f32.mxu0 0.0
    %3060 = vmatmul.mubr.f32.gmra.mxu0 %v2942
    %v3061 = vpop.f32.mrf.mxu0
    %v3062 = vadd.f32 %v2930, %v3061
    %v3063 = vpop.f32.mrf.mxu0
    %3064 = vmatprep.mubr.f32.mxu0 0.0
    %3065 = vmatmul.mubr.f32.gmra.mxu0 %v2945
    %v3066 = vpop.f32.mrf.mxu0
    %v3067 = vadd.f32 %v2930, %v3066
    %v3068 = vpop.f32.mrf.mxu0
    %3069 = vmatprep.mubr.f32.mxu0 0.0
    %3070 = vmatmul.mubr.f32.gmra.mxu0 %v2948
    %v3071 = vpop.f32.mrf.mxu0
    %v3072 = vadd.f32 %v2930, %v3071
    %v3073 = vpop.f32.mrf.mxu0
    %3074 = vmatprep.mubr.f32.mxu0 0.0
    %3075 = vmatmul.mubr.f32.gmra.mxu0 %v2951
    %v3076 = vpop.f32.mrf.mxu0
    %v3077 = vadd.f32 %v2930, %v3076
    %v3078 = vpop.f32.mrf.mxu0
    %3079 = vmatprep.mubr.f32.mxu0 0.0
    %3080 = vmatmul.mubr.f32.gmra.mxu0 %v2954
    %v3081 = vpop.f32.mrf.mxu0
    %v3082 = vadd.f32 %v2930, %v3081
    %v3083 = vpop.f32.mrf.mxu0
    %3084 = vmatprep.mubr.f32.mxu0 0.0
    %3085 = vmatmul.mubr.f32.gmra.mxu0 %v2957
    %v3086 = vpop.f32.mrf.mxu0
    %v3087 = vadd.f32 %v2930, %v3086
    %v3088 = vpop.f32.mrf.mxu0
    %3089 = vmatprep.mubr.f32.mxu0 0.0
    %3090 = vmatmul.mubr.f32.gmra.mxu0 %v2960
    %v3091 = vpop.f32.mrf.mxu0
    %v3092 = vadd.f32 %v2930, %v3091
    %v3093 = vpop.f32.mrf.mxu0
    %3094 = vmatprep.mubr.f32.mxu0 0.0
    %3095 = vmatmul.mubr.f32.gmra.mxu0 %v2963
    %v3096 = vpop.f32.mrf.mxu0
    %v3097 = vadd.f32 %v2930, %v3096
    %v3098 = vpop.f32.mrf.mxu0
    %3099 = vmatprep.mubr.f32.mxu0 0.0
    %3100 = vmatmul.mubr.f32.gmra.mxu0 %v2966
    %v3101 = vpop.f32.mrf.mxu0
    %v3102 = vadd.f32 %v2930, %v3101
    %v3103 = vpop.f32.mrf.mxu0
    %3104 = vmatprep.mubr.f32.mxu0 0.0
    %3105 = vmatmul.mubr.f32.gmra.mxu0 %v2969
    %v3106 = vpop.f32.mrf.mxu0
    %v3107 = vadd.f32 %v2930, %v3106
    %v3108 = vpop.f32.mrf.mxu0
    %3109 = vmatprep.mubr.f32.mxu0 0.0
    %3110 = vmatmul.mubr.f32.gmra.mxu0 %v2972
    %v3111 = vpop.f32.mrf.mxu0
    %v3112 = vadd.f32 %v2930, %v3111
    %v3113 = vpop.f32.mrf.mxu0
    %3114 = vmatprep.mubr.f32.mxu0 0.0
    %3115 = vmatmul.mubr.f32.gmra.mxu0 %v2975
    %v3116 = vpop.f32.mrf.mxu0
    %v3117 = vadd.f32 %v2930, %v3116
    %v3118 = vpop.f32.mrf.mxu0
    %3119 = vmatprep.mubr.f32.mxu0 0.0
    %3120 = vmatmul.mubr.f32.gmra.mxu0 %v2978
    %v3121 = vpop.f32.mrf.mxu0
    %v3122 = vadd.f32 %v2930, %v3121
    %v3123 = vpop.f32.mrf.mxu0
    %3124 = vdwg.mxu0
    %v3125 = vmax.f32 %v3047, 0.0
    %v3126 = vmax.f32 %v3052, 0.0
    %v3127 = vmax.f32 %v3057, 0.0
    %v3128 = vmax.f32 %v3062, 0.0
    %v3129 = vmax.f32 %v3067, 0.0
    %v3130 = vmax.f32 %v3072, 0.0
    %v3131 = vmax.f32 %v3077, 0.0
    %v3132 = vmax.f32 %v3082, 0.0
    %v3133 = vmax.f32 %v3087, 0.0
    %v3134 = vmax.f32 %v3092, 0.0
    %v3135 = vmax.f32 %v3097, 0.0
    %v3136 = vmax.f32 %v3102, 0.0
    %v3137 = vmax.f32 %v3107, 0.0
    %v3138 = vmax.f32 %v3112, 0.0
    %v3139 = vmax.f32 %v3117, 0.0
    %v3140 = vmax.f32 %v3122, 0.0
    %s3141 = scalar_lea.vmem %s10, 32
    %v3142 = vld [vmem:[%s3141] sm:$0xff]
    %v3143 = vld [vmem:[%s3141 + $0x8] sm:$0xff]
    %v3144 = vld [vmem:[%s3141 + $0x10] sm:$0xff]
    %v3145 = vld [vmem:[%s3141 + $0x18] sm:$0xff]
    %s3146 = scalar_lea.vmem %s11, 1
    %v3147 = vld [vmem:[%s3146] sm:$0x1]
    %v3149 = vlaneseq
    %v3150 = vshrl.u32 %v3149, 7
    %v3151 = vsub.s32 0, %v3150
    %v3152 = vrot.slane %v3147, %v3151
    %v3155 = vsel %vm926, %v3125, 0
    %v3158 = vsel %vm926, %v3126, 0
    %v3161 = vsel %vm926, %v3127, 0
    %v3164 = vsel %vm926, %v3128, 0
    %v3167 = vsel %vm926, %v3129, 0
    %v3170 = vsel %vm926, %v3130, 0
    %v3173 = vsel %vm926, %v3131, 0
    %v3176 = vsel %vm926, %v3132, 0
    %v3179 = vsel %vm926, %v3133, 0
    %v3182 = vsel %vm926, %v3134, 0
    %v3185 = vsel %vm926, %v3135, 0
    %v3188 = vsel %vm926, %v3136, 0
    %v3191 = vsel %vm926, %v3137, 0
    %v3194 = vsel %vm926, %v3138, 0
    %v3197 = vsel %vm926, %v3139, 0
    %v3200 = vsel %vm926, %v3140, 0
    %3202 = vmatprep.subr.mxu0 0.0
    %3203 = vmatpush1.msra.mxu0 0.0
    %3204 = vmatprep.subr.mxu0 0.0
    %3205 = vmatpush1.msra.mxu0 0.0
    %3206 = vmatprep.subr.mxu0 0.0
    %3207 = vmatpush1.msra.mxu0 0.0
    %3208 = vmatprep.subr.mxu0 0.0
    %3209 = vmatpush1.msra.mxu0 0.0
    %3210 = vmatprep.subr.mxu0 0.0
    %3211 = vmatpush1.msra.mxu0 0.0
    %3212 = vmatprep.subr.mxu0 0.0
    %3213 = vmatpush1.msra.mxu0 0.0
    %3214 = vmatprep.subr.mxu0 0.0
    %3215 = vmatpush1.msra.mxu0 0.0
    %3216 = vmatprep.subr.mxu0 0.0
    %3217 = vmatpush1.msra.mxu0 0.0
    %3218 = vmatprep.subr.mxu0 0.0
    %3219 = vmatpush1.msra.mxu0 0.0
    %3220 = vmatprep.subr.mxu0 0.0
    %3221 = vmatpush1.msra.mxu0 0.0
    %3222 = vmatprep.subr.mxu0 0.0
    %3223 = vmatpush1.msra.mxu0 0.0
    %3224 = vmatprep.subr.mxu0 0.0
    %3225 = vmatpush1.msra.mxu0 0.0
    %3226 = vmatprep.subr.mxu0 0.0
    %3227 = vmatpush1.msra.mxu0 %v3145
    %3228 = vmatprep.subr.mxu0 0.0
    %3229 = vmatpush1.msra.mxu0 %v3144
    %3230 = vmatprep.subr.mxu0 0.0
    %3231 = vmatpush1.msra.mxu0 %v3143
    %3232 = vmatprep.subr.mxu0 0.0
    %3233 = vmatpush1.msra.mxu0 %v3142
    %3234 = vmatprep.subr.mxu0 0.0
    %3235 = vmatpush2.msra.mxu0 0.0
    %3236 = vmatprep.subr.mxu0 0.0
    %3237 = vmatpush2.msra.mxu0 0.0
    %3238 = vmatprep.subr.mxu0 0.0
    %3239 = vmatpush2.msra.mxu0 0.0
    %3240 = vmatprep.subr.mxu0 0.0
    %3241 = vmatpush2.msra.mxu0 0.0
    %3242 = vmatprep.subr.mxu0 0.0
    %3243 = vmatpush2.msra.mxu0 0.0
    %3244 = vmatprep.subr.mxu0 0.0
    %3245 = vmatpush2.msra.mxu0 0.0
    %3246 = vmatprep.subr.mxu0 0.0
    %3247 = vmatpush2.msra.mxu0 0.0
    %3248 = vmatprep.subr.mxu0 0.0
    %3249 = vmatpush2.msra.mxu0 0.0
    %3250 = vmatprep.subr.mxu0 0.0
    %3251 = vmatpush2.msra.mxu0 0.0
    %3252 = vmatprep.subr.mxu0 0.0
    %3253 = vmatpush2.msra.mxu0 0.0
    %3254 = vmatprep.subr.mxu0 0.0
    %3255 = vmatpush2.msra.mxu0 0.0
    %3256 = vmatprep.subr.mxu0 0.0
    %3257 = vmatpush2.msra.mxu0 0.0
    %3258 = vmatprep.subr.mxu0 0.0
    %3259 = vmatpush2.msra.mxu0 0.0
    %3260 = vmatprep.subr.mxu0 0.0
    %3261 = vmatpush2.msra.mxu0 0.0
    %3262 = vmatprep.subr.mxu0 0.0
    %3263 = vmatpush2.msra.mxu0 0.0
    %3264 = vmatprep.subr.mxu0 0.0
    %3265 = vmatpush2.msra.mxu0 0.0
    %3266 = vmatprep.mubr.f32.mxu0 0.0
    %3267 = vmatmul.mubr.f32.gmra.mxu0 %v3155
    %v3268 = vpop.f32.mrf.mxu0
    %v3269 = vadd.f32 %v3152, %v3268
    %v3270 = vpop.f32.mrf.mxu0
    %3271 = vmatprep.mubr.f32.mxu0 0.0
    %3272 = vmatmul.mubr.f32.gmra.mxu0 %v3158
    %v3273 = vpop.f32.mrf.mxu0
    %v3274 = vadd.f32 %v3152, %v3273
    %v3275 = vpop.f32.mrf.mxu0
    %3276 = vmatprep.mubr.f32.mxu0 0.0
    %3277 = vmatmul.mubr.f32.gmra.mxu0 %v3161
    %v3278 = vpop.f32.mrf.mxu0
    %v3279 = vadd.f32 %v3152, %v3278
    %v3280 = vpop.f32.mrf.mxu0
    %3281 = vmatprep.mubr.f32.mxu0 0.0
    %3282 = vmatmul.mubr.f32.gmra.mxu0 %v3164
    %v3283 = vpop.f32.mrf.mxu0
    %v3284 = vadd.f32 %v3152, %v3283
    %v3285 = vpop.f32.mrf.mxu0
    %3286 = vmatprep.mubr.f32.mxu0 0.0
    %3287 = vmatmul.mubr.f32.gmra.mxu0 %v3167
    %v3288 = vpop.f32.mrf.mxu0
    %v3289 = vadd.f32 %v3152, %v3288
    %v3290 = vpop.f32.mrf.mxu0
    %3291 = vmatprep.mubr.f32.mxu0 0.0
    %3292 = vmatmul.mubr.f32.gmra.mxu0 %v3170
    %v3293 = vpop.f32.mrf.mxu0
    %v3294 = vadd.f32 %v3152, %v3293
    %v3295 = vpop.f32.mrf.mxu0
    %3296 = vmatprep.mubr.f32.mxu0 0.0
    %3297 = vmatmul.mubr.f32.gmra.mxu0 %v3173
    %v3298 = vpop.f32.mrf.mxu0
    %v3299 = vadd.f32 %v3152, %v3298
    %v3300 = vpop.f32.mrf.mxu0
    %3301 = vmatprep.mubr.f32.mxu0 0.0
    %3302 = vmatmul.mubr.f32.gmra.mxu0 %v3176
    %v3303 = vpop.f32.mrf.mxu0
    %v3304 = vadd.f32 %v3152, %v3303
    %v3305 = vpop.f32.mrf.mxu0
    %3306 = vmatprep.mubr.f32.mxu0 0.0
    %3307 = vmatmul.mubr.f32.gmra.mxu0 %v3179
    %v3308 = vpop.f32.mrf.mxu0
    %v3309 = vadd.f32 %v3152, %v3308
    %v3310 = vpop.f32.mrf.mxu0
    %3311 = vmatprep.mubr.f32.mxu0 0.0
    %3312 = vmatmul.mubr.f32.gmra.mxu0 %v3182
    %v3313 = vpop.f32.mrf.mxu0
    %v3314 = vadd.f32 %v3152, %v3313
    %v3315 = vpop.f32.mrf.mxu0
    %3316 = vmatprep.mubr.f32.mxu0 0.0
    %3317 = vmatmul.mubr.f32.gmra.mxu0 %v3185
    %v3318 = vpop.f32.mrf.mxu0
    %v3319 = vadd.f32 %v3152, %v3318
    %v3320 = vpop.f32.mrf.mxu0
    %3321 = vmatprep.mubr.f32.mxu0 0.0
    %3322 = vmatmul.mubr.f32.gmra.mxu0 %v3188
    %v3323 = vpop.f32.mrf.mxu0
    %v3324 = vadd.f32 %v3152, %v3323
    %v3325 = vpop.f32.mrf.mxu0
    %3326 = vmatprep.mubr.f32.mxu0 0.0
    %3327 = vmatmul.mubr.f32.gmra.mxu0 %v3191
    %v3328 = vpop.f32.mrf.mxu0
    %v3329 = vadd.f32 %v3152, %v3328
    %v3330 = vpop.f32.mrf.mxu0
    %3331 = vmatprep.mubr.f32.mxu0 0.0
    %3332 = vmatmul.mubr.f32.gmra.mxu0 %v3194
    %v3333 = vpop.f32.mrf.mxu0
    %v3334 = vadd.f32 %v3152, %v3333
    %v3335 = vpop.f32.mrf.mxu0
    %3336 = vmatprep.mubr.f32.mxu0 0.0
    %3337 = vmatmul.mubr.f32.gmra.mxu0 %v3197
    %v3338 = vpop.f32.mrf.mxu0
    %v3339 = vadd.f32 %v3152, %v3338
    %v3340 = vpop.f32.mrf.mxu0
    %3341 = vmatprep.mubr.f32.mxu0 0.0
    %3342 = vmatmul.mubr.f32.gmra.mxu0 %v3200
    %v3343 = vpop.f32.mrf.mxu0
    %v3344 = vadd.f32 %v3152, %v3343
    %v3345 = vpop.f32.mrf.mxu0
    %3346 = vdwg.mxu0
    %v3347 = vadd.f32 %v3269, %v1849
    %v3348 = vadd.f32 %v3274, %v1850
    %v3349 = vadd.f32 %v3279, %v1851
    %v3350 = vadd.f32 %v3284, %v1852
    %v3351 = vadd.f32 %v3289, %v1853
    %v3352 = vadd.f32 %v3294, %v1854
    %v3353 = vadd.f32 %v3299, %v1855
    %v3354 = vadd.f32 %v3304, %v1856
    %v3355 = vadd.f32 %v3309, %v1857
    %v3356 = vadd.f32 %v3314, %v1858
    %v3357 = vadd.f32 %v3319, %v1859
    %v3358 = vadd.f32 %v3324, %v1860
    %v3359 = vadd.f32 %v3329, %v1861
    %v3360 = vadd.f32 %v3334, %v1862
    %v3361 = vadd.f32 %v3339, %v1863
    %v3362 = vadd.f32 %v3344, %v1864
    %3363 = vmatprep.subr.mxu0 0.0
    %3364 = vmatpush1.msra.mxu0 %v3362
    %3365 = vmatprep.subr.mxu0 0.0
    %3366 = vmatpush1.msra.mxu0 %v3361
    %3367 = vmatprep.subr.mxu0 0.0
    %3368 = vmatpush1.msra.mxu0 %v3360
    %3369 = vmatprep.subr.mxu0 0.0
    %3370 = vmatpush1.msra.mxu0 %v3359
    %3371 = vmatprep.subr.mxu0 0.0
    %3372 = vmatpush1.msra.mxu0 %v3358
    %3373 = vmatprep.subr.mxu0 0.0
    %3374 = vmatpush1.msra.mxu0 %v3357
    %3375 = vmatprep.subr.mxu0 0.0
    %3376 = vmatpush1.msra.mxu0 %v3356
    %3377 = vmatprep.subr.mxu0 0.0
    %3378 = vmatpush1.msra.mxu0 %v3355
    %3379 = vmatprep.subr.mxu0 0.0
    %3380 = vmatpush1.msra.mxu0 %v3354
    %3381 = vmatprep.subr.mxu0 0.0
    %3382 = vmatpush1.msra.mxu0 %v3353
    %3383 = vmatprep.subr.mxu0 0.0
    %3384 = vmatpush1.msra.mxu0 %v3352
    %3385 = vmatprep.subr.mxu0 0.0
    %3386 = vmatpush1.msra.mxu0 %v3351
    %3387 = vmatprep.subr.mxu0 0.0
    %3388 = vmatpush1.msra.mxu0 %v3350
    %3389 = vmatprep.subr.mxu0 0.0
    %3390 = vmatpush1.msra.mxu0 %v3349
    %3391 = vmatprep.subr.mxu0 0.0
    %3392 = vmatpush1.msra.mxu0 %v3348
    %3393 = vmatprep.subr.mxu0 0.0
    %3394 = vmatpush1.msra.mxu0 %v3347
    %3395 = vmatprep.subr.mxu0 0.0
    %3396 = vmatpush2.msra.mxu0 0.0
    %3397 = vmatprep.subr.mxu0 0.0
    %3398 = vmatpush2.msra.mxu0 0.0
    %3399 = vmatprep.subr.mxu0 0.0
    %3400 = vmatpush2.msra.mxu0 0.0
    %3401 = vmatprep.subr.mxu0 0.0
    %3402 = vmatpush2.msra.mxu0 0.0
    %3403 = vmatprep.subr.mxu0 0.0
    %3404 = vmatpush2.msra.mxu0 0.0
    %3405 = vmatprep.subr.mxu0 0.0
    %3406 = vmatpush2.msra.mxu0 0.0
    %3407 = vmatprep.subr.mxu0 0.0
    %3408 = vmatpush2.msra.mxu0 0.0
    %3409 = vmatprep.subr.mxu0 0.0
    %3410 = vmatpush2.msra.mxu0 0.0
    %3411 = vmatprep.subr.mxu0 0.0
    %3412 = vmatpush2.msra.mxu0 0.0
    %3413 = vmatprep.subr.mxu0 0.0
    %3414 = vmatpush2.msra.mxu0 0.0
    %3415 = vmatprep.subr.mxu0 0.0
    %3416 = vmatpush2.msra.mxu0 0.0
    %3417 = vmatprep.subr.mxu0 0.0
    %3418 = vmatpush2.msra.mxu0 0.0
    %3419 = vmatprep.subr.mxu0 0.0
    %3420 = vmatpush2.msra.mxu0 0.0
    %3421 = vmatprep.subr.mxu0 0.0
    %3422 = vmatpush2.msra.mxu0 0.0
    %3423 = vmatprep.subr.mxu0 0.0
    %3424 = vmatpush2.msra.mxu0 0.0
    %3425 = vmatprep.subr.mxu0 0.0
    %3426 = vmatpush2.msra.mxu0 0.0
    %3427 = vmatprep.mubr.f32.mxu0 0.0
    %3428 = vmatmul.mubr.f32.gmra.mxu0 %v266
    %v3429 = vpop.f32.mrf.mxu0
    %v3430 = vadd.f32 0.0, %v3429
    %v3431 = vpop.f32.mrf.mxu0
    %3432 = vmatprep.mubr.f32.mxu0 0.0
    %3433 = vmatmul.mubr.f32.gmra.mxu0 %v267
    %v3434 = vpop.f32.mrf.mxu0
    %v3435 = vadd.f32 0.0, %v3434
    %v3436 = vpop.f32.mrf.mxu0
    %3437 = vmatprep.mubr.f32.mxu0 0.0
    %3438 = vmatmul.mubr.f32.gmra.mxu0 %v268
    %v3439 = vpop.f32.mrf.mxu0
    %v3440 = vadd.f32 0.0, %v3439
    %v3441 = vpop.f32.mrf.mxu0
    %3442 = vmatprep.mubr.f32.mxu0 0.0
    %3443 = vmatmul.mubr.f32.gmra.mxu0 %v269
    %v3444 = vpop.f32.mrf.mxu0
    %v3445 = vadd.f32 0.0, %v3444
    %v3446 = vpop.f32.mrf.mxu0
    %3447 = vmatprep.mubr.f32.mxu0 0.0
    %3448 = vmatmul.mubr.f32.gmra.mxu0 %v270
    %v3449 = vpop.f32.mrf.mxu0
    %v3450 = vadd.f32 0.0, %v3449
    %v3451 = vpop.f32.mrf.mxu0
    %3452 = vmatprep.mubr.f32.mxu0 0.0
    %3453 = vmatmul.mubr.f32.gmra.mxu0 %v271
    %v3454 = vpop.f32.mrf.mxu0
    %v3455 = vadd.f32 0.0, %v3454
    %v3456 = vpop.f32.mrf.mxu0
    %3457 = vmatprep.mubr.f32.mxu0 0.0
    %3458 = vmatmul.mubr.f32.gmra.mxu0 %v272
    %v3459 = vpop.f32.mrf.mxu0
    %v3460 = vadd.f32 0.0, %v3459
    %v3461 = vpop.f32.mrf.mxu0
    %3462 = vmatprep.mubr.f32.mxu0 0.0
    %3463 = vmatmul.mubr.f32.gmra.mxu0 %v273
    %v3464 = vpop.f32.mrf.mxu0
    %v3465 = vadd.f32 0.0, %v3464
    %v3466 = vpop.f32.mrf.mxu0
    %3467 = vdwg.mxu0
    %s3468 = scalar_lea.vmem %s4, 128
    %v3469 = vld [vmem:[%s3468] sm:$0xff]
    %v3470 = vld [vmem:[%s3468 + $0x8] sm:$0xff]
    %v3471 = vld [vmem:[%s3468 + $0x10] sm:$0xff]
    %v3472 = vld [vmem:[%s3468 + $0x18] sm:$0xff]
    %v3473 = vld [vmem:[%s3468 + $0x20] sm:$0xff]
    %v3474 = vld [vmem:[%s3468 + $0x28] sm:$0xff]
    %v3475 = vld [vmem:[%s3468 + $0x30] sm:$0xff]
    %v3476 = vld [vmem:[%s3468 + $0x38] sm:$0xff]
    %v3477 = vmul.f32 %v3469, %v3430
    %v3478 = vmul.f32 %v3470, %v3435
    %v3479 = vmul.f32 %v3471, %v3440
    %v3480 = vmul.f32 %v3472, %v3445
    %v3481 = vmul.f32 %v3473, %v3450
    %v3482 = vmul.f32 %v3474, %v3455
    %v3483 = vmul.f32 %v3475, %v3460
    %v3484 = vmul.f32 %v3476, %v3465
    %3485 = vmatprep.subr.mxu0 0.0
    %3486 = vmatpush1.msra.mxu0 0.0
    %3487 = vmatprep.subr.mxu0 0.0
    %3488 = vmatpush1.msra.mxu0 0.0
    %3489 = vmatprep.subr.mxu0 0.0
    %3490 = vmatpush1.msra.mxu0 0.0
    %3491 = vmatprep.subr.mxu0 0.0
    %3492 = vmatpush1.msra.mxu0 0.0
    %3493 = vmatprep.subr.mxu0 0.0
    %3494 = vmatpush1.msra.mxu0 0.0
    %3495 = vmatprep.subr.mxu0 0.0
    %3496 = vmatpush1.msra.mxu0 0.0
    %3497 = vmatprep.subr.mxu0 0.0
    %3498 = vmatpush1.msra.mxu0 0.0
    %3499 = vmatprep.subr.mxu0 0.0
    %3500 = vmatpush1.msra.mxu0 0.0
    %3501 = vmatprep.subr.mxu0 0.0
    %3502 = vmatpush1.msra.mxu0 %v3484
    %3503 = vmatprep.subr.mxu0 0.0
    %3504 = vmatpush1.msra.mxu0 %v3483
    %3505 = vmatprep.subr.mxu0 0.0
    %3506 = vmatpush1.msra.mxu0 %v3482
    %3507 = vmatprep.subr.mxu0 0.0
    %3508 = vmatpush1.msra.mxu0 %v3481
    %3509 = vmatprep.subr.mxu0 0.0
    %3510 = vmatpush1.msra.mxu0 %v3480
    %3511 = vmatprep.subr.mxu0 0.0
    %3512 = vmatpush1.msra.mxu0 %v3479
    %3513 = vmatprep.subr.mxu0 0.0
    %3514 = vmatpush1.msra.mxu0 %v3478
    %3515 = vmatprep.subr.mxu0 0.0
    %3516 = vmatpush1.msra.mxu0 %v3477
    %3517 = vmatprep.subr.mxu0 0.0
    %3518 = vmatpush2.msra.mxu0 0.0
    %3519 = vmatprep.subr.mxu0 0.0
    %3520 = vmatpush2.msra.mxu0 0.0
    %3521 = vmatprep.subr.mxu0 0.0
    %3522 = vmatpush2.msra.mxu0 0.0
    %3523 = vmatprep.subr.mxu0 0.0
    %3524 = vmatpush2.msra.mxu0 0.0
    %3525 = vmatprep.subr.mxu0 0.0
    %3526 = vmatpush2.msra.mxu0 0.0
    %3527 = vmatprep.subr.mxu0 0.0
    %3528 = vmatpush2.msra.mxu0 0.0
    %3529 = vmatprep.subr.mxu0 0.0
    %3530 = vmatpush2.msra.mxu0 0.0
    %3531 = vmatprep.subr.mxu0 0.0
    %3532 = vmatpush2.msra.mxu0 0.0
    %3533 = vmatprep.subr.mxu0 0.0
    %3534 = vmatpush2.msra.mxu0 0.0
    %3535 = vmatprep.subr.mxu0 0.0
    %3536 = vmatpush2.msra.mxu0 0.0
    %3537 = vmatprep.subr.mxu0 0.0
    %3538 = vmatpush2.msra.mxu0 0.0
    %3539 = vmatprep.subr.mxu0 0.0
    %3540 = vmatpush2.msra.mxu0 0.0
    %3541 = vmatprep.subr.mxu0 0.0
    %3542 = vmatpush2.msra.mxu0 0.0
    %3543 = vmatprep.subr.mxu0 0.0
    %3544 = vmatpush2.msra.mxu0 0.0
    %3545 = vmatprep.subr.mxu0 0.0
    %3546 = vmatpush2.msra.mxu0 0.0
    %3547 = vmatprep.subr.mxu0 0.0
    %3548 = vmatpush2.msra.mxu0 0.0
    %3549 = vmatprep.mubr.f32.mxu0 0.0
    %3550 = vmatmul.mubr.f32.gmra.mxu0 %v413
    %v3551 = vpop.f32.mrf.mxu0
    %v3552 = vadd.f32 0.0, %v3551
    %v3553 = vpop.f32.mrf.mxu0
    %3554 = vmatprep.mubr.f32.mxu0 0.0
    %3555 = vmatmul.mubr.f32.gmra.mxu0 %v416
    %v3556 = vpop.f32.mrf.mxu0
    %v3557 = vadd.f32 0.0, %v3556
    %v3558 = vpop.f32.mrf.mxu0
    %3559 = vmatprep.mubr.f32.mxu0 0.0
    %3560 = vmatmul.mubr.f32.gmra.mxu0 %v419
    %v3561 = vpop.f32.mrf.mxu0
    %v3562 = vadd.f32 0.0, %v3561
    %v3563 = vpop.f32.mrf.mxu0
    %3564 = vmatprep.mubr.f32.mxu0 0.0
    %3565 = vmatmul.mubr.f32.gmra.mxu0 %v422
    %v3566 = vpop.f32.mrf.mxu0
    %v3567 = vadd.f32 0.0, %v3566
    %v3568 = vpop.f32.mrf.mxu0
    %3569 = vmatprep.mubr.f32.mxu0 0.0
    %3570 = vmatmul.mubr.f32.gmra.mxu0 %v425
    %v3571 = vpop.f32.mrf.mxu0
    %v3572 = vadd.f32 0.0, %v3571
    %v3573 = vpop.f32.mrf.mxu0
    %3574 = vmatprep.mubr.f32.mxu0 0.0
    %3575 = vmatmul.mubr.f32.gmra.mxu0 %v428
    %v3576 = vpop.f32.mrf.mxu0
    %v3577 = vadd.f32 0.0, %v3576
    %v3578 = vpop.f32.mrf.mxu0
    %3579 = vmatprep.mubr.f32.mxu0 0.0
    %3580 = vmatmul.mubr.f32.gmra.mxu0 %v431
    %v3581 = vpop.f32.mrf.mxu0
    %v3582 = vadd.f32 0.0, %v3581
    %v3583 = vpop.f32.mrf.mxu0
    %3584 = vmatprep.mubr.f32.mxu0 0.0
    %3585 = vmatmul.mubr.f32.gmra.mxu0 %v434
    %v3586 = vpop.f32.mrf.mxu0
    %v3587 = vadd.f32 0.0, %v3586
    %v3588 = vpop.f32.mrf.mxu0
    %3589 = vmatprep.mubr.f32.mxu0 0.0
    %3590 = vmatmul.mubr.f32.gmra.mxu0 %v437
    %v3591 = vpop.f32.mrf.mxu0
    %v3592 = vadd.f32 0.0, %v3591
    %v3593 = vpop.f32.mrf.mxu0
    %3594 = vmatprep.mubr.f32.mxu0 0.0
    %3595 = vmatmul.mubr.f32.gmra.mxu0 %v440
    %v3596 = vpop.f32.mrf.mxu0
    %v3597 = vadd.f32 0.0, %v3596
    %v3598 = vpop.f32.mrf.mxu0
    %3599 = vmatprep.mubr.f32.mxu0 0.0
    %3600 = vmatmul.mubr.f32.gmra.mxu0 %v443
    %v3601 = vpop.f32.mrf.mxu0
    %v3602 = vadd.f32 0.0, %v3601
    %v3603 = vpop.f32.mrf.mxu0
    %3604 = vmatprep.mubr.f32.mxu0 0.0
    %3605 = vmatmul.mubr.f32.gmra.mxu0 %v446
    %v3606 = vpop.f32.mrf.mxu0
    %v3607 = vadd.f32 0.0, %v3606
    %v3608 = vpop.f32.mrf.mxu0
    %3609 = vmatprep.mubr.f32.mxu0 0.0
    %3610 = vmatmul.mubr.f32.gmra.mxu0 %v449
    %v3611 = vpop.f32.mrf.mxu0
    %v3612 = vadd.f32 0.0, %v3611
    %v3613 = vpop.f32.mrf.mxu0
    %3614 = vmatprep.mubr.f32.mxu0 0.0
    %3615 = vmatmul.mubr.f32.gmra.mxu0 %v452
    %v3616 = vpop.f32.mrf.mxu0
    %v3617 = vadd.f32 0.0, %v3616
    %v3618 = vpop.f32.mrf.mxu0
    %3619 = vmatprep.mubr.f32.mxu0 0.0
    %3620 = vmatmul.mubr.f32.gmra.mxu0 %v455
    %v3621 = vpop.f32.mrf.mxu0
    %v3622 = vadd.f32 0.0, %v3621
    %v3623 = vpop.f32.mrf.mxu0
    %3624 = vmatprep.mubr.f32.mxu0 0.0
    %3625 = vmatmul.mubr.f32.gmra.mxu0 %v458
    %v3626 = vpop.f32.mrf.mxu0
    %v3627 = vadd.f32 0.0, %v3626
    %v3628 = vpop.f32.mrf.mxu0
    %3629 = vdwg.mxu0
    %3630 = vmatprep.subr.mxu0 0.0
    %3631 = vmatpush1.msra.mxu0 %v3627
    %3632 = vmatprep.subr.mxu0 0.0
    %3633 = vmatpush1.msra.mxu0 %v3622
    %3634 = vmatprep.subr.mxu0 0.0
    %3635 = vmatpush1.msra.mxu0 %v3617
    %3636 = vmatprep.subr.mxu0 0.0
    %3637 = vmatpush1.msra.mxu0 %v3612
    %3638 = vmatprep.subr.mxu0 0.0
    %3639 = vmatpush1.msra.mxu0 %v3607
    %3640 = vmatprep.subr.mxu0 0.0
    %3641 = vmatpush1.msra.mxu0 %v3602
    %3642 = vmatprep.subr.mxu0 0.0
    %3643 = vmatpush1.msra.mxu0 %v3597
    %3644 = vmatprep.subr.mxu0 0.0
    %3645 = vmatpush1.msra.mxu0 %v3592
    %3646 = vmatprep.subr.mxu0 0.0
    %3647 = vmatpush1.msra.mxu0 %v3587
    %3648 = vmatprep.subr.mxu0 0.0
    %3649 = vmatpush1.msra.mxu0 %v3582
    %3650 = vmatprep.subr.mxu0 0.0
    %3651 = vmatpush1.msra.mxu0 %v3577
    %3652 = vmatprep.subr.mxu0 0.0
    %3653 = vmatpush1.msra.mxu0 %v3572
    %3654 = vmatprep.subr.mxu0 0.0
    %3655 = vmatpush1.msra.mxu0 %v3567
    %3656 = vmatprep.subr.mxu0 0.0
    %3657 = vmatpush1.msra.mxu0 %v3562
    %3658 = vmatprep.subr.mxu0 0.0
    %3659 = vmatpush1.msra.mxu0 %v3557
    %3660 = vmatprep.subr.mxu0 0.0
    %3661 = vmatpush1.msra.mxu0 %v3552
    %3662 = vmatprep.subr.mxu0 0.0
    %3663 = vmatpush2.msra.mxu0 0.0
    %3664 = vmatprep.subr.mxu0 0.0
    %3665 = vmatpush2.msra.mxu0 0.0
    %3666 = vmatprep.subr.mxu0 0.0
    %3667 = vmatpush2.msra.mxu0 0.0
    %3668 = vmatprep.subr.mxu0 0.0
    %3669 = vmatpush2.msra.mxu0 0.0
    %3670 = vmatprep.subr.mxu0 0.0
    %3671 = vmatpush2.msra.mxu0 0.0
    %3672 = vmatprep.subr.mxu0 0.0
    %3673 = vmatpush2.msra.mxu0 0.0
    %3674 = vmatprep.subr.mxu0 0.0
    %3675 = vmatpush2.msra.mxu0 0.0
    %3676 = vmatprep.subr.mxu0 0.0
    %3677 = vmatpush2.msra.mxu0 0.0
    %3678 = vmatprep.subr.mxu0 0.0
    %3679 = vmatpush2.msra.mxu0 0.0
    %3680 = vmatprep.subr.mxu0 0.0
    %3681 = vmatpush2.msra.mxu0 0.0
    %3682 = vmatprep.subr.mxu0 0.0
    %3683 = vmatpush2.msra.mxu0 0.0
    %3684 = vmatprep.subr.mxu0 0.0
    %3685 = vmatpush2.msra.mxu0 0.0
    %3686 = vmatprep.subr.mxu0 0.0
    %3687 = vmatpush2.msra.mxu0 0.0
    %3688 = vmatprep.subr.mxu0 0.0
    %3689 = vmatpush2.msra.mxu0 0.0
    %3690 = vmatprep.subr.mxu0 0.0
    %3691 = vmatpush2.msra.mxu0 0.0
    %3692 = vmatprep.subr.mxu0 0.0
    %3693 = vmatpush2.msra.mxu0 0.0
    %3694 = vmatprep.mubr.f32.mxu0 0.0
    %3695 = vmatmul.mubr.f32.gmra.mxu0 %v605
    %v3696 = vpop.f32.mrf.mxu0
    %v3697 = vadd.f32 0.0, %v3696
    %v3698 = vpop.f32.mrf.mxu0
    %3699 = vmatprep.mubr.f32.mxu0 0.0
    %3700 = vmatmul.mubr.f32.gmra.mxu0 %v606
    %v3701 = vpop.f32.mrf.mxu0
    %v3702 = vadd.f32 0.0, %v3701
    %v3703 = vpop.f32.mrf.mxu0
    %3704 = vmatprep.mubr.f32.mxu0 0.0
    %3705 = vmatmul.mubr.f32.gmra.mxu0 %v607
    %v3706 = vpop.f32.mrf.mxu0
    %v3707 = vadd.f32 0.0, %v3706
    %v3708 = vpop.f32.mrf.mxu0
    %3709 = vmatprep.mubr.f32.mxu0 0.0
    %3710 = vmatmul.mubr.f32.gmra.mxu0 %v608
    %v3711 = vpop.f32.mrf.mxu0
    %v3712 = vadd.f32 0.0, %v3711
    %v3713 = vpop.f32.mrf.mxu0
    %3714 = vmatprep.mubr.f32.mxu0 0.0
    %3715 = vmatmul.mubr.f32.gmra.mxu0 %v609
    %v3716 = vpop.f32.mrf.mxu0
    %v3717 = vadd.f32 0.0, %v3716
    %v3718 = vpop.f32.mrf.mxu0
    %3719 = vmatprep.mubr.f32.mxu0 0.0
    %3720 = vmatmul.mubr.f32.gmra.mxu0 %v610
    %v3721 = vpop.f32.mrf.mxu0
    %v3722 = vadd.f32 0.0, %v3721
    %v3723 = vpop.f32.mrf.mxu0
    %3724 = vmatprep.mubr.f32.mxu0 0.0
    %3725 = vmatmul.mubr.f32.gmra.mxu0 %v611
    %v3726 = vpop.f32.mrf.mxu0
    %v3727 = vadd.f32 0.0, %v3726
    %v3728 = vpop.f32.mrf.mxu0
    %3729 = vmatprep.mubr.f32.mxu0 0.0
    %3730 = vmatmul.mubr.f32.gmra.mxu0 %v612
    %v3731 = vpop.f32.mrf.mxu0
    %v3732 = vadd.f32 0.0, %v3731
    %v3733 = vpop.f32.mrf.mxu0
    %3734 = vmatprep.mubr.f32.mxu0 0.0
    %3735 = vmatmul.mubr.f32.gmra.mxu0 %v613
    %v3736 = vpop.f32.mrf.mxu0
    %v3737 = vadd.f32 0.0, %v3736
    %v3738 = vpop.f32.mrf.mxu0
    %3739 = vmatprep.mubr.f32.mxu0 0.0
    %3740 = vmatmul.mubr.f32.gmra.mxu0 %v614
    %v3741 = vpop.f32.mrf.mxu0
    %v3742 = vadd.f32 0.0, %v3741
    %v3743 = vpop.f32.mrf.mxu0
    %3744 = vmatprep.mubr.f32.mxu0 0.0
    %3745 = vmatmul.mubr.f32.gmra.mxu0 %v615
    %v3746 = vpop.f32.mrf.mxu0
    %v3747 = vadd.f32 0.0, %v3746
    %v3748 = vpop.f32.mrf.mxu0
    %3749 = vmatprep.mubr.f32.mxu0 0.0
    %3750 = vmatmul.mubr.f32.gmra.mxu0 %v616
    %v3751 = vpop.f32.mrf.mxu0
    %v3752 = vadd.f32 0.0, %v3751
    %v3753 = vpop.f32.mrf.mxu0
    %3754 = vmatprep.mubr.f32.mxu0 0.0
    %3755 = vmatmul.mubr.f32.gmra.mxu0 %v617
    %v3756 = vpop.f32.mrf.mxu0
    %v3757 = vadd.f32 0.0, %v3756
    %v3758 = vpop.f32.mrf.mxu0
    %3759 = vmatprep.mubr.f32.mxu0 0.0
    %3760 = vmatmul.mubr.f32.gmra.mxu0 %v618
    %v3761 = vpop.f32.mrf.mxu0
    %v3762 = vadd.f32 0.0, %v3761
    %v3763 = vpop.f32.mrf.mxu0
    %3764 = vmatprep.mubr.f32.mxu0 0.0
    %3765 = vmatmul.mubr.f32.gmra.mxu0 %v619
    %v3766 = vpop.f32.mrf.mxu0
    %v3767 = vadd.f32 0.0, %v3766
    %v3768 = vpop.f32.mrf.mxu0
    %3769 = vmatprep.mubr.f32.mxu0 0.0
    %3770 = vmatmul.mubr.f32.gmra.mxu0 %v620
    %v3771 = vpop.f32.mrf.mxu0
    %v3772 = vadd.f32 0.0, %v3771
    %v3773 = vpop.f32.mrf.mxu0
    %3774 = vmatprep.mubr.f32.mxu0 0.0
    %3775 = vmatmul.mubr.f32.gmra.mxu0 %v621
    %v3776 = vpop.f32.mrf.mxu0
    %v3777 = vadd.f32 0.0, %v3776
    %v3778 = vpop.f32.mrf.mxu0
    %3779 = vmatprep.mubr.f32.mxu0 0.0
    %3780 = vmatmul.mubr.f32.gmra.mxu0 %v622
    %v3781 = vpop.f32.mrf.mxu0
    %v3782 = vadd.f32 0.0, %v3781
    %v3783 = vpop.f32.mrf.mxu0
    %3784 = vmatprep.mubr.f32.mxu0 0.0
    %3785 = vmatmul.mubr.f32.gmra.mxu0 %v623
    %v3786 = vpop.f32.mrf.mxu0
    %v3787 = vadd.f32 0.0, %v3786
    %v3788 = vpop.f32.mrf.mxu0
    %3789 = vmatprep.mubr.f32.mxu0 0.0
    %3790 = vmatmul.mubr.f32.gmra.mxu0 %v624
    %v3791 = vpop.f32.mrf.mxu0
    %v3792 = vadd.f32 0.0, %v3791
    %v3793 = vpop.f32.mrf.mxu0
    %3794 = vmatprep.mubr.f32.mxu0 0.0
    %3795 = vmatmul.mubr.f32.gmra.mxu0 %v625
    %v3796 = vpop.f32.mrf.mxu0
    %v3797 = vadd.f32 0.0, %v3796
    %v3798 = vpop.f32.mrf.mxu0
    %3799 = vmatprep.mubr.f32.mxu0 0.0
    %3800 = vmatmul.mubr.f32.gmra.mxu0 %v626
    %v3801 = vpop.f32.mrf.mxu0
    %v3802 = vadd.f32 0.0, %v3801
    %v3803 = vpop.f32.mrf.mxu0
    %3804 = vmatprep.mubr.f32.mxu0 0.0
    %3805 = vmatmul.mubr.f32.gmra.mxu0 %v627
    %v3806 = vpop.f32.mrf.mxu0
    %v3807 = vadd.f32 0.0, %v3806
    %v3808 = vpop.f32.mrf.mxu0
    %3809 = vmatprep.mubr.f32.mxu0 0.0
    %3810 = vmatmul.mubr.f32.gmra.mxu0 %v628
    %v3811 = vpop.f32.mrf.mxu0
    %v3812 = vadd.f32 0.0, %v3811
    %v3813 = vpop.f32.mrf.mxu0
    %3814 = vmatprep.mubr.f32.mxu0 0.0
    %3815 = vmatmul.mubr.f32.gmra.mxu0 %v629
    %v3816 = vpop.f32.mrf.mxu0
    %v3817 = vadd.f32 0.0, %v3816
    %v3818 = vpop.f32.mrf.mxu0
    %3819 = vmatprep.mubr.f32.mxu0 0.0
    %3820 = vmatmul.mubr.f32.gmra.mxu0 %v630
    %v3821 = vpop.f32.mrf.mxu0
    %v3822 = vadd.f32 0.0, %v3821
    %v3823 = vpop.f32.mrf.mxu0
    %3824 = vmatprep.mubr.f32.mxu0 0.0
    %3825 = vmatmul.mubr.f32.gmra.mxu0 %v631
    %v3826 = vpop.f32.mrf.mxu0
    %v3827 = vadd.f32 0.0, %v3826
    %v3828 = vpop.f32.mrf.mxu0
    %3829 = vmatprep.mubr.f32.mxu0 0.0
    %3830 = vmatmul.mubr.f32.gmra.mxu0 %v632
    %v3831 = vpop.f32.mrf.mxu0
    %v3832 = vadd.f32 0.0, %v3831
    %v3833 = vpop.f32.mrf.mxu0
    %3834 = vmatprep.mubr.f32.mxu0 0.0
    %3835 = vmatmul.mubr.f32.gmra.mxu0 %v633
    %v3836 = vpop.f32.mrf.mxu0
    %v3837 = vadd.f32 0.0, %v3836
    %v3838 = vpop.f32.mrf.mxu0
    %3839 = vmatprep.mubr.f32.mxu0 0.0
    %3840 = vmatmul.mubr.f32.gmra.mxu0 %v634
    %v3841 = vpop.f32.mrf.mxu0
    %v3842 = vadd.f32 0.0, %v3841
    %v3843 = vpop.f32.mrf.mxu0
    %3844 = vmatprep.mubr.f32.mxu0 0.0
    %3845 = vmatmul.mubr.f32.gmra.mxu0 %v635
    %v3846 = vpop.f32.mrf.mxu0
    %v3847 = vadd.f32 0.0, %v3846
    %v3848 = vpop.f32.mrf.mxu0
    %3849 = vmatprep.mubr.f32.mxu0 0.0
    %3850 = vmatmul.mubr.f32.gmra.mxu0 %v636
    %v3851 = vpop.f32.mrf.mxu0
    %v3852 = vadd.f32 0.0, %v3851
    %v3853 = vpop.f32.mrf.mxu0
    %3854 = vdwg.mxu0
    %3871 = vrot.lane.b32.xlu0 %v3777, 32
    %v3872 = vpop.permute.xlu0 %3871
    %3873 = vrot.lane.b32.xlu0 %v3782, 32
    %v3874 = vpop.permute.xlu0 %3873
    %3875 = vrot.lane.b32.xlu0 %v3787, 32
    %v3876 = vpop.permute.xlu0 %3875
    %3877 = vrot.lane.b32.xlu0 %v3792, 32
    %v3878 = vpop.permute.xlu0 %3877
    %3879 = vrot.lane.b32.xlu0 %v3797, 32
    %v3880 = vpop.permute.xlu0 %3879
    %3881 = vrot.lane.b32.xlu0 %v3802, 32
    %v3882 = vpop.permute.xlu0 %3881
    %3883 = vrot.lane.b32.xlu0 %v3807, 32
    %v3884 = vpop.permute.xlu0 %3883
    %3885 = vrot.lane.b32.xlu0 %v3812, 32
    %v3886 = vpop.permute.xlu0 %3885
    %3887 = vrot.lane.b32.xlu0 %v3817, 32
    %v3888 = vpop.permute.xlu0 %3887
    %3889 = vrot.lane.b32.xlu0 %v3822, 32
    %v3890 = vpop.permute.xlu0 %3889
    %3891 = vrot.lane.b32.xlu0 %v3827, 32
    %v3892 = vpop.permute.xlu0 %3891
    %3893 = vrot.lane.b32.xlu0 %v3832, 32
    %v3894 = vpop.permute.xlu0 %3893
    %3895 = vrot.lane.b32.xlu0 %v3837, 32
    %v3896 = vpop.permute.xlu0 %3895
    %3897 = vrot.lane.b32.xlu0 %v3842, 32
    %v3898 = vpop.permute.xlu0 %3897
    %3899 = vrot.lane.b32.xlu0 %v3847, 32
    %v3900 = vpop.permute.xlu0 %3899
    %3901 = vrot.lane.b32.xlu0 %v3852, 32
    %v3902 = vpop.permute.xlu0 %3901
    %v3919 = vsel %vm926, %v3697, %v3872
    %v3920 = vsel %vm926, %v3702, %v3874
    %v3921 = vsel %vm926, %v3707, %v3876
    %v3922 = vsel %vm926, %v3712, %v3878
    %v3923 = vsel %vm926, %v3717, %v3880
    %v3924 = vsel %vm926, %v3722, %v3882
    %v3925 = vsel %vm926, %v3727, %v3884
    %v3926 = vsel %vm926, %v3732, %v3886
    %v3927 = vsel %vm926, %v3737, %v3888
    %v3928 = vsel %vm926, %v3742, %v3890
    %v3929 = vsel %vm926, %v3747, %v3892
    %v3930 = vsel %vm926, %v3752, %v3894
    %v3931 = vsel %vm926, %v3757, %v3896
    %v3932 = vsel %vm926, %v3762, %v3898
    %v3933 = vsel %vm926, %v3767, %v3900
    %v3934 = vsel %vm926, %v3772, %v3902
    %s3935 = scalar_lea.vmem %s5, 128
    %v3936 = vld [vmem:[%s3935] sm:$0xff]
    %v3937 = vld [vmem:[%s3935 + $0x8] sm:$0xff]
    %v3938 = vld [vmem:[%s3935 + $0x10] sm:$0xff]
    %v3939 = vld [vmem:[%s3935 + $0x18] sm:$0xff]
    %v3940 = vld [vmem:[%s3935 + $0x20] sm:$0xff]
    %v3941 = vld [vmem:[%s3935 + $0x28] sm:$0xff]
    %v3942 = vld [vmem:[%s3935 + $0x30] sm:$0xff]
    %v3943 = vld [vmem:[%s3935 + $0x38] sm:$0xff]
    %v3945 = vsel %vm411, %v3919, 0
    %v3948 = vsel %vm411, %v3920, 0
    %v3951 = vsel %vm411, %v3921, 0
    %v3954 = vsel %vm411, %v3922, 0
    %v3957 = vsel %vm411, %v3923, 0
    %v3960 = vsel %vm411, %v3924, 0
    %v3963 = vsel %vm411, %v3925, 0
    %v3966 = vsel %vm411, %v3926, 0
    %v3969 = vsel %vm411, %v3927, 0
    %v3972 = vsel %vm411, %v3928, 0
    %v3975 = vsel %vm411, %v3929, 0
    %v3978 = vsel %vm411, %v3930, 0
    %v3981 = vsel %vm411, %v3931, 0
    %v3984 = vsel %vm411, %v3932, 0
    %v3987 = vsel %vm411, %v3933, 0
    %v3990 = vsel %vm411, %v3934, 0
    %3992 = vmatprep.subr.mxu0 0.0
    %3993 = vmatpush1.msra.mxu0 0.0
    %3994 = vmatprep.subr.mxu0 0.0
    %3995 = vmatpush1.msra.mxu0 0.0
    %3996 = vmatprep.subr.mxu0 0.0
    %3997 = vmatpush1.msra.mxu0 0.0
    %3998 = vmatprep.subr.mxu0 0.0
    %3999 = vmatpush1.msra.mxu0 0.0
    %4000 = vmatprep.subr.mxu0 0.0
    %4001 = vmatpush1.msra.mxu0 0.0
    %4002 = vmatprep.subr.mxu0 0.0
    %4003 = vmatpush1.msra.mxu0 0.0
    %4004 = vmatprep.subr.mxu0 0.0
    %4005 = vmatpush1.msra.mxu0 0.0
    %4006 = vmatprep.subr.mxu0 0.0
    %4007 = vmatpush1.msra.mxu0 0.0
    %4008 = vmatprep.subr.mxu0 0.0
    %4009 = vmatpush1.msra.mxu0 %v3943
    %4010 = vmatprep.subr.mxu0 0.0
    %4011 = vmatpush1.msra.mxu0 %v3942
    %4012 = vmatprep.subr.mxu0 0.0
    %4013 = vmatpush1.msra.mxu0 %v3941
    %4014 = vmatprep.subr.mxu0 0.0
    %4015 = vmatpush1.msra.mxu0 %v3940
    %4016 = vmatprep.subr.mxu0 0.0
    %4017 = vmatpush1.msra.mxu0 %v3939
    %4018 = vmatprep.subr.mxu0 0.0
    %4019 = vmatpush1.msra.mxu0 %v3938
    %4020 = vmatprep.subr.mxu0 0.0
    %4021 = vmatpush1.msra.mxu0 %v3937
    %4022 = vmatprep.subr.mxu0 0.0
    %4023 = vmatpush1.msra.mxu0 %v3936
    %4024 = vmatprep.subr.mxu0 0.0
    %4025 = vmatpush2.msra.mxu0 0.0
    %4026 = vmatprep.subr.mxu0 0.0
    %4027 = vmatpush2.msra.mxu0 0.0
    %4028 = vmatprep.subr.mxu0 0.0
    %4029 = vmatpush2.msra.mxu0 0.0
    %4030 = vmatprep.subr.mxu0 0.0
    %4031 = vmatpush2.msra.mxu0 0.0
    %4032 = vmatprep.subr.mxu0 0.0
    %4033 = vmatpush2.msra.mxu0 0.0
    %4034 = vmatprep.subr.mxu0 0.0
    %4035 = vmatpush2.msra.mxu0 0.0
    %4036 = vmatprep.subr.mxu0 0.0
    %4037 = vmatpush2.msra.mxu0 0.0
    %4038 = vmatprep.subr.mxu0 0.0
    %4039 = vmatpush2.msra.mxu0 0.0
    %4040 = vmatprep.subr.mxu0 0.0
    %4041 = vmatpush2.msra.mxu0 0.0
    %4042 = vmatprep.subr.mxu0 0.0
    %4043 = vmatpush2.msra.mxu0 0.0
    %4044 = vmatprep.subr.mxu0 0.0
    %4045 = vmatpush2.msra.mxu0 0.0
    %4046 = vmatprep.subr.mxu0 0.0
    %4047 = vmatpush2.msra.mxu0 0.0
    %4048 = vmatprep.subr.mxu0 0.0
    %4049 = vmatpush2.msra.mxu0 0.0
    %4050 = vmatprep.subr.mxu0 0.0
    %4051 = vmatpush2.msra.mxu0 0.0
    %4052 = vmatprep.subr.mxu0 0.0
    %4053 = vmatpush2.msra.mxu0 0.0
    %4054 = vmatprep.subr.mxu0 0.0
    %4055 = vmatpush2.msra.mxu0 0.0
    %4056 = vmatprep.mubr.f32.mxu0 0.0
    %4057 = vmatmul.mubr.f32.gmra.mxu0 %v3945
    %v4058 = vpop.f32.mrf.mxu0
    %v4059 = vadd.f32 0.0, %v4058
    %v4060 = vpop.f32.mrf.mxu0
    %4061 = vmatprep.mubr.f32.mxu0 0.0
    %4062 = vmatmul.mubr.f32.gmra.mxu0 %v3948
    %v4063 = vpop.f32.mrf.mxu0
    %v4064 = vadd.f32 0.0, %v4063
    %v4065 = vpop.f32.mrf.mxu0
    %4066 = vmatprep.mubr.f32.mxu0 0.0
    %4067 = vmatmul.mubr.f32.gmra.mxu0 %v3951
    %v4068 = vpop.f32.mrf.mxu0
    %v4069 = vadd.f32 0.0, %v4068
    %v4070 = vpop.f32.mrf.mxu0
    %4071 = vmatprep.mubr.f32.mxu0 0.0
    %4072 = vmatmul.mubr.f32.gmra.mxu0 %v3954
    %v4073 = vpop.f32.mrf.mxu0
    %v4074 = vadd.f32 0.0, %v4073
    %v4075 = vpop.f32.mrf.mxu0
    %4076 = vmatprep.mubr.f32.mxu0 0.0
    %4077 = vmatmul.mubr.f32.gmra.mxu0 %v3957
    %v4078 = vpop.f32.mrf.mxu0
    %v4079 = vadd.f32 0.0, %v4078
    %v4080 = vpop.f32.mrf.mxu0
    %4081 = vmatprep.mubr.f32.mxu0 0.0
    %4082 = vmatmul.mubr.f32.gmra.mxu0 %v3960
    %v4083 = vpop.f32.mrf.mxu0
    %v4084 = vadd.f32 0.0, %v4083
    %v4085 = vpop.f32.mrf.mxu0
    %4086 = vmatprep.mubr.f32.mxu0 0.0
    %4087 = vmatmul.mubr.f32.gmra.mxu0 %v3963
    %v4088 = vpop.f32.mrf.mxu0
    %v4089 = vadd.f32 0.0, %v4088
    %v4090 = vpop.f32.mrf.mxu0
    %4091 = vmatprep.mubr.f32.mxu0 0.0
    %4092 = vmatmul.mubr.f32.gmra.mxu0 %v3966
    %v4093 = vpop.f32.mrf.mxu0
    %v4094 = vadd.f32 0.0, %v4093
    %v4095 = vpop.f32.mrf.mxu0
    %4096 = vmatprep.mubr.f32.mxu0 0.0
    %4097 = vmatmul.mubr.f32.gmra.mxu0 %v3969
    %v4098 = vpop.f32.mrf.mxu0
    %v4099 = vadd.f32 0.0, %v4098
    %v4100 = vpop.f32.mrf.mxu0
    %4101 = vmatprep.mubr.f32.mxu0 0.0
    %4102 = vmatmul.mubr.f32.gmra.mxu0 %v3972
    %v4103 = vpop.f32.mrf.mxu0
    %v4104 = vadd.f32 0.0, %v4103
    %v4105 = vpop.f32.mrf.mxu0
    %4106 = vmatprep.mubr.f32.mxu0 0.0
    %4107 = vmatmul.mubr.f32.gmra.mxu0 %v3975
    %v4108 = vpop.f32.mrf.mxu0
    %v4109 = vadd.f32 0.0, %v4108
    %v4110 = vpop.f32.mrf.mxu0
    %4111 = vmatprep.mubr.f32.mxu0 0.0
    %4112 = vmatmul.mubr.f32.gmra.mxu0 %v3978
    %v4113 = vpop.f32.mrf.mxu0
    %v4114 = vadd.f32 0.0, %v4113
    %v4115 = vpop.f32.mrf.mxu0
    %4116 = vmatprep.mubr.f32.mxu0 0.0
    %4117 = vmatmul.mubr.f32.gmra.mxu0 %v3981
    %v4118 = vpop.f32.mrf.mxu0
    %v4119 = vadd.f32 0.0, %v4118
    %v4120 = vpop.f32.mrf.mxu0
    %4121 = vmatprep.mubr.f32.mxu0 0.0
    %4122 = vmatmul.mubr.f32.gmra.mxu0 %v3984
    %v4123 = vpop.f32.mrf.mxu0
    %v4124 = vadd.f32 0.0, %v4123
    %v4125 = vpop.f32.mrf.mxu0
    %4126 = vmatprep.mubr.f32.mxu0 0.0
    %4127 = vmatmul.mubr.f32.gmra.mxu0 %v3987
    %v4128 = vpop.f32.mrf.mxu0
    %v4129 = vadd.f32 0.0, %v4128
    %v4130 = vpop.f32.mrf.mxu0
    %4131 = vmatprep.mubr.f32.mxu0 0.0
    %4132 = vmatmul.mubr.f32.gmra.mxu0 %v3990
    %v4133 = vpop.f32.mrf.mxu0
    %v4134 = vadd.f32 0.0, %v4133
    %v4135 = vpop.f32.mrf.mxu0
    %4136 = vdwg.mxu0
    %v4137 = vmul.f32 %v3919, %v4059
    %v4138 = vmul.f32 %v3920, %v4064
    %v4139 = vmul.f32 %v3921, %v4069
    %v4140 = vmul.f32 %v3922, %v4074
    %v4141 = vmul.f32 %v3923, %v4079
    %v4142 = vmul.f32 %v3924, %v4084
    %v4143 = vmul.f32 %v3925, %v4089
    %v4144 = vmul.f32 %v3926, %v4094
    %v4145 = vmul.f32 %v3927, %v4099
    %v4146 = vmul.f32 %v3928, %v4104
    %v4147 = vmul.f32 %v3929, %v4109
    %v4148 = vmul.f32 %v3930, %v4114
    %v4149 = vmul.f32 %v3931, %v4119
    %v4150 = vmul.f32 %v3932, %v4124
    %v4151 = vmul.f32 %v3933, %v4129
    %v4152 = vmul.f32 %v3934, %v4134
    %4169 = vrot.lane.b32.xlu0 %v4137, 96
    %v4170 = vpop.permute.xlu0 %4169
    %4171 = vrot.lane.b32.xlu0 %v4138, 96
    %v4172 = vpop.permute.xlu0 %4171
    %4173 = vrot.lane.b32.xlu0 %v4139, 96
    %v4174 = vpop.permute.xlu0 %4173
    %4175 = vrot.lane.b32.xlu0 %v4140, 96
    %v4176 = vpop.permute.xlu0 %4175
    %4177 = vrot.lane.b32.xlu0 %v4141, 96
    %v4178 = vpop.permute.xlu0 %4177
    %4179 = vrot.lane.b32.xlu0 %v4142, 96
    %v4180 = vpop.permute.xlu0 %4179
    %4181 = vrot.lane.b32.xlu0 %v4143, 96
    %v4182 = vpop.permute.xlu0 %4181
    %4183 = vrot.lane.b32.xlu0 %v4144, 96
    %v4184 = vpop.permute.xlu0 %4183
    %4185 = vrot.lane.b32.xlu0 %v4145, 96
    %v4186 = vpop.permute.xlu0 %4185
    %4187 = vrot.lane.b32.xlu0 %v4146, 96
    %v4188 = vpop.permute.xlu0 %4187
    %4189 = vrot.lane.b32.xlu0 %v4147, 96
    %v4190 = vpop.permute.xlu0 %4189
    %4191 = vrot.lane.b32.xlu0 %v4148, 96
    %v4192 = vpop.permute.xlu0 %4191
    %4193 = vrot.lane.b32.xlu0 %v4149, 96
    %v4194 = vpop.permute.xlu0 %4193
    %4195 = vrot.lane.b32.xlu0 %v4150, 96
    %v4196 = vpop.permute.xlu0 %4195
    %4197 = vrot.lane.b32.xlu0 %v4151, 96
    %v4198 = vpop.permute.xlu0 %4197
    %4199 = vrot.lane.b32.xlu0 %v4152, 96
    %v4200 = vpop.permute.xlu0 %4199
    %v4217 = vadd.f32 %v4137, %v4170
    %v4218 = vadd.f32 %v4138, %v4172
    %v4219 = vadd.f32 %v4139, %v4174
    %v4220 = vadd.f32 %v4140, %v4176
    %v4221 = vadd.f32 %v4141, %v4178
    %v4222 = vadd.f32 %v4142, %v4180
    %v4223 = vadd.f32 %v4143, %v4182
    %v4224 = vadd.f32 %v4144, %v4184
    %v4225 = vadd.f32 %v4145, %v4186
    %v4226 = vadd.f32 %v4146, %v4188
    %v4227 = vadd.f32 %v4147, %v4190
    %v4228 = vadd.f32 %v4148, %v4192
    %v4229 = vadd.f32 %v4149, %v4194
    %v4230 = vadd.f32 %v4150, %v4196
    %v4231 = vadd.f32 %v4151, %v4198
    %v4232 = vadd.f32 %v4152, %v4200
    %v4233 = vtanh.pop %v4217
    %v4234 = vtanh.pop %v4218
    %v4235 = vtanh.pop %v4219
    %v4236 = vtanh.pop %v4220
    %v4237 = vtanh.pop %v4221
    %v4238 = vtanh.pop %v4222
    %v4239 = vtanh.pop %v4223
    %v4240 = vtanh.pop %v4224
    %v4241 = vtanh.pop %v4225
    %v4242 = vtanh.pop %v4226
    %v4243 = vtanh.pop %v4227
    %v4244 = vtanh.pop %v4228
    %v4245 = vtanh.pop %v4229
    %v4246 = vtanh.pop %v4230
    %v4247 = vtanh.pop %v4231
    %v4248 = vtanh.pop %v4232
    %4265 = vrot.lane.b32.xlu0 %v3552, 32
    %v4266 = vpop.permute.xlu0 %4265
    %4267 = vrot.lane.b32.xlu0 %v3557, 32
    %v4268 = vpop.permute.xlu0 %4267
    %4269 = vrot.lane.b32.xlu0 %v3562, 32
    %v4270 = vpop.permute.xlu0 %4269
    %4271 = vrot.lane.b32.xlu0 %v3567, 32
    %v4272 = vpop.permute.xlu0 %4271
    %4273 = vrot.lane.b32.xlu0 %v3572, 32
    %v4274 = vpop.permute.xlu0 %4273
    %4275 = vrot.lane.b32.xlu0 %v3577, 32
    %v4276 = vpop.permute.xlu0 %4275
    %4277 = vrot.lane.b32.xlu0 %v3582, 32
    %v4278 = vpop.permute.xlu0 %4277
    %4279 = vrot.lane.b32.xlu0 %v3587, 32
    %v4280 = vpop.permute.xlu0 %4279
    %4281 = vrot.lane.b32.xlu0 %v3592, 32
    %v4282 = vpop.permute.xlu0 %4281
    %4283 = vrot.lane.b32.xlu0 %v3597, 32
    %v4284 = vpop.permute.xlu0 %4283
    %4285 = vrot.lane.b32.xlu0 %v3602, 32
    %v4286 = vpop.permute.xlu0 %4285
    %4287 = vrot.lane.b32.xlu0 %v3607, 32
    %v4288 = vpop.permute.xlu0 %4287
    %4289 = vrot.lane.b32.xlu0 %v3612, 32
    %v4290 = vpop.permute.xlu0 %4289
    %4291 = vrot.lane.b32.xlu0 %v3617, 32
    %v4292 = vpop.permute.xlu0 %4291
    %4293 = vrot.lane.b32.xlu0 %v3622, 32
    %v4294 = vpop.permute.xlu0 %4293
    %4295 = vrot.lane.b32.xlu0 %v3627, 32
    %v4296 = vpop.permute.xlu0 %4295
    %4329 = vrot.lane.b32.xlu0 %v4233, 64
    %v4330 = vpop.permute.xlu0 %4329
    %4331 = vrot.lane.b32.xlu0 %v4234, 64
    %v4332 = vpop.permute.xlu0 %4331
    %4333 = vrot.lane.b32.xlu0 %v4235, 64
    %v4334 = vpop.permute.xlu0 %4333
    %4335 = vrot.lane.b32.xlu0 %v4236, 64
    %v4336 = vpop.permute.xlu0 %4335
    %4337 = vrot.lane.b32.xlu0 %v4237, 64
    %v4338 = vpop.permute.xlu0 %4337
    %4339 = vrot.lane.b32.xlu0 %v4238, 64
    %v4340 = vpop.permute.xlu0 %4339
    %4341 = vrot.lane.b32.xlu0 %v4239, 64
    %v4342 = vpop.permute.xlu0 %4341
    %4343 = vrot.lane.b32.xlu0 %v4240, 64
    %v4344 = vpop.permute.xlu0 %4343
    %4345 = vrot.lane.b32.xlu0 %v4241, 64
    %v4346 = vpop.permute.xlu0 %4345
    %4347 = vrot.lane.b32.xlu0 %v4242, 64
    %v4348 = vpop.permute.xlu0 %4347
    %4349 = vrot.lane.b32.xlu0 %v4243, 64
    %v4350 = vpop.permute.xlu0 %4349
    %4351 = vrot.lane.b32.xlu0 %v4244, 64
    %v4352 = vpop.permute.xlu0 %4351
    %4353 = vrot.lane.b32.xlu0 %v4245, 64
    %v4354 = vpop.permute.xlu0 %4353
    %4355 = vrot.lane.b32.xlu0 %v4246, 64
    %v4356 = vpop.permute.xlu0 %4355
    %4357 = vrot.lane.b32.xlu0 %v4247, 64
    %v4358 = vpop.permute.xlu0 %4357
    %4359 = vrot.lane.b32.xlu0 %v4248, 64
    %v4360 = vpop.permute.xlu0 %4359
    %v4377 = vsel %vm926, %v3347, %v4266
    %v4378 = vsel %vm926, %v3348, %v4268
    %v4379 = vsel %vm926, %v3349, %v4270
    %v4380 = vsel %vm926, %v3350, %v4272
    %v4381 = vsel %vm926, %v3351, %v4274
    %v4382 = vsel %vm926, %v3352, %v4276
    %v4383 = vsel %vm926, %v3353, %v4278
    %v4384 = vsel %vm926, %v3354, %v4280
    %v4385 = vsel %vm926, %v3355, %v4282
    %v4386 = vsel %vm926, %v3356, %v4284
    %v4387 = vsel %vm926, %v3357, %v4286
    %v4388 = vsel %vm926, %v3358, %v4288
    %v4389 = vsel %vm926, %v3359, %v4290
    %v4390 = vsel %vm926, %v3360, %v4292
    %v4391 = vsel %vm926, %v3361, %v4294
    %v4392 = vsel %vm926, %v3362, %v4296
    %v4393 = vsel %vm411, %v4377, %v4330
    %v4394 = vsel %vm411, %v4378, %v4332
    %v4395 = vsel %vm411, %v4379, %v4334
    %v4396 = vsel %vm411, %v4380, %v4336
    %v4397 = vsel %vm411, %v4381, %v4338
    %v4398 = vsel %vm411, %v4382, %v4340
    %v4399 = vsel %vm411, %v4383, %v4342
    %v4400 = vsel %vm411, %v4384, %v4344
    %v4401 = vsel %vm411, %v4385, %v4346
    %v4402 = vsel %vm411, %v4386, %v4348
    %v4403 = vsel %vm411, %v4387, %v4350
    %v4404 = vsel %vm411, %v4388, %v4352
    %v4405 = vsel %vm411, %v4389, %v4354
    %v4406 = vsel %vm411, %v4390, %v4356
    %v4407 = vsel %vm411, %v4391, %v4358
    %v4408 = vsel %vm411, %v4392, %v4360
    %s4409 = scalar_lea.vmem %s8, 192
    %v4410 = vld [vmem:[%s4409] sm:$0xff]
    %v4411 = vld [vmem:[%s4409 + $0x8] sm:$0xff]
    %v4412 = vld [vmem:[%s4409 + $0x10] sm:$0xff]
    %v4413 = vld [vmem:[%s4409 + $0x18] sm:$0xff]
    %v4414 = vld [vmem:[%s4409 + $0x20] sm:$0xff]
    %v4415 = vld [vmem:[%s4409 + $0x28] sm:$0xff]
    %v4416 = vld [vmem:[%s4409 + $0x30] sm:$0xff]
    %v4417 = vld [vmem:[%s4409 + $0x38] sm:$0xff]
    %v4418 = vld [vmem:[%s4409 + $0x40] sm:$0xff]
    %v4419 = vld [vmem:[%s4409 + $0x48] sm:$0xff]
    %v4420 = vld [vmem:[%s4409 + $0x50] sm:$0xff]
    %v4421 = vld [vmem:[%s4409 + $0x58] sm:$0xff]
    %s4422 = scalar_lea.vmem %s9, 2
    %v4423 = vld [vmem:[%s4422] sm:$0x1]
    %v4425 = vlaneseq
    %v4426 = vshrl.u32 %v4425, 7
    %v4427 = vsub.s32 0, %v4426
    %v4428 = vrot.slane %v4423, %v4427
    %v4431 = vsel %vm1435, %v4393, 0
    %v4434 = vsel %vm1435, %v4394, 0
    %v4437 = vsel %vm1435, %v4395, 0
    %v4440 = vsel %vm1435, %v4396, 0
    %v4443 = vsel %vm1435, %v4397, 0
    %v4446 = vsel %vm1435, %v4398, 0
    %v4449 = vsel %vm1435, %v4399, 0
    %v4452 = vsel %vm1435, %v4400, 0
    %v4455 = vsel %vm1435, %v4401, 0
    %v4458 = vsel %vm1435, %v4402, 0
    %v4461 = vsel %vm1435, %v4403, 0
    %v4464 = vsel %vm1435, %v4404, 0
    %v4467 = vsel %vm1435, %v4405, 0
    %v4470 = vsel %vm1435, %v4406, 0
    %v4473 = vsel %vm1435, %v4407, 0
    %v4476 = vsel %vm1435, %v4408, 0
    %4478 = vmatprep.subr.mxu0 0.0
    %4479 = vmatpush1.msra.mxu0 0.0
    %4480 = vmatprep.subr.mxu0 0.0
    %4481 = vmatpush1.msra.mxu0 0.0
    %4482 = vmatprep.subr.mxu0 0.0
    %4483 = vmatpush1.msra.mxu0 0.0
    %4484 = vmatprep.subr.mxu0 0.0
    %4485 = vmatpush1.msra.mxu0 0.0
    %4486 = vmatprep.subr.mxu0 0.0
    %4487 = vmatpush1.msra.mxu0 %v4421
    %4488 = vmatprep.subr.mxu0 0.0
    %4489 = vmatpush1.msra.mxu0 %v4420
    %4490 = vmatprep.subr.mxu0 0.0
    %4491 = vmatpush1.msra.mxu0 %v4419
    %4492 = vmatprep.subr.mxu0 0.0
    %4493 = vmatpush1.msra.mxu0 %v4418
    %4494 = vmatprep.subr.mxu0 0.0
    %4495 = vmatpush1.msra.mxu0 %v4417
    %4496 = vmatprep.subr.mxu0 0.0
    %4497 = vmatpush1.msra.mxu0 %v4416
    %4498 = vmatprep.subr.mxu0 0.0
    %4499 = vmatpush1.msra.mxu0 %v4415
    %4500 = vmatprep.subr.mxu0 0.0
    %4501 = vmatpush1.msra.mxu0 %v4414
    %4502 = vmatprep.subr.mxu0 0.0
    %4503 = vmatpush1.msra.mxu0 %v4413
    %4504 = vmatprep.subr.mxu0 0.0
    %4505 = vmatpush1.msra.mxu0 %v4412
    %4506 = vmatprep.subr.mxu0 0.0
    %4507 = vmatpush1.msra.mxu0 %v4411
    %4508 = vmatprep.subr.mxu0 0.0
    %4509 = vmatpush1.msra.mxu0 %v4410
    %4510 = vmatprep.subr.mxu0 0.0
    %4511 = vmatpush2.msra.mxu0 0.0
    %4512 = vmatprep.subr.mxu0 0.0
    %4513 = vmatpush2.msra.mxu0 0.0
    %4514 = vmatprep.subr.mxu0 0.0
    %4515 = vmatpush2.msra.mxu0 0.0
    %4516 = vmatprep.subr.mxu0 0.0
    %4517 = vmatpush2.msra.mxu0 0.0
    %4518 = vmatprep.subr.mxu0 0.0
    %4519 = vmatpush2.msra.mxu0 0.0
    %4520 = vmatprep.subr.mxu0 0.0
    %4521 = vmatpush2.msra.mxu0 0.0
    %4522 = vmatprep.subr.mxu0 0.0
    %4523 = vmatpush2.msra.mxu0 0.0
    %4524 = vmatprep.subr.mxu0 0.0
    %4525 = vmatpush2.msra.mxu0 0.0
    %4526 = vmatprep.subr.mxu0 0.0
    %4527 = vmatpush2.msra.mxu0 0.0
    %4528 = vmatprep.subr.mxu0 0.0
    %4529 = vmatpush2.msra.mxu0 0.0
    %4530 = vmatprep.subr.mxu0 0.0
    %4531 = vmatpush2.msra.mxu0 0.0
    %4532 = vmatprep.subr.mxu0 0.0
    %4533 = vmatpush2.msra.mxu0 0.0
    %4534 = vmatprep.subr.mxu0 0.0
    %4535 = vmatpush2.msra.mxu0 0.0
    %4536 = vmatprep.subr.mxu0 0.0
    %4537 = vmatpush2.msra.mxu0 0.0
    %4538 = vmatprep.subr.mxu0 0.0
    %4539 = vmatpush2.msra.mxu0 0.0
    %4540 = vmatprep.subr.mxu0 0.0
    %4541 = vmatpush2.msra.mxu0 0.0
    %4542 = vmatprep.mubr.f32.mxu0 0.0
    %4543 = vmatmul.mubr.f32.gmra.mxu0 %v4431
    %v4544 = vpop.f32.mrf.mxu0
    %v4545 = vadd.f32 %v4428, %v4544
    %v4546 = vpop.f32.mrf.mxu0
    %4547 = vmatprep.mubr.f32.mxu0 0.0
    %4548 = vmatmul.mubr.f32.gmra.mxu0 %v4434
    %v4549 = vpop.f32.mrf.mxu0
    %v4550 = vadd.f32 %v4428, %v4549
    %v4551 = vpop.f32.mrf.mxu0
    %4552 = vmatprep.mubr.f32.mxu0 0.0
    %4553 = vmatmul.mubr.f32.gmra.mxu0 %v4437
    %v4554 = vpop.f32.mrf.mxu0
    %v4555 = vadd.f32 %v4428, %v4554
    %v4556 = vpop.f32.mrf.mxu0
    %4557 = vmatprep.mubr.f32.mxu0 0.0
    %4558 = vmatmul.mubr.f32.gmra.mxu0 %v4440
    %v4559 = vpop.f32.mrf.mxu0
    %v4560 = vadd.f32 %v4428, %v4559
    %v4561 = vpop.f32.mrf.mxu0
    %4562 = vmatprep.mubr.f32.mxu0 0.0
    %4563 = vmatmul.mubr.f32.gmra.mxu0 %v4443
    %v4564 = vpop.f32.mrf.mxu0
    %v4565 = vadd.f32 %v4428, %v4564
    %v4566 = vpop.f32.mrf.mxu0
    %4567 = vmatprep.mubr.f32.mxu0 0.0
    %4568 = vmatmul.mubr.f32.gmra.mxu0 %v4446
    %v4569 = vpop.f32.mrf.mxu0
    %v4570 = vadd.f32 %v4428, %v4569
    %v4571 = vpop.f32.mrf.mxu0
    %4572 = vmatprep.mubr.f32.mxu0 0.0
    %4573 = vmatmul.mubr.f32.gmra.mxu0 %v4449
    %v4574 = vpop.f32.mrf.mxu0
    %v4575 = vadd.f32 %v4428, %v4574
    %v4576 = vpop.f32.mrf.mxu0
    %4577 = vmatprep.mubr.f32.mxu0 0.0
    %4578 = vmatmul.mubr.f32.gmra.mxu0 %v4452
    %v4579 = vpop.f32.mrf.mxu0
    %v4580 = vadd.f32 %v4428, %v4579
    %v4581 = vpop.f32.mrf.mxu0
    %4582 = vmatprep.mubr.f32.mxu0 0.0
    %4583 = vmatmul.mubr.f32.gmra.mxu0 %v4455
    %v4584 = vpop.f32.mrf.mxu0
    %v4585 = vadd.f32 %v4428, %v4584
    %v4586 = vpop.f32.mrf.mxu0
    %4587 = vmatprep.mubr.f32.mxu0 0.0
    %4588 = vmatmul.mubr.f32.gmra.mxu0 %v4458
    %v4589 = vpop.f32.mrf.mxu0
    %v4590 = vadd.f32 %v4428, %v4589
    %v4591 = vpop.f32.mrf.mxu0
    %4592 = vmatprep.mubr.f32.mxu0 0.0
    %4593 = vmatmul.mubr.f32.gmra.mxu0 %v4461
    %v4594 = vpop.f32.mrf.mxu0
    %v4595 = vadd.f32 %v4428, %v4594
    %v4596 = vpop.f32.mrf.mxu0
    %4597 = vmatprep.mubr.f32.mxu0 0.0
    %4598 = vmatmul.mubr.f32.gmra.mxu0 %v4464
    %v4599 = vpop.f32.mrf.mxu0
    %v4600 = vadd.f32 %v4428, %v4599
    %v4601 = vpop.f32.mrf.mxu0
    %4602 = vmatprep.mubr.f32.mxu0 0.0
    %4603 = vmatmul.mubr.f32.gmra.mxu0 %v4467
    %v4604 = vpop.f32.mrf.mxu0
    %v4605 = vadd.f32 %v4428, %v4604
    %v4606 = vpop.f32.mrf.mxu0
    %4607 = vmatprep.mubr.f32.mxu0 0.0
    %4608 = vmatmul.mubr.f32.gmra.mxu0 %v4470
    %v4609 = vpop.f32.mrf.mxu0
    %v4610 = vadd.f32 %v4428, %v4609
    %v4611 = vpop.f32.mrf.mxu0
    %4612 = vmatprep.mubr.f32.mxu0 0.0
    %4613 = vmatmul.mubr.f32.gmra.mxu0 %v4473
    %v4614 = vpop.f32.mrf.mxu0
    %v4615 = vadd.f32 %v4428, %v4614
    %v4616 = vpop.f32.mrf.mxu0
    %4617 = vmatprep.mubr.f32.mxu0 0.0
    %4618 = vmatmul.mubr.f32.gmra.mxu0 %v4476
    %v4619 = vpop.f32.mrf.mxu0
    %v4620 = vadd.f32 %v4428, %v4619
    %v4621 = vpop.f32.mrf.mxu0
    %4622 = vdwg.mxu0
    %v4623 = vmax.f32 %v4545, 0.0
    %v4624 = vmax.f32 %v4550, 0.0
    %v4625 = vmax.f32 %v4555, 0.0
    %v4626 = vmax.f32 %v4560, 0.0
    %v4627 = vmax.f32 %v4565, 0.0
    %v4628 = vmax.f32 %v4570, 0.0
    %v4629 = vmax.f32 %v4575, 0.0
    %v4630 = vmax.f32 %v4580, 0.0
    %v4631 = vmax.f32 %v4585, 0.0
    %v4632 = vmax.f32 %v4590, 0.0
    %v4633 = vmax.f32 %v4595, 0.0
    %v4634 = vmax.f32 %v4600, 0.0
    %v4635 = vmax.f32 %v4605, 0.0
    %v4636 = vmax.f32 %v4610, 0.0
    %v4637 = vmax.f32 %v4615, 0.0
    %v4638 = vmax.f32 %v4620, 0.0
    %s4639 = scalar_lea.vmem %s10, 64
    %v4640 = vld [vmem:[%s4639] sm:$0xff]
    %v4641 = vld [vmem:[%s4639 + $0x8] sm:$0xff]
    %v4642 = vld [vmem:[%s4639 + $0x10] sm:$0xff]
    %v4643 = vld [vmem:[%s4639 + $0x18] sm:$0xff]
    %s4644 = scalar_lea.vmem %s11, 2
    %v4645 = vld [vmem:[%s4644] sm:$0x1]
    %v4647 = vlaneseq
    %v4648 = vshrl.u32 %v4647, 7
    %v4649 = vsub.s32 0, %v4648
    %v4650 = vrot.slane %v4645, %v4649
    %v4653 = vsel %vm926, %v4623, 0
    %v4656 = vsel %vm926, %v4624, 0
    %v4659 = vsel %vm926, %v4625, 0
    %v4662 = vsel %vm926, %v4626, 0
    %v4665 = vsel %vm926, %v4627, 0
    %v4668 = vsel %vm926, %v4628, 0
    %v4671 = vsel %vm926, %v4629, 0
    %v4674 = vsel %vm926, %v4630, 0
    %v4677 = vsel %vm926, %v4631, 0
    %v4680 = vsel %vm926, %v4632, 0
    %v4683 = vsel %vm926, %v4633, 0
    %v4686 = vsel %vm926, %v4634, 0
    %v4689 = vsel %vm926, %v4635, 0
    %v4692 = vsel %vm926, %v4636, 0
    %v4695 = vsel %vm926, %v4637, 0
    %v4698 = vsel %vm926, %v4638, 0
    %4700 = vmatprep.subr.mxu0 0.0
    %4701 = vmatpush1.msra.mxu0 0.0
    %4702 = vmatprep.subr.mxu0 0.0
    %4703 = vmatpush1.msra.mxu0 0.0
    %4704 = vmatprep.subr.mxu0 0.0
    %4705 = vmatpush1.msra.mxu0 0.0
    %4706 = vmatprep.subr.mxu0 0.0
    %4707 = vmatpush1.msra.mxu0 0.0
    %4708 = vmatprep.subr.mxu0 0.0
    %4709 = vmatpush1.msra.mxu0 0.0
    %4710 = vmatprep.subr.mxu0 0.0
    %4711 = vmatpush1.msra.mxu0 0.0
    %4712 = vmatprep.subr.mxu0 0.0
    %4713 = vmatpush1.msra.mxu0 0.0
    %4714 = vmatprep.subr.mxu0 0.0
    %4715 = vmatpush1.msra.mxu0 0.0
    %4716 = vmatprep.subr.mxu0 0.0
    %4717 = vmatpush1.msra.mxu0 0.0
    %4718 = vmatprep.subr.mxu0 0.0
    %4719 = vmatpush1.msra.mxu0 0.0
    %4720 = vmatprep.subr.mxu0 0.0
    %4721 = vmatpush1.msra.mxu0 0.0
    %4722 = vmatprep.subr.mxu0 0.0
    %4723 = vmatpush1.msra.mxu0 0.0
    %4724 = vmatprep.subr.mxu0 0.0
    %4725 = vmatpush1.msra.mxu0 %v4643
    %4726 = vmatprep.subr.mxu0 0.0
    %4727 = vmatpush1.msra.mxu0 %v4642
    %4728 = vmatprep.subr.mxu0 0.0
    %4729 = vmatpush1.msra.mxu0 %v4641
    %4730 = vmatprep.subr.mxu0 0.0
    %4731 = vmatpush1.msra.mxu0 %v4640
    %4732 = vmatprep.subr.mxu0 0.0
    %4733 = vmatpush2.msra.mxu0 0.0
    %4734 = vmatprep.subr.mxu0 0.0
    %4735 = vmatpush2.msra.mxu0 0.0
    %4736 = vmatprep.subr.mxu0 0.0
    %4737 = vmatpush2.msra.mxu0 0.0
    %4738 = vmatprep.subr.mxu0 0.0
    %4739 = vmatpush2.msra.mxu0 0.0
    %4740 = vmatprep.subr.mxu0 0.0
    %4741 = vmatpush2.msra.mxu0 0.0
    %4742 = vmatprep.subr.mxu0 0.0
    %4743 = vmatpush2.msra.mxu0 0.0
    %4744 = vmatprep.subr.mxu0 0.0
    %4745 = vmatpush2.msra.mxu0 0.0
    %4746 = vmatprep.subr.mxu0 0.0
    %4747 = vmatpush2.msra.mxu0 0.0
    %4748 = vmatprep.subr.mxu0 0.0
    %4749 = vmatpush2.msra.mxu0 0.0
    %4750 = vmatprep.subr.mxu0 0.0
    %4751 = vmatpush2.msra.mxu0 0.0
    %4752 = vmatprep.subr.mxu0 0.0
    %4753 = vmatpush2.msra.mxu0 0.0
    %4754 = vmatprep.subr.mxu0 0.0
    %4755 = vmatpush2.msra.mxu0 0.0
    %4756 = vmatprep.subr.mxu0 0.0
    %4757 = vmatpush2.msra.mxu0 0.0
    %4758 = vmatprep.subr.mxu0 0.0
    %4759 = vmatpush2.msra.mxu0 0.0
    %4760 = vmatprep.subr.mxu0 0.0
    %4761 = vmatpush2.msra.mxu0 0.0
    %4762 = vmatprep.subr.mxu0 0.0
    %4763 = vmatpush2.msra.mxu0 0.0
    %4764 = vmatprep.mubr.f32.mxu0 0.0
    %4765 = vmatmul.mubr.f32.gmra.mxu0 %v4653
    %v4766 = vpop.f32.mrf.mxu0
    %v4767 = vadd.f32 %v4650, %v4766
    %v4768 = vpop.f32.mrf.mxu0
    %4769 = vmatprep.mubr.f32.mxu0 0.0
    %4770 = vmatmul.mubr.f32.gmra.mxu0 %v4656
    %v4771 = vpop.f32.mrf.mxu0
    %v4772 = vadd.f32 %v4650, %v4771
    %v4773 = vpop.f32.mrf.mxu0
    %4774 = vmatprep.mubr.f32.mxu0 0.0
    %4775 = vmatmul.mubr.f32.gmra.mxu0 %v4659
    %v4776 = vpop.f32.mrf.mxu0
    %v4777 = vadd.f32 %v4650, %v4776
    %v4778 = vpop.f32.mrf.mxu0
    %4779 = vmatprep.mubr.f32.mxu0 0.0
    %4780 = vmatmul.mubr.f32.gmra.mxu0 %v4662
    %v4781 = vpop.f32.mrf.mxu0
    %v4782 = vadd.f32 %v4650, %v4781
    %v4783 = vpop.f32.mrf.mxu0
    %4784 = vmatprep.mubr.f32.mxu0 0.0
    %4785 = vmatmul.mubr.f32.gmra.mxu0 %v4665
    %v4786 = vpop.f32.mrf.mxu0
    %v4787 = vadd.f32 %v4650, %v4786
    %v4788 = vpop.f32.mrf.mxu0
    %4789 = vmatprep.mubr.f32.mxu0 0.0
    %4790 = vmatmul.mubr.f32.gmra.mxu0 %v4668
    %v4791 = vpop.f32.mrf.mxu0
    %v4792 = vadd.f32 %v4650, %v4791
    %v4793 = vpop.f32.mrf.mxu0
    %4794 = vmatprep.mubr.f32.mxu0 0.0
    %4795 = vmatmul.mubr.f32.gmra.mxu0 %v4671
    %v4796 = vpop.f32.mrf.mxu0
    %v4797 = vadd.f32 %v4650, %v4796
    %v4798 = vpop.f32.mrf.mxu0
    %4799 = vmatprep.mubr.f32.mxu0 0.0
    %4800 = vmatmul.mubr.f32.gmra.mxu0 %v4674
    %v4801 = vpop.f32.mrf.mxu0
    %v4802 = vadd.f32 %v4650, %v4801
    %v4803 = vpop.f32.mrf.mxu0
    %4804 = vmatprep.mubr.f32.mxu0 0.0
    %4805 = vmatmul.mubr.f32.gmra.mxu0 %v4677
    %v4806 = vpop.f32.mrf.mxu0
    %v4807 = vadd.f32 %v4650, %v4806
    %v4808 = vpop.f32.mrf.mxu0
    %4809 = vmatprep.mubr.f32.mxu0 0.0
    %4810 = vmatmul.mubr.f32.gmra.mxu0 %v4680
    %v4811 = vpop.f32.mrf.mxu0
    %v4812 = vadd.f32 %v4650, %v4811
    %v4813 = vpop.f32.mrf.mxu0
    %4814 = vmatprep.mubr.f32.mxu0 0.0
    %4815 = vmatmul.mubr.f32.gmra.mxu0 %v4683
    %v4816 = vpop.f32.mrf.mxu0
    %v4817 = vadd.f32 %v4650, %v4816
    %v4818 = vpop.f32.mrf.mxu0
    %4819 = vmatprep.mubr.f32.mxu0 0.0
    %4820 = vmatmul.mubr.f32.gmra.mxu0 %v4686
    %v4821 = vpop.f32.mrf.mxu0
    %v4822 = vadd.f32 %v4650, %v4821
    %v4823 = vpop.f32.mrf.mxu0
    %4824 = vmatprep.mubr.f32.mxu0 0.0
    %4825 = vmatmul.mubr.f32.gmra.mxu0 %v4689
    %v4826 = vpop.f32.mrf.mxu0
    %v4827 = vadd.f32 %v4650, %v4826
    %v4828 = vpop.f32.mrf.mxu0
    %4829 = vmatprep.mubr.f32.mxu0 0.0
    %4830 = vmatmul.mubr.f32.gmra.mxu0 %v4692
    %v4831 = vpop.f32.mrf.mxu0
    %v4832 = vadd.f32 %v4650, %v4831
    %v4833 = vpop.f32.mrf.mxu0
    %4834 = vmatprep.mubr.f32.mxu0 0.0
    %4835 = vmatmul.mubr.f32.gmra.mxu0 %v4695
    %v4836 = vpop.f32.mrf.mxu0
    %v4837 = vadd.f32 %v4650, %v4836
    %v4838 = vpop.f32.mrf.mxu0
    %4839 = vmatprep.mubr.f32.mxu0 0.0
    %4840 = vmatmul.mubr.f32.gmra.mxu0 %v4698
    %v4841 = vpop.f32.mrf.mxu0
    %v4842 = vadd.f32 %v4650, %v4841
    %v4843 = vpop.f32.mrf.mxu0
    %4844 = vdwg.mxu0
    %v4845 = vadd.f32 %v4767, %v3347
    %v4846 = vadd.f32 %v4772, %v3348
    %v4847 = vadd.f32 %v4777, %v3349
    %v4848 = vadd.f32 %v4782, %v3350
    %v4849 = vadd.f32 %v4787, %v3351
    %v4850 = vadd.f32 %v4792, %v3352
    %v4851 = vadd.f32 %v4797, %v3353
    %v4852 = vadd.f32 %v4802, %v3354
    %v4853 = vadd.f32 %v4807, %v3355
    %v4854 = vadd.f32 %v4812, %v3356
    %v4855 = vadd.f32 %v4817, %v3357
    %v4856 = vadd.f32 %v4822, %v3358
    %v4857 = vadd.f32 %v4827, %v3359
    %v4858 = vadd.f32 %v4832, %v3360
    %v4859 = vadd.f32 %v4837, %v3361
    %v4860 = vadd.f32 %v4842, %v3362
    %4861 = vmatprep.subr.mxu0 0.0
    %4862 = vmatpush1.msra.mxu0 %v4860
    %4863 = vmatprep.subr.mxu0 0.0
    %4864 = vmatpush1.msra.mxu0 %v4859
    %4865 = vmatprep.subr.mxu0 0.0
    %4866 = vmatpush1.msra.mxu0 %v4858
    %4867 = vmatprep.subr.mxu0 0.0
    %4868 = vmatpush1.msra.mxu0 %v4857
    %4869 = vmatprep.subr.mxu0 0.0
    %4870 = vmatpush1.msra.mxu0 %v4856
    %4871 = vmatprep.subr.mxu0 0.0
    %4872 = vmatpush1.msra.mxu0 %v4855
    %4873 = vmatprep.subr.mxu0 0.0
    %4874 = vmatpush1.msra.mxu0 %v4854
    %4875 = vmatprep.subr.mxu0 0.0
    %4876 = vmatpush1.msra.mxu0 %v4853
    %4877 = vmatprep.subr.mxu0 0.0
    %4878 = vmatpush1.msra.mxu0 %v4852
    %4879 = vmatprep.subr.mxu0 0.0
    %4880 = vmatpush1.msra.mxu0 %v4851
    %4881 = vmatprep.subr.mxu0 0.0
    %4882 = vmatpush1.msra.mxu0 %v4850
    %4883 = vmatprep.subr.mxu0 0.0
    %4884 = vmatpush1.msra.mxu0 %v4849
    %4885 = vmatprep.subr.mxu0 0.0
    %4886 = vmatpush1.msra.mxu0 %v4848
    %4887 = vmatprep.subr.mxu0 0.0
    %4888 = vmatpush1.msra.mxu0 %v4847
    %4889 = vmatprep.subr.mxu0 0.0
    %4890 = vmatpush1.msra.mxu0 %v4846
    %4891 = vmatprep.subr.mxu0 0.0
    %4892 = vmatpush1.msra.mxu0 %v4845
    %4893 = vmatprep.subr.mxu0 0.0
    %4894 = vmatpush2.msra.mxu0 0.0
    %4895 = vmatprep.subr.mxu0 0.0
    %4896 = vmatpush2.msra.mxu0 0.0
    %4897 = vmatprep.subr.mxu0 0.0
    %4898 = vmatpush2.msra.mxu0 0.0
    %4899 = vmatprep.subr.mxu0 0.0
    %4900 = vmatpush2.msra.mxu0 0.0
    %4901 = vmatprep.subr.mxu0 0.0
    %4902 = vmatpush2.msra.mxu0 0.0
    %4903 = vmatprep.subr.mxu0 0.0
    %4904 = vmatpush2.msra.mxu0 0.0
    %4905 = vmatprep.subr.mxu0 0.0
    %4906 = vmatpush2.msra.mxu0 0.0
    %4907 = vmatprep.subr.mxu0 0.0
    %4908 = vmatpush2.msra.mxu0 0.0
    %4909 = vmatprep.subr.mxu0 0.0
    %4910 = vmatpush2.msra.mxu0 0.0
    %4911 = vmatprep.subr.mxu0 0.0
    %4912 = vmatpush2.msra.mxu0 0.0
    %4913 = vmatprep.subr.mxu0 0.0
    %4914 = vmatpush2.msra.mxu0 0.0
    %4915 = vmatprep.subr.mxu0 0.0
    %4916 = vmatpush2.msra.mxu0 0.0
    %4917 = vmatprep.subr.mxu0 0.0
    %4918 = vmatpush2.msra.mxu0 0.0
    %4919 = vmatprep.subr.mxu0 0.0
    %4920 = vmatpush2.msra.mxu0 0.0
    %4921 = vmatprep.subr.mxu0 0.0
    %4922 = vmatpush2.msra.mxu0 0.0
    %4923 = vmatprep.subr.mxu0 0.0
    %4924 = vmatpush2.msra.mxu0 0.0
    %4925 = vmatprep.mubr.f32.mxu0 0.0
    %4926 = vmatmul.mubr.f32.gmra.mxu0 %v266
    %v4927 = vpop.f32.mrf.mxu0
    %v4928 = vadd.f32 0.0, %v4927
    %v4929 = vpop.f32.mrf.mxu0
    %4930 = vmatprep.mubr.f32.mxu0 0.0
    %4931 = vmatmul.mubr.f32.gmra.mxu0 %v267
    %v4932 = vpop.f32.mrf.mxu0
    %v4933 = vadd.f32 0.0, %v4932
    %v4934 = vpop.f32.mrf.mxu0
    %4935 = vmatprep.mubr.f32.mxu0 0.0
    %4936 = vmatmul.mubr.f32.gmra.mxu0 %v268
    %v4937 = vpop.f32.mrf.mxu0
    %v4938 = vadd.f32 0.0, %v4937
    %v4939 = vpop.f32.mrf.mxu0
    %4940 = vmatprep.mubr.f32.mxu0 0.0
    %4941 = vmatmul.mubr.f32.gmra.mxu0 %v269
    %v4942 = vpop.f32.mrf.mxu0
    %v4943 = vadd.f32 0.0, %v4942
    %v4944 = vpop.f32.mrf.mxu0
    %4945 = vmatprep.mubr.f32.mxu0 0.0
    %4946 = vmatmul.mubr.f32.gmra.mxu0 %v270
    %v4947 = vpop.f32.mrf.mxu0
    %v4948 = vadd.f32 0.0, %v4947
    %v4949 = vpop.f32.mrf.mxu0
    %4950 = vmatprep.mubr.f32.mxu0 0.0
    %4951 = vmatmul.mubr.f32.gmra.mxu0 %v271
    %v4952 = vpop.f32.mrf.mxu0
    %v4953 = vadd.f32 0.0, %v4952
    %v4954 = vpop.f32.mrf.mxu0
    %4955 = vmatprep.mubr.f32.mxu0 0.0
    %4956 = vmatmul.mubr.f32.gmra.mxu0 %v272
    %v4957 = vpop.f32.mrf.mxu0
    %v4958 = vadd.f32 0.0, %v4957
    %v4959 = vpop.f32.mrf.mxu0
    %4960 = vmatprep.mubr.f32.mxu0 0.0
    %4961 = vmatmul.mubr.f32.gmra.mxu0 %v273
    %v4962 = vpop.f32.mrf.mxu0
    %v4963 = vadd.f32 0.0, %v4962
    %v4964 = vpop.f32.mrf.mxu0
    %4965 = vdwg.mxu0
    %s4966 = scalar_lea.vmem %s4, 192
    %v4967 = vld [vmem:[%s4966] sm:$0xff]
    %v4968 = vld [vmem:[%s4966 + $0x8] sm:$0xff]
    %v4969 = vld [vmem:[%s4966 + $0x10] sm:$0xff]
    %v4970 = vld [vmem:[%s4966 + $0x18] sm:$0xff]
    %v4971 = vld [vmem:[%s4966 + $0x20] sm:$0xff]
    %v4972 = vld [vmem:[%s4966 + $0x28] sm:$0xff]
    %v4973 = vld [vmem:[%s4966 + $0x30] sm:$0xff]
    %v4974 = vld [vmem:[%s4966 + $0x38] sm:$0xff]
    %v4975 = vmul.f32 %v4967, %v4928
    %v4976 = vmul.f32 %v4968, %v4933
    %v4977 = vmul.f32 %v4969, %v4938
    %v4978 = vmul.f32 %v4970, %v4943
    %v4979 = vmul.f32 %v4971, %v4948
    %v4980 = vmul.f32 %v4972, %v4953
    %v4981 = vmul.f32 %v4973, %v4958
    %v4982 = vmul.f32 %v4974, %v4963
    %4983 = vmatprep.subr.mxu0 0.0
    %4984 = vmatpush1.msra.mxu0 0.0
    %4985 = vmatprep.subr.mxu0 0.0
    %4986 = vmatpush1.msra.mxu0 0.0
    %4987 = vmatprep.subr.mxu0 0.0
    %4988 = vmatpush1.msra.mxu0 0.0
    %4989 = vmatprep.subr.mxu0 0.0
    %4990 = vmatpush1.msra.mxu0 0.0
    %4991 = vmatprep.subr.mxu0 0.0
    %4992 = vmatpush1.msra.mxu0 0.0
    %4993 = vmatprep.subr.mxu0 0.0
    %4994 = vmatpush1.msra.mxu0 0.0
    %4995 = vmatprep.subr.mxu0 0.0
    %4996 = vmatpush1.msra.mxu0 0.0
    %4997 = vmatprep.subr.mxu0 0.0
    %4998 = vmatpush1.msra.mxu0 0.0
    %4999 = vmatprep.subr.mxu0 0.0
    %5000 = vmatpush1.msra.mxu0 %v4982
    %5001 = vmatprep.subr.mxu0 0.0
    %5002 = vmatpush1.msra.mxu0 %v4981
    %5003 = vmatprep.subr.mxu0 0.0
    %5004 = vmatpush1.msra.mxu0 %v4980
    %5005 = vmatprep.subr.mxu0 0.0
    %5006 = vmatpush1.msra.mxu0 %v4979
    %5007 = vmatprep.subr.mxu0 0.0
    %5008 = vmatpush1.msra.mxu0 %v4978
    %5009 = vmatprep.subr.mxu0 0.0
    %5010 = vmatpush1.msra.mxu0 %v4977
    %5011 = vmatprep.subr.mxu0 0.0
    %5012 = vmatpush1.msra.mxu0 %v4976
    %5013 = vmatprep.subr.mxu0 0.0
    %5014 = vmatpush1.msra.mxu0 %v4975
    %5015 = vmatprep.subr.mxu0 0.0
    %5016 = vmatpush2.msra.mxu0 0.0
    %5017 = vmatprep.subr.mxu0 0.0
    %5018 = vmatpush2.msra.mxu0 0.0
    %5019 = vmatprep.subr.mxu0 0.0
    %5020 = vmatpush2.msra.mxu0 0.0
    %5021 = vmatprep.subr.mxu0 0.0
    %5022 = vmatpush2.msra.mxu0 0.0
    %5023 = vmatprep.subr.mxu0 0.0
    %5024 = vmatpush2.msra.mxu0 0.0
    %5025 = vmatprep.subr.mxu0 0.0
    %5026 = vmatpush2.msra.mxu0 0.0
    %5027 = vmatprep.subr.mxu0 0.0
    %5028 = vmatpush2.msra.mxu0 0.0
    %5029 = vmatprep.subr.mxu0 0.0
    %5030 = vmatpush2.msra.mxu0 0.0
    %5031 = vmatprep.subr.mxu0 0.0
    %5032 = vmatpush2.msra.mxu0 0.0
    %5033 = vmatprep.subr.mxu0 0.0
    %5034 = vmatpush2.msra.mxu0 0.0
    %5035 = vmatprep.subr.mxu0 0.0
    %5036 = vmatpush2.msra.mxu0 0.0
    %5037 = vmatprep.subr.mxu0 0.0
    %5038 = vmatpush2.msra.mxu0 0.0
    %5039 = vmatprep.subr.mxu0 0.0
    %5040 = vmatpush2.msra.mxu0 0.0
    %5041 = vmatprep.subr.mxu0 0.0
    %5042 = vmatpush2.msra.mxu0 0.0
    %5043 = vmatprep.subr.mxu0 0.0
    %5044 = vmatpush2.msra.mxu0 0.0
    %5045 = vmatprep.subr.mxu0 0.0
    %5046 = vmatpush2.msra.mxu0 0.0
    %5047 = vmatprep.mubr.f32.mxu0 0.0
    %5048 = vmatmul.mubr.f32.gmra.mxu0 %v413
    %v5049 = vpop.f32.mrf.mxu0
    %v5050 = vadd.f32 0.0, %v5049
    %v5051 = vpop.f32.mrf.mxu0
    %5052 = vmatprep.mubr.f32.mxu0 0.0
    %5053 = vmatmul.mubr.f32.gmra.mxu0 %v416
    %v5054 = vpop.f32.mrf.mxu0
    %v5055 = vadd.f32 0.0, %v5054
    %v5056 = vpop.f32.mrf.mxu0
    %5057 = vmatprep.mubr.f32.mxu0 0.0
    %5058 = vmatmul.mubr.f32.gmra.mxu0 %v419
    %v5059 = vpop.f32.mrf.mxu0
    %v5060 = vadd.f32 0.0, %v5059
    %v5061 = vpop.f32.mrf.mxu0
    %5062 = vmatprep.mubr.f32.mxu0 0.0
    %5063 = vmatmul.mubr.f32.gmra.mxu0 %v422
    %v5064 = vpop.f32.mrf.mxu0
    %v5065 = vadd.f32 0.0, %v5064
    %v5066 = vpop.f32.mrf.mxu0
    %5067 = vmatprep.mubr.f32.mxu0 0.0
    %5068 = vmatmul.mubr.f32.gmra.mxu0 %v425
    %v5069 = vpop.f32.mrf.mxu0
    %v5070 = vadd.f32 0.0, %v5069
    %v5071 = vpop.f32.mrf.mxu0
    %5072 = vmatprep.mubr.f32.mxu0 0.0
    %5073 = vmatmul.mubr.f32.gmra.mxu0 %v428
    %v5074 = vpop.f32.mrf.mxu0
    %v5075 = vadd.f32 0.0, %v5074
    %v5076 = vpop.f32.mrf.mxu0
    %5077 = vmatprep.mubr.f32.mxu0 0.0
    %5078 = vmatmul.mubr.f32.gmra.mxu0 %v431
    %v5079 = vpop.f32.mrf.mxu0
    %v5080 = vadd.f32 0.0, %v5079
    %v5081 = vpop.f32.mrf.mxu0
    %5082 = vmatprep.mubr.f32.mxu0 0.0
    %5083 = vmatmul.mubr.f32.gmra.mxu0 %v434
    %v5084 = vpop.f32.mrf.mxu0
    %v5085 = vadd.f32 0.0, %v5084
    %v5086 = vpop.f32.mrf.mxu0
    %5087 = vmatprep.mubr.f32.mxu0 0.0
    %5088 = vmatmul.mubr.f32.gmra.mxu0 %v437
    %v5089 = vpop.f32.mrf.mxu0
    %v5090 = vadd.f32 0.0, %v5089
    %v5091 = vpop.f32.mrf.mxu0
    %5092 = vmatprep.mubr.f32.mxu0 0.0
    %5093 = vmatmul.mubr.f32.gmra.mxu0 %v440
    %v5094 = vpop.f32.mrf.mxu0
    %v5095 = vadd.f32 0.0, %v5094
    %v5096 = vpop.f32.mrf.mxu0
    %5097 = vmatprep.mubr.f32.mxu0 0.0
    %5098 = vmatmul.mubr.f32.gmra.mxu0 %v443
    %v5099 = vpop.f32.mrf.mxu0
    %v5100 = vadd.f32 0.0, %v5099
    %v5101 = vpop.f32.mrf.mxu0
    %5102 = vmatprep.mubr.f32.mxu0 0.0
    %5103 = vmatmul.mubr.f32.gmra.mxu0 %v446
    %v5104 = vpop.f32.mrf.mxu0
    %v5105 = vadd.f32 0.0, %v5104
    %v5106 = vpop.f32.mrf.mxu0
    %5107 = vmatprep.mubr.f32.mxu0 0.0
    %5108 = vmatmul.mubr.f32.gmra.mxu0 %v449
    %v5109 = vpop.f32.mrf.mxu0
    %v5110 = vadd.f32 0.0, %v5109
    %v5111 = vpop.f32.mrf.mxu0
    %5112 = vmatprep.mubr.f32.mxu0 0.0
    %5113 = vmatmul.mubr.f32.gmra.mxu0 %v452
    %v5114 = vpop.f32.mrf.mxu0
    %v5115 = vadd.f32 0.0, %v5114
    %v5116 = vpop.f32.mrf.mxu0
    %5117 = vmatprep.mubr.f32.mxu0 0.0
    %5118 = vmatmul.mubr.f32.gmra.mxu0 %v455
    %v5119 = vpop.f32.mrf.mxu0
    %v5120 = vadd.f32 0.0, %v5119
    %v5121 = vpop.f32.mrf.mxu0
    %5122 = vmatprep.mubr.f32.mxu0 0.0
    %5123 = vmatmul.mubr.f32.gmra.mxu0 %v458
    %v5124 = vpop.f32.mrf.mxu0
    %v5125 = vadd.f32 0.0, %v5124
    %v5126 = vpop.f32.mrf.mxu0
    %5127 = vdwg.mxu0
    %5128 = vmatprep.subr.mxu0 0.0
    %5129 = vmatpush1.msra.mxu0 %v5125
    %5130 = vmatprep.subr.mxu0 0.0
    %5131 = vmatpush1.msra.mxu0 %v5120
    %5132 = vmatprep.subr.mxu0 0.0
    %5133 = vmatpush1.msra.mxu0 %v5115
    %5134 = vmatprep.subr.mxu0 0.0
    %5135 = vmatpush1.msra.mxu0 %v5110
    %5136 = vmatprep.subr.mxu0 0.0
    %5137 = vmatpush1.msra.mxu0 %v5105
    %5138 = vmatprep.subr.mxu0 0.0
    %5139 = vmatpush1.msra.mxu0 %v5100
    %5140 = vmatprep.subr.mxu0 0.0
    %5141 = vmatpush1.msra.mxu0 %v5095
    %5142 = vmatprep.subr.mxu0 0.0
    %5143 = vmatpush1.msra.mxu0 %v5090
    %5144 = vmatprep.subr.mxu0 0.0
    %5145 = vmatpush1.msra.mxu0 %v5085
    %5146 = vmatprep.subr.mxu0 0.0
    %5147 = vmatpush1.msra.mxu0 %v5080
    %5148 = vmatprep.subr.mxu0 0.0
    %5149 = vmatpush1.msra.mxu0 %v5075
    %5150 = vmatprep.subr.mxu0 0.0
    %5151 = vmatpush1.msra.mxu0 %v5070
    %5152 = vmatprep.subr.mxu0 0.0
    %5153 = vmatpush1.msra.mxu0 %v5065
    %5154 = vmatprep.subr.mxu0 0.0
    %5155 = vmatpush1.msra.mxu0 %v5060
    %5156 = vmatprep.subr.mxu0 0.0
    %5157 = vmatpush1.msra.mxu0 %v5055
    %5158 = vmatprep.subr.mxu0 0.0
    %5159 = vmatpush1.msra.mxu0 %v5050
    %5160 = vmatprep.subr.mxu0 0.0
    %5161 = vmatpush2.msra.mxu0 0.0
    %5162 = vmatprep.subr.mxu0 0.0
    %5163 = vmatpush2.msra.mxu0 0.0
    %5164 = vmatprep.subr.mxu0 0.0
    %5165 = vmatpush2.msra.mxu0 0.0
    %5166 = vmatprep.subr.mxu0 0.0
    %5167 = vmatpush2.msra.mxu0 0.0
    %5168 = vmatprep.subr.mxu0 0.0
    %5169 = vmatpush2.msra.mxu0 0.0
    %5170 = vmatprep.subr.mxu0 0.0
    %5171 = vmatpush2.msra.mxu0 0.0
    %5172 = vmatprep.subr.mxu0 0.0
    %5173 = vmatpush2.msra.mxu0 0.0
    %5174 = vmatprep.subr.mxu0 0.0
    %5175 = vmatpush2.msra.mxu0 0.0
    %5176 = vmatprep.subr.mxu0 0.0
    %5177 = vmatpush2.msra.mxu0 0.0
    %5178 = vmatprep.subr.mxu0 0.0
    %5179 = vmatpush2.msra.mxu0 0.0
    %5180 = vmatprep.subr.mxu0 0.0
    %5181 = vmatpush2.msra.mxu0 0.0
    %5182 = vmatprep.subr.mxu0 0.0
    %5183 = vmatpush2.msra.mxu0 0.0
    %5184 = vmatprep.subr.mxu0 0.0
    %5185 = vmatpush2.msra.mxu0 0.0
    %5186 = vmatprep.subr.mxu0 0.0
    %5187 = vmatpush2.msra.mxu0 0.0
    %5188 = vmatprep.subr.mxu0 0.0
    %5189 = vmatpush2.msra.mxu0 0.0
    %5190 = vmatprep.subr.mxu0 0.0
    %5191 = vmatpush2.msra.mxu0 0.0
    %5192 = vmatprep.mubr.f32.mxu0 0.0
    %5193 = vmatmul.mubr.f32.gmra.mxu0 %v605
    %v5194 = vpop.f32.mrf.mxu0
    %v5195 = vadd.f32 0.0, %v5194
    %v5196 = vpop.f32.mrf.mxu0
    %5197 = vmatprep.mubr.f32.mxu0 0.0
    %5198 = vmatmul.mubr.f32.gmra.mxu0 %v606
    %v5199 = vpop.f32.mrf.mxu0
    %v5200 = vadd.f32 0.0, %v5199
    %v5201 = vpop.f32.mrf.mxu0
    %5202 = vmatprep.mubr.f32.mxu0 0.0
    %5203 = vmatmul.mubr.f32.gmra.mxu0 %v607
    %v5204 = vpop.f32.mrf.mxu0
    %v5205 = vadd.f32 0.0, %v5204
    %v5206 = vpop.f32.mrf.mxu0
    %5207 = vmatprep.mubr.f32.mxu0 0.0
    %5208 = vmatmul.mubr.f32.gmra.mxu0 %v608
    %v5209 = vpop.f32.mrf.mxu0
    %v5210 = vadd.f32 0.0, %v5209
    %v5211 = vpop.f32.mrf.mxu0
    %5212 = vmatprep.mubr.f32.mxu0 0.0
    %5213 = vmatmul.mubr.f32.gmra.mxu0 %v609
    %v5214 = vpop.f32.mrf.mxu0
    %v5215 = vadd.f32 0.0, %v5214
    %v5216 = vpop.f32.mrf.mxu0
    %5217 = vmatprep.mubr.f32.mxu0 0.0
    %5218 = vmatmul.mubr.f32.gmra.mxu0 %v610
    %v5219 = vpop.f32.mrf.mxu0
    %v5220 = vadd.f32 0.0, %v5219
    %v5221 = vpop.f32.mrf.mxu0
    %5222 = vmatprep.mubr.f32.mxu0 0.0
    %5223 = vmatmul.mubr.f32.gmra.mxu0 %v611
    %v5224 = vpop.f32.mrf.mxu0
    %v5225 = vadd.f32 0.0, %v5224
    %v5226 = vpop.f32.mrf.mxu0
    %5227 = vmatprep.mubr.f32.mxu0 0.0
    %5228 = vmatmul.mubr.f32.gmra.mxu0 %v612
    %v5229 = vpop.f32.mrf.mxu0
    %v5230 = vadd.f32 0.0, %v5229
    %v5231 = vpop.f32.mrf.mxu0
    %5232 = vmatprep.mubr.f32.mxu0 0.0
    %5233 = vmatmul.mubr.f32.gmra.mxu0 %v613
    %v5234 = vpop.f32.mrf.mxu0
    %v5235 = vadd.f32 0.0, %v5234
    %v5236 = vpop.f32.mrf.mxu0
    %5237 = vmatprep.mubr.f32.mxu0 0.0
    %5238 = vmatmul.mubr.f32.gmra.mxu0 %v614
    %v5239 = vpop.f32.mrf.mxu0
    %v5240 = vadd.f32 0.0, %v5239
    %v5241 = vpop.f32.mrf.mxu0
    %5242 = vmatprep.mubr.f32.mxu0 0.0
    %5243 = vmatmul.mubr.f32.gmra.mxu0 %v615
    %v5244 = vpop.f32.mrf.mxu0
    %v5245 = vadd.f32 0.0, %v5244
    %v5246 = vpop.f32.mrf.mxu0
    %5247 = vmatprep.mubr.f32.mxu0 0.0
    %5248 = vmatmul.mubr.f32.gmra.mxu0 %v616
    %v5249 = vpop.f32.mrf.mxu0
    %v5250 = vadd.f32 0.0, %v5249
    %v5251 = vpop.f32.mrf.mxu0
    %5252 = vmatprep.mubr.f32.mxu0 0.0
    %5253 = vmatmul.mubr.f32.gmra.mxu0 %v617
    %v5254 = vpop.f32.mrf.mxu0
    %v5255 = vadd.f32 0.0, %v5254
    %v5256 = vpop.f32.mrf.mxu0
    %5257 = vmatprep.mubr.f32.mxu0 0.0
    %5258 = vmatmul.mubr.f32.gmra.mxu0 %v618
    %v5259 = vpop.f32.mrf.mxu0
    %v5260 = vadd.f32 0.0, %v5259
    %v5261 = vpop.f32.mrf.mxu0
    %5262 = vmatprep.mubr.f32.mxu0 0.0
    %5263 = vmatmul.mubr.f32.gmra.mxu0 %v619
    %v5264 = vpop.f32.mrf.mxu0
    %v5265 = vadd.f32 0.0, %v5264
    %v5266 = vpop.f32.mrf.mxu0
    %5267 = vmatprep.mubr.f32.mxu0 0.0
    %5268 = vmatmul.mubr.f32.gmra.mxu0 %v620
    %v5269 = vpop.f32.mrf.mxu0
    %v5270 = vadd.f32 0.0, %v5269
    %v5271 = vpop.f32.mrf.mxu0
    %5272 = vmatprep.mubr.f32.mxu0 0.0
    %5273 = vmatmul.mubr.f32.gmra.mxu0 %v621
    %v5274 = vpop.f32.mrf.mxu0
    %v5275 = vadd.f32 0.0, %v5274
    %v5276 = vpop.f32.mrf.mxu0
    %5277 = vmatprep.mubr.f32.mxu0 0.0
    %5278 = vmatmul.mubr.f32.gmra.mxu0 %v622
    %v5279 = vpop.f32.mrf.mxu0
    %v5280 = vadd.f32 0.0, %v5279
    %v5281 = vpop.f32.mrf.mxu0
    %5282 = vmatprep.mubr.f32.mxu0 0.0
    %5283 = vmatmul.mubr.f32.gmra.mxu0 %v623
    %v5284 = vpop.f32.mrf.mxu0
    %v5285 = vadd.f32 0.0, %v5284
    %v5286 = vpop.f32.mrf.mxu0
    %5287 = vmatprep.mubr.f32.mxu0 0.0
    %5288 = vmatmul.mubr.f32.gmra.mxu0 %v624
    %v5289 = vpop.f32.mrf.mxu0
    %v5290 = vadd.f32 0.0, %v5289
    %v5291 = vpop.f32.mrf.mxu0
    %5292 = vmatprep.mubr.f32.mxu0 0.0
    %5293 = vmatmul.mubr.f32.gmra.mxu0 %v625
    %v5294 = vpop.f32.mrf.mxu0
    %v5295 = vadd.f32 0.0, %v5294
    %v5296 = vpop.f32.mrf.mxu0
    %5297 = vmatprep.mubr.f32.mxu0 0.0
    %5298 = vmatmul.mubr.f32.gmra.mxu0 %v626
    %v5299 = vpop.f32.mrf.mxu0
    %v5300 = vadd.f32 0.0, %v5299
    %v5301 = vpop.f32.mrf.mxu0
    %5302 = vmatprep.mubr.f32.mxu0 0.0
    %5303 = vmatmul.mubr.f32.gmra.mxu0 %v627
    %v5304 = vpop.f32.mrf.mxu0
    %v5305 = vadd.f32 0.0, %v5304
    %v5306 = vpop.f32.mrf.mxu0
    %5307 = vmatprep.mubr.f32.mxu0 0.0
    %5308 = vmatmul.mubr.f32.gmra.mxu0 %v628
    %v5309 = vpop.f32.mrf.mxu0
    %v5310 = vadd.f32 0.0, %v5309
    %v5311 = vpop.f32.mrf.mxu0
    %5312 = vmatprep.mubr.f32.mxu0 0.0
    %5313 = vmatmul.mubr.f32.gmra.mxu0 %v629
    %v5314 = vpop.f32.mrf.mxu0
    %v5315 = vadd.f32 0.0, %v5314
    %v5316 = vpop.f32.mrf.mxu0
    %5317 = vmatprep.mubr.f32.mxu0 0.0
    %5318 = vmatmul.mubr.f32.gmra.mxu0 %v630
    %v5319 = vpop.f32.mrf.mxu0
    %v5320 = vadd.f32 0.0, %v5319
    %v5321 = vpop.f32.mrf.mxu0
    %5322 = vmatprep.mubr.f32.mxu0 0.0
    %5323 = vmatmul.mubr.f32.gmra.mxu0 %v631
    %v5324 = vpop.f32.mrf.mxu0
    %v5325 = vadd.f32 0.0, %v5324
    %v5326 = vpop.f32.mrf.mxu0
    %5327 = vmatprep.mubr.f32.mxu0 0.0
    %5328 = vmatmul.mubr.f32.gmra.mxu0 %v632
    %v5329 = vpop.f32.mrf.mxu0
    %v5330 = vadd.f32 0.0, %v5329
    %v5331 = vpop.f32.mrf.mxu0
    %5332 = vmatprep.mubr.f32.mxu0 0.0
    %5333 = vmatmul.mubr.f32.gmra.mxu0 %v633
    %v5334 = vpop.f32.mrf.mxu0
    %v5335 = vadd.f32 0.0, %v5334
    %v5336 = vpop.f32.mrf.mxu0
    %5337 = vmatprep.mubr.f32.mxu0 0.0
    %5338 = vmatmul.mubr.f32.gmra.mxu0 %v634
    %v5339 = vpop.f32.mrf.mxu0
    %v5340 = vadd.f32 0.0, %v5339
    %v5341 = vpop.f32.mrf.mxu0
    %5342 = vmatprep.mubr.f32.mxu0 0.0
    %5343 = vmatmul.mubr.f32.gmra.mxu0 %v635
    %v5344 = vpop.f32.mrf.mxu0
    %v5345 = vadd.f32 0.0, %v5344
    %v5346 = vpop.f32.mrf.mxu0
    %5347 = vmatprep.mubr.f32.mxu0 0.0
    %5348 = vmatmul.mubr.f32.gmra.mxu0 %v636
    %v5349 = vpop.f32.mrf.mxu0
    %v5350 = vadd.f32 0.0, %v5349
    %v5351 = vpop.f32.mrf.mxu0
    %5352 = vdwg.mxu0
    %5369 = vrot.lane.b32.xlu0 %v5275, 32
    %v5370 = vpop.permute.xlu0 %5369
    %5371 = vrot.lane.b32.xlu0 %v5280, 32
    %v5372 = vpop.permute.xlu0 %5371
    %5373 = vrot.lane.b32.xlu0 %v5285, 32
    %v5374 = vpop.permute.xlu0 %5373
    %5375 = vrot.lane.b32.xlu0 %v5290, 32
    %v5376 = vpop.permute.xlu0 %5375
    %5377 = vrot.lane.b32.xlu0 %v5295, 32
    %v5378 = vpop.permute.xlu0 %5377
    %5379 = vrot.lane.b32.xlu0 %v5300, 32
    %v5380 = vpop.permute.xlu0 %5379
    %5381 = vrot.lane.b32.xlu0 %v5305, 32
    %v5382 = vpop.permute.xlu0 %5381
    %5383 = vrot.lane.b32.xlu0 %v5310, 32
    %v5384 = vpop.permute.xlu0 %5383
    %5385 = vrot.lane.b32.xlu0 %v5315, 32
    %v5386 = vpop.permute.xlu0 %5385
    %5387 = vrot.lane.b32.xlu0 %v5320, 32
    %v5388 = vpop.permute.xlu0 %5387
    %5389 = vrot.lane.b32.xlu0 %v5325, 32
    %v5390 = vpop.permute.xlu0 %5389
    %5391 = vrot.lane.b32.xlu0 %v5330, 32
    %v5392 = vpop.permute.xlu0 %5391
    %5393 = vrot.lane.b32.xlu0 %v5335, 32
    %v5394 = vpop.permute.xlu0 %5393
    %5395 = vrot.lane.b32.xlu0 %v5340, 32
    %v5396 = vpop.permute.xlu0 %5395
    %5397 = vrot.lane.b32.xlu0 %v5345, 32
    %v5398 = vpop.permute.xlu0 %5397
    %5399 = vrot.lane.b32.xlu0 %v5350, 32
    %v5400 = vpop.permute.xlu0 %5399
    %v5417 = vsel %vm926, %v5195, %v5370
    %v5418 = vsel %vm926, %v5200, %v5372
    %v5419 = vsel %vm926, %v5205, %v5374
    %v5420 = vsel %vm926, %v5210, %v5376
    %v5421 = vsel %vm926, %v5215, %v5378
    %v5422 = vsel %vm926, %v5220, %v5380
    %v5423 = vsel %vm926, %v5225, %v5382
    %v5424 = vsel %vm926, %v5230, %v5384
    %v5425 = vsel %vm926, %v5235, %v5386
    %v5426 = vsel %vm926, %v5240, %v5388
    %v5427 = vsel %vm926, %v5245, %v5390
    %v5428 = vsel %vm926, %v5250, %v5392
    %v5429 = vsel %vm926, %v5255, %v5394
    %v5430 = vsel %vm926, %v5260, %v5396
    %v5431 = vsel %vm926, %v5265, %v5398
    %v5432 = vsel %vm926, %v5270, %v5400
    %s5433 = scalar_lea.vmem %s5, 192
    %v5434 = vld [vmem:[%s5433] sm:$0xff]
    %v5435 = vld [vmem:[%s5433 + $0x8] sm:$0xff]
    %v5436 = vld [vmem:[%s5433 + $0x10] sm:$0xff]
    %v5437 = vld [vmem:[%s5433 + $0x18] sm:$0xff]
    %v5438 = vld [vmem:[%s5433 + $0x20] sm:$0xff]
    %v5439 = vld [vmem:[%s5433 + $0x28] sm:$0xff]
    %v5440 = vld [vmem:[%s5433 + $0x30] sm:$0xff]
    %v5441 = vld [vmem:[%s5433 + $0x38] sm:$0xff]
    %v5443 = vsel %vm411, %v5417, 0
    %v5446 = vsel %vm411, %v5418, 0
    %v5449 = vsel %vm411, %v5419, 0
    %v5452 = vsel %vm411, %v5420, 0
    %v5455 = vsel %vm411, %v5421, 0
    %v5458 = vsel %vm411, %v5422, 0
    %v5461 = vsel %vm411, %v5423, 0
    %v5464 = vsel %vm411, %v5424, 0
    %v5467 = vsel %vm411, %v5425, 0
    %v5470 = vsel %vm411, %v5426, 0
    %v5473 = vsel %vm411, %v5427, 0
    %v5476 = vsel %vm411, %v5428, 0
    %v5479 = vsel %vm411, %v5429, 0
    %v5482 = vsel %vm411, %v5430, 0
    %v5485 = vsel %vm411, %v5431, 0
    %v5488 = vsel %vm411, %v5432, 0
    %5490 = vmatprep.subr.mxu0 0.0
    %5491 = vmatpush1.msra.mxu0 0.0
    %5492 = vmatprep.subr.mxu0 0.0
    %5493 = vmatpush1.msra.mxu0 0.0
    %5494 = vmatprep.subr.mxu0 0.0
    %5495 = vmatpush1.msra.mxu0 0.0
    %5496 = vmatprep.subr.mxu0 0.0
    %5497 = vmatpush1.msra.mxu0 0.0
    %5498 = vmatprep.subr.mxu0 0.0
    %5499 = vmatpush1.msra.mxu0 0.0
    %5500 = vmatprep.subr.mxu0 0.0
    %5501 = vmatpush1.msra.mxu0 0.0
    %5502 = vmatprep.subr.mxu0 0.0
    %5503 = vmatpush1.msra.mxu0 0.0
    %5504 = vmatprep.subr.mxu0 0.0
    %5505 = vmatpush1.msra.mxu0 0.0
    %5506 = vmatprep.subr.mxu0 0.0
    %5507 = vmatpush1.msra.mxu0 %v5441
    %5508 = vmatprep.subr.mxu0 0.0
    %5509 = vmatpush1.msra.mxu0 %v5440
    %5510 = vmatprep.subr.mxu0 0.0
    %5511 = vmatpush1.msra.mxu0 %v5439
    %5512 = vmatprep.subr.mxu0 0.0
    %5513 = vmatpush1.msra.mxu0 %v5438
    %5514 = vmatprep.subr.mxu0 0.0
    %5515 = vmatpush1.msra.mxu0 %v5437
    %5516 = vmatprep.subr.mxu0 0.0
    %5517 = vmatpush1.msra.mxu0 %v5436
    %5518 = vmatprep.subr.mxu0 0.0
    %5519 = vmatpush1.msra.mxu0 %v5435
    %5520 = vmatprep.subr.mxu0 0.0
    %5521 = vmatpush1.msra.mxu0 %v5434
    %5522 = vmatprep.subr.mxu0 0.0
    %5523 = vmatpush2.msra.mxu0 0.0
    %5524 = vmatprep.subr.mxu0 0.0
    %5525 = vmatpush2.msra.mxu0 0.0
    %5526 = vmatprep.subr.mxu0 0.0
    %5527 = vmatpush2.msra.mxu0 0.0
    %5528 = vmatprep.subr.mxu0 0.0
    %5529 = vmatpush2.msra.mxu0 0.0
    %5530 = vmatprep.subr.mxu0 0.0
    %5531 = vmatpush2.msra.mxu0 0.0
    %5532 = vmatprep.subr.mxu0 0.0
    %5533 = vmatpush2.msra.mxu0 0.0
    %5534 = vmatprep.subr.mxu0 0.0
    %5535 = vmatpush2.msra.mxu0 0.0
    %5536 = vmatprep.subr.mxu0 0.0
    %5537 = vmatpush2.msra.mxu0 0.0
    %5538 = vmatprep.subr.mxu0 0.0
    %5539 = vmatpush2.msra.mxu0 0.0
    %5540 = vmatprep.subr.mxu0 0.0
    %5541 = vmatpush2.msra.mxu0 0.0
    %5542 = vmatprep.subr.mxu0 0.0
    %5543 = vmatpush2.msra.mxu0 0.0
    %5544 = vmatprep.subr.mxu0 0.0
    %5545 = vmatpush2.msra.mxu0 0.0
    %5546 = vmatprep.subr.mxu0 0.0
    %5547 = vmatpush2.msra.mxu0 0.0
    %5548 = vmatprep.subr.mxu0 0.0
    %5549 = vmatpush2.msra.mxu0 0.0
    %5550 = vmatprep.subr.mxu0 0.0
    %5551 = vmatpush2.msra.mxu0 0.0
    %5552 = vmatprep.subr.mxu0 0.0
    %5553 = vmatpush2.msra.mxu0 0.0
    %5554 = vmatprep.mubr.f32.mxu0 0.0
    %5555 = vmatmul.mubr.f32.gmra.mxu0 %v5443
    %v5556 = vpop.f32.mrf.mxu0
    %v5557 = vadd.f32 0.0, %v5556
    %v5558 = vpop.f32.mrf.mxu0
    %5559 = vmatprep.mubr.f32.mxu0 0.0
    %5560 = vmatmul.mubr.f32.gmra.mxu0 %v5446
    %v5561 = vpop.f32.mrf.mxu0
    %v5562 = vadd.f32 0.0, %v5561
    %v5563 = vpop.f32.mrf.mxu0
    %5564 = vmatprep.mubr.f32.mxu0 0.0
    %5565 = vmatmul.mubr.f32.gmra.mxu0 %v5449
    %v5566 = vpop.f32.mrf.mxu0
    %v5567 = vadd.f32 0.0, %v5566
    %v5568 = vpop.f32.mrf.mxu0
    %5569 = vmatprep.mubr.f32.mxu0 0.0
    %5570 = vmatmul.mubr.f32.gmra.mxu0 %v5452
    %v5571 = vpop.f32.mrf.mxu0
    %v5572 = vadd.f32 0.0, %v5571
    %v5573 = vpop.f32.mrf.mxu0
    %5574 = vmatprep.mubr.f32.mxu0 0.0
    %5575 = vmatmul.mubr.f32.gmra.mxu0 %v5455
    %v5576 = vpop.f32.mrf.mxu0
    %v5577 = vadd.f32 0.0, %v5576
    %v5578 = vpop.f32.mrf.mxu0
    %5579 = vmatprep.mubr.f32.mxu0 0.0
    %5580 = vmatmul.mubr.f32.gmra.mxu0 %v5458
    %v5581 = vpop.f32.mrf.mxu0
    %v5582 = vadd.f32 0.0, %v5581
    %v5583 = vpop.f32.mrf.mxu0
    %5584 = vmatprep.mubr.f32.mxu0 0.0
    %5585 = vmatmul.mubr.f32.gmra.mxu0 %v5461
    %v5586 = vpop.f32.mrf.mxu0
    %v5587 = vadd.f32 0.0, %v5586
    %v5588 = vpop.f32.mrf.mxu0
    %5589 = vmatprep.mubr.f32.mxu0 0.0
    %5590 = vmatmul.mubr.f32.gmra.mxu0 %v5464
    %v5591 = vpop.f32.mrf.mxu0
    %v5592 = vadd.f32 0.0, %v5591
    %v5593 = vpop.f32.mrf.mxu0
    %5594 = vmatprep.mubr.f32.mxu0 0.0
    %5595 = vmatmul.mubr.f32.gmra.mxu0 %v5467
    %v5596 = vpop.f32.mrf.mxu0
    %v5597 = vadd.f32 0.0, %v5596
    %v5598 = vpop.f32.mrf.mxu0
    %5599 = vmatprep.mubr.f32.mxu0 0.0
    %5600 = vmatmul.mubr.f32.gmra.mxu0 %v5470
    %v5601 = vpop.f32.mrf.mxu0
    %v5602 = vadd.f32 0.0, %v5601
    %v5603 = vpop.f32.mrf.mxu0
    %5604 = vmatprep.mubr.f32.mxu0 0.0
    %5605 = vmatmul.mubr.f32.gmra.mxu0 %v5473
    %v5606 = vpop.f32.mrf.mxu0
    %v5607 = vadd.f32 0.0, %v5606
    %v5608 = vpop.f32.mrf.mxu0
    %5609 = vmatprep.mubr.f32.mxu0 0.0
    %5610 = vmatmul.mubr.f32.gmra.mxu0 %v5476
    %v5611 = vpop.f32.mrf.mxu0
    %v5612 = vadd.f32 0.0, %v5611
    %v5613 = vpop.f32.mrf.mxu0
    %5614 = vmatprep.mubr.f32.mxu0 0.0
    %5615 = vmatmul.mubr.f32.gmra.mxu0 %v5479
    %v5616 = vpop.f32.mrf.mxu0
    %v5617 = vadd.f32 0.0, %v5616
    %v5618 = vpop.f32.mrf.mxu0
    %5619 = vmatprep.mubr.f32.mxu0 0.0
    %5620 = vmatmul.mubr.f32.gmra.mxu0 %v5482
    %v5621 = vpop.f32.mrf.mxu0
    %v5622 = vadd.f32 0.0, %v5621
    %v5623 = vpop.f32.mrf.mxu0
    %5624 = vmatprep.mubr.f32.mxu0 0.0
    %5625 = vmatmul.mubr.f32.gmra.mxu0 %v5485
    %v5626 = vpop.f32.mrf.mxu0
    %v5627 = vadd.f32 0.0, %v5626
    %v5628 = vpop.f32.mrf.mxu0
    %5629 = vmatprep.mubr.f32.mxu0 0.0
    %5630 = vmatmul.mubr.f32.gmra.mxu0 %v5488
    %v5631 = vpop.f32.mrf.mxu0
    %v5632 = vadd.f32 0.0, %v5631
    %v5633 = vpop.f32.mrf.mxu0
    %5634 = vdwg.mxu0
    %v5635 = vmul.f32 %v5417, %v5557
    %v5636 = vmul.f32 %v5418, %v5562
    %v5637 = vmul.f32 %v5419, %v5567
    %v5638 = vmul.f32 %v5420, %v5572
    %v5639 = vmul.f32 %v5421, %v5577
    %v5640 = vmul.f32 %v5422, %v5582
    %v5641 = vmul.f32 %v5423, %v5587
    %v5642 = vmul.f32 %v5424, %v5592
    %v5643 = vmul.f32 %v5425, %v5597
    %v5644 = vmul.f32 %v5426, %v5602
    %v5645 = vmul.f32 %v5427, %v5607
    %v5646 = vmul.f32 %v5428, %v5612
    %v5647 = vmul.f32 %v5429, %v5617
    %v5648 = vmul.f32 %v5430, %v5622
    %v5649 = vmul.f32 %v5431, %v5627
    %v5650 = vmul.f32 %v5432, %v5632
    %5667 = vrot.lane.b32.xlu0 %v5635, 96
    %v5668 = vpop.permute.xlu0 %5667
    %5669 = vrot.lane.b32.xlu0 %v5636, 96
    %v5670 = vpop.permute.xlu0 %5669
    %5671 = vrot.lane.b32.xlu0 %v5637, 96
    %v5672 = vpop.permute.xlu0 %5671
    %5673 = vrot.lane.b32.xlu0 %v5638, 96
    %v5674 = vpop.permute.xlu0 %5673
    %5675 = vrot.lane.b32.xlu0 %v5639, 96
    %v5676 = vpop.permute.xlu0 %5675
    %5677 = vrot.lane.b32.xlu0 %v5640, 96
    %v5678 = vpop.permute.xlu0 %5677
    %5679 = vrot.lane.b32.xlu0 %v5641, 96
    %v5680 = vpop.permute.xlu0 %5679
    %5681 = vrot.lane.b32.xlu0 %v5642, 96
    %v5682 = vpop.permute.xlu0 %5681
    %5683 = vrot.lane.b32.xlu0 %v5643, 96
    %v5684 = vpop.permute.xlu0 %5683
    %5685 = vrot.lane.b32.xlu0 %v5644, 96
    %v5686 = vpop.permute.xlu0 %5685
    %5687 = vrot.lane.b32.xlu0 %v5645, 96
    %v5688 = vpop.permute.xlu0 %5687
    %5689 = vrot.lane.b32.xlu0 %v5646, 96
    %v5690 = vpop.permute.xlu0 %5689
    %5691 = vrot.lane.b32.xlu0 %v5647, 96
    %v5692 = vpop.permute.xlu0 %5691
    %5693 = vrot.lane.b32.xlu0 %v5648, 96
    %v5694 = vpop.permute.xlu0 %5693
    %5695 = vrot.lane.b32.xlu0 %v5649, 96
    %v5696 = vpop.permute.xlu0 %5695
    %5697 = vrot.lane.b32.xlu0 %v5650, 96
    %v5698 = vpop.permute.xlu0 %5697
    %v5715 = vadd.f32 %v5635, %v5668
    %v5716 = vadd.f32 %v5636, %v5670
    %v5717 = vadd.f32 %v5637, %v5672
    %v5718 = vadd.f32 %v5638, %v5674
    %v5719 = vadd.f32 %v5639, %v5676
    %v5720 = vadd.f32 %v5640, %v5678
    %v5721 = vadd.f32 %v5641, %v5680
    %v5722 = vadd.f32 %v5642, %v5682
    %v5723 = vadd.f32 %v5643, %v5684
    %v5724 = vadd.f32 %v5644, %v5686
    %v5725 = vadd.f32 %v5645, %v5688
    %v5726 = vadd.f32 %v5646, %v5690
    %v5727 = vadd.f32 %v5647, %v5692
    %v5728 = vadd.f32 %v5648, %v5694
    %v5729 = vadd.f32 %v5649, %v5696
    %v5730 = vadd.f32 %v5650, %v5698
    %v5731 = vtanh.pop %v5715
    %v5732 = vtanh.pop %v5716
    %v5733 = vtanh.pop %v5717
    %v5734 = vtanh.pop %v5718
    %v5735 = vtanh.pop %v5719
    %v5736 = vtanh.pop %v5720
    %v5737 = vtanh.pop %v5721
    %v5738 = vtanh.pop %v5722
    %v5739 = vtanh.pop %v5723
    %v5740 = vtanh.pop %v5724
    %v5741 = vtanh.pop %v5725
    %v5742 = vtanh.pop %v5726
    %v5743 = vtanh.pop %v5727
    %v5744 = vtanh.pop %v5728
    %v5745 = vtanh.pop %v5729
    %v5746 = vtanh.pop %v5730
    %5763 = vrot.lane.b32.xlu0 %v5050, 32
    %v5764 = vpop.permute.xlu0 %5763
    %5765 = vrot.lane.b32.xlu0 %v5055, 32
    %v5766 = vpop.permute.xlu0 %5765
    %5767 = vrot.lane.b32.xlu0 %v5060, 32
    %v5768 = vpop.permute.xlu0 %5767
    %5769 = vrot.lane.b32.xlu0 %v5065, 32
    %v5770 = vpop.permute.xlu0 %5769
    %5771 = vrot.lane.b32.xlu0 %v5070, 32
    %v5772 = vpop.permute.xlu0 %5771
    %5773 = vrot.lane.b32.xlu0 %v5075, 32
    %v5774 = vpop.permute.xlu0 %5773
    %5775 = vrot.lane.b32.xlu0 %v5080, 32
    %v5776 = vpop.permute.xlu0 %5775
    %5777 = vrot.lane.b32.xlu0 %v5085, 32
    %v5778 = vpop.permute.xlu0 %5777
    %5779 = vrot.lane.b32.xlu0 %v5090, 32
    %v5780 = vpop.permute.xlu0 %5779
    %5781 = vrot.lane.b32.xlu0 %v5095, 32
    %v5782 = vpop.permute.xlu0 %5781
    %5783 = vrot.lane.b32.xlu0 %v5100, 32
    %v5784 = vpop.permute.xlu0 %5783
    %5785 = vrot.lane.b32.xlu0 %v5105, 32
    %v5786 = vpop.permute.xlu0 %5785
    %5787 = vrot.lane.b32.xlu0 %v5110, 32
    %v5788 = vpop.permute.xlu0 %5787
    %5789 = vrot.lane.b32.xlu0 %v5115, 32
    %v5790 = vpop.permute.xlu0 %5789
    %5791 = vrot.lane.b32.xlu0 %v5120, 32
    %v5792 = vpop.permute.xlu0 %5791
    %5793 = vrot.lane.b32.xlu0 %v5125, 32
    %v5794 = vpop.permute.xlu0 %5793
    %5827 = vrot.lane.b32.xlu0 %v5731, 64
    %v5828 = vpop.permute.xlu0 %5827
    %5829 = vrot.lane.b32.xlu0 %v5732, 64
    %v5830 = vpop.permute.xlu0 %5829
    %5831 = vrot.lane.b32.xlu0 %v5733, 64
    %v5832 = vpop.permute.xlu0 %5831
    %5833 = vrot.lane.b32.xlu0 %v5734, 64
    %v5834 = vpop.permute.xlu0 %5833
    %5835 = vrot.lane.b32.xlu0 %v5735, 64
    %v5836 = vpop.permute.xlu0 %5835
    %5837 = vrot.lane.b32.xlu0 %v5736, 64
    %v5838 = vpop.permute.xlu0 %5837
    %5839 = vrot.lane.b32.xlu0 %v5737, 64
    %v5840 = vpop.permute.xlu0 %5839
    %5841 = vrot.lane.b32.xlu0 %v5738, 64
    %v5842 = vpop.permute.xlu0 %5841
    %5843 = vrot.lane.b32.xlu0 %v5739, 64
    %v5844 = vpop.permute.xlu0 %5843
    %5845 = vrot.lane.b32.xlu0 %v5740, 64
    %v5846 = vpop.permute.xlu0 %5845
    %5847 = vrot.lane.b32.xlu0 %v5741, 64
    %v5848 = vpop.permute.xlu0 %5847
    %5849 = vrot.lane.b32.xlu0 %v5742, 64
    %v5850 = vpop.permute.xlu0 %5849
    %5851 = vrot.lane.b32.xlu0 %v5743, 64
    %v5852 = vpop.permute.xlu0 %5851
    %5853 = vrot.lane.b32.xlu0 %v5744, 64
    %v5854 = vpop.permute.xlu0 %5853
    %5855 = vrot.lane.b32.xlu0 %v5745, 64
    %v5856 = vpop.permute.xlu0 %5855
    %5857 = vrot.lane.b32.xlu0 %v5746, 64
    %v5858 = vpop.permute.xlu0 %5857
    %v5875 = vsel %vm926, %v4845, %v5764
    %v5876 = vsel %vm926, %v4846, %v5766
    %v5877 = vsel %vm926, %v4847, %v5768
    %v5878 = vsel %vm926, %v4848, %v5770
    %v5879 = vsel %vm926, %v4849, %v5772
    %v5880 = vsel %vm926, %v4850, %v5774
    %v5881 = vsel %vm926, %v4851, %v5776
    %v5882 = vsel %vm926, %v4852, %v5778
    %v5883 = vsel %vm926, %v4853, %v5780
    %v5884 = vsel %vm926, %v4854, %v5782
    %v5885 = vsel %vm926, %v4855, %v5784
    %v5886 = vsel %vm926, %v4856, %v5786
    %v5887 = vsel %vm926, %v4857, %v5788
    %v5888 = vsel %vm926, %v4858, %v5790
    %v5889 = vsel %vm926, %v4859, %v5792
    %v5890 = vsel %vm926, %v4860, %v5794
    %v5891 = vsel %vm411, %v5875, %v5828
    %v5892 = vsel %vm411, %v5876, %v5830
    %v5893 = vsel %vm411, %v5877, %v5832
    %v5894 = vsel %vm411, %v5878, %v5834
    %v5895 = vsel %vm411, %v5879, %v5836
    %v5896 = vsel %vm411, %v5880, %v5838
    %v5897 = vsel %vm411, %v5881, %v5840
    %v5898 = vsel %vm411, %v5882, %v5842
    %v5899 = vsel %vm411, %v5883, %v5844
    %v5900 = vsel %vm411, %v5884, %v5846
    %v5901 = vsel %vm411, %v5885, %v5848
    %v5902 = vsel %vm411, %v5886, %v5850
    %v5903 = vsel %vm411, %v5887, %v5852
    %v5904 = vsel %vm411, %v5888, %v5854
    %v5905 = vsel %vm411, %v5889, %v5856
    %v5906 = vsel %vm411, %v5890, %v5858
    %s5907 = scalar_lea.vmem %s8, 288
    %v5908 = vld [vmem:[%s5907] sm:$0xff]
    %v5909 = vld [vmem:[%s5907 + $0x8] sm:$0xff]
    %v5910 = vld [vmem:[%s5907 + $0x10] sm:$0xff]
    %v5911 = vld [vmem:[%s5907 + $0x18] sm:$0xff]
    %v5912 = vld [vmem:[%s5907 + $0x20] sm:$0xff]
    %v5913 = vld [vmem:[%s5907 + $0x28] sm:$0xff]
    %v5914 = vld [vmem:[%s5907 + $0x30] sm:$0xff]
    %v5915 = vld [vmem:[%s5907 + $0x38] sm:$0xff]
    %v5916 = vld [vmem:[%s5907 + $0x40] sm:$0xff]
    %v5917 = vld [vmem:[%s5907 + $0x48] sm:$0xff]
    %v5918 = vld [vmem:[%s5907 + $0x50] sm:$0xff]
    %v5919 = vld [vmem:[%s5907 + $0x58] sm:$0xff]
    %s5920 = scalar_lea.vmem %s9, 3
    %v5921 = vld [vmem:[%s5920] sm:$0x1]
    %v5923 = vlaneseq
    %v5924 = vshrl.u32 %v5923, 7
    %v5925 = vsub.s32 0, %v5924
    %v5926 = vrot.slane %v5921, %v5925
    %v5929 = vsel %vm1435, %v5891, 0
    %v5932 = vsel %vm1435, %v5892, 0
    %v5935 = vsel %vm1435, %v5893, 0
    %v5938 = vsel %vm1435, %v5894, 0
    %v5941 = vsel %vm1435, %v5895, 0
    %v5944 = vsel %vm1435, %v5896, 0
    %v5947 = vsel %vm1435, %v5897, 0
    %v5950 = vsel %vm1435, %v5898, 0
    %v5953 = vsel %vm1435, %v5899, 0
    %v5956 = vsel %vm1435, %v5900, 0
    %v5959 = vsel %vm1435, %v5901, 0
    %v5962 = vsel %vm1435, %v5902, 0
    %v5965 = vsel %vm1435, %v5903, 0
    %v5968 = vsel %vm1435, %v5904, 0
    %v5971 = vsel %vm1435, %v5905, 0
    %v5974 = vsel %vm1435, %v5906, 0
    %5976 = vmatprep.subr.mxu0 0.0
    %5977 = vmatpush1.msra.mxu0 0.0
    %5978 = vmatprep.subr.mxu0 0.0
    %5979 = vmatpush1.msra.mxu0 0.0
    %5980 = vmatprep.subr.mxu0 0.0
    %5981 = vmatpush1.msra.mxu0 0.0
    %5982 = vmatprep.subr.mxu0 0.0
    %5983 = vmatpush1.msra.mxu0 0.0
    %5984 = vmatprep.subr.mxu0 0.0
    %5985 = vmatpush1.msra.mxu0 %v5919
    %5986 = vmatprep.subr.mxu0 0.0
    %5987 = vmatpush1.msra.mxu0 %v5918
    %5988 = vmatprep.subr.mxu0 0.0
    %5989 = vmatpush1.msra.mxu0 %v5917
    %5990 = vmatprep.subr.mxu0 0.0
    %5991 = vmatpush1.msra.mxu0 %v5916
    %5992 = vmatprep.subr.mxu0 0.0
    %5993 = vmatpush1.msra.mxu0 %v5915
    %5994 = vmatprep.subr.mxu0 0.0
    %5995 = vmatpush1.msra.mxu0 %v5914
    %5996 = vmatprep.subr.mxu0 0.0
    %5997 = vmatpush1.msra.mxu0 %v5913
    %5998 = vmatprep.subr.mxu0 0.0
    %5999 = vmatpush1.msra.mxu0 %v5912
    %6000 = vmatprep.subr.mxu0 0.0
    %6001 = vmatpush1.msra.mxu0 %v5911
    %6002 = vmatprep.subr.mxu0 0.0
    %6003 = vmatpush1.msra.mxu0 %v5910
    %6004 = vmatprep.subr.mxu0 0.0
    %6005 = vmatpush1.msra.mxu0 %v5909
    %6006 = vmatprep.subr.mxu0 0.0
    %6007 = vmatpush1.msra.mxu0 %v5908
    %6008 = vmatprep.subr.mxu0 0.0
    %6009 = vmatpush2.msra.mxu0 0.0
    %6010 = vmatprep.subr.mxu0 0.0
    %6011 = vmatpush2.msra.mxu0 0.0
    %6012 = vmatprep.subr.mxu0 0.0
    %6013 = vmatpush2.msra.mxu0 0.0
    %6014 = vmatprep.subr.mxu0 0.0
    %6015 = vmatpush2.msra.mxu0 0.0
    %6016 = vmatprep.subr.mxu0 0.0
    %6017 = vmatpush2.msra.mxu0 0.0
    %6018 = vmatprep.subr.mxu0 0.0
    %6019 = vmatpush2.msra.mxu0 0.0
    %6020 = vmatprep.subr.mxu0 0.0
    %6021 = vmatpush2.msra.mxu0 0.0
    %6022 = vmatprep.subr.mxu0 0.0
    %6023 = vmatpush2.msra.mxu0 0.0
    %6024 = vmatprep.subr.mxu0 0.0
    %6025 = vmatpush2.msra.mxu0 0.0
    %6026 = vmatprep.subr.mxu0 0.0
    %6027 = vmatpush2.msra.mxu0 0.0
    %6028 = vmatprep.subr.mxu0 0.0
    %6029 = vmatpush2.msra.mxu0 0.0
    %6030 = vmatprep.subr.mxu0 0.0
    %6031 = vmatpush2.msra.mxu0 0.0
    %6032 = vmatprep.subr.mxu0 0.0
    %6033 = vmatpush2.msra.mxu0 0.0
    %6034 = vmatprep.subr.mxu0 0.0
    %6035 = vmatpush2.msra.mxu0 0.0
    %6036 = vmatprep.subr.mxu0 0.0
    %6037 = vmatpush2.msra.mxu0 0.0
    %6038 = vmatprep.subr.mxu0 0.0
    %6039 = vmatpush2.msra.mxu0 0.0
    %6040 = vmatprep.mubr.f32.mxu0 0.0
    %6041 = vmatmul.mubr.f32.gmra.mxu0 %v5929
    %v6042 = vpop.f32.mrf.mxu0
    %v6043 = vadd.f32 %v5926, %v6042
    %v6044 = vpop.f32.mrf.mxu0
    %6045 = vmatprep.mubr.f32.mxu0 0.0
    %6046 = vmatmul.mubr.f32.gmra.mxu0 %v5932
    %v6047 = vpop.f32.mrf.mxu0
    %v6048 = vadd.f32 %v5926, %v6047
    %v6049 = vpop.f32.mrf.mxu0
    %6050 = vmatprep.mubr.f32.mxu0 0.0
    %6051 = vmatmul.mubr.f32.gmra.mxu0 %v5935
    %v6052 = vpop.f32.mrf.mxu0
    %v6053 = vadd.f32 %v5926, %v6052
    %v6054 = vpop.f32.mrf.mxu0
    %6055 = vmatprep.mubr.f32.mxu0 0.0
    %6056 = vmatmul.mubr.f32.gmra.mxu0 %v5938
    %v6057 = vpop.f32.mrf.mxu0
    %v6058 = vadd.f32 %v5926, %v6057
    %v6059 = vpop.f32.mrf.mxu0
    %6060 = vmatprep.mubr.f32.mxu0 0.0
    %6061 = vmatmul.mubr.f32.gmra.mxu0 %v5941
    %v6062 = vpop.f32.mrf.mxu0
    %v6063 = vadd.f32 %v5926, %v6062
    %v6064 = vpop.f32.mrf.mxu0
    %6065 = vmatprep.mubr.f32.mxu0 0.0
    %6066 = vmatmul.mubr.f32.gmra.mxu0 %v5944
    %v6067 = vpop.f32.mrf.mxu0
    %v6068 = vadd.f32 %v5926, %v6067
    %v6069 = vpop.f32.mrf.mxu0
    %6070 = vmatprep.mubr.f32.mxu0 0.0
    %6071 = vmatmul.mubr.f32.gmra.mxu0 %v5947
    %v6072 = vpop.f32.mrf.mxu0
    %v6073 = vadd.f32 %v5926, %v6072
    %v6074 = vpop.f32.mrf.mxu0
    %6075 = vmatprep.mubr.f32.mxu0 0.0
    %6076 = vmatmul.mubr.f32.gmra.mxu0 %v5950
    %v6077 = vpop.f32.mrf.mxu0
    %v6078 = vadd.f32 %v5926, %v6077
    %v6079 = vpop.f32.mrf.mxu0
    %6080 = vmatprep.mubr.f32.mxu0 0.0
    %6081 = vmatmul.mubr.f32.gmra.mxu0 %v5953
    %v6082 = vpop.f32.mrf.mxu0
    %v6083 = vadd.f32 %v5926, %v6082
    %v6084 = vpop.f32.mrf.mxu0
    %6085 = vmatprep.mubr.f32.mxu0 0.0
    %6086 = vmatmul.mubr.f32.gmra.mxu0 %v5956
    %v6087 = vpop.f32.mrf.mxu0
    %v6088 = vadd.f32 %v5926, %v6087
    %v6089 = vpop.f32.mrf.mxu0
    %6090 = vmatprep.mubr.f32.mxu0 0.0
    %6091 = vmatmul.mubr.f32.gmra.mxu0 %v5959
    %v6092 = vpop.f32.mrf.mxu0
    %v6093 = vadd.f32 %v5926, %v6092
    %v6094 = vpop.f32.mrf.mxu0
    %6095 = vmatprep.mubr.f32.mxu0 0.0
    %6096 = vmatmul.mubr.f32.gmra.mxu0 %v5962
    %v6097 = vpop.f32.mrf.mxu0
    %v6098 = vadd.f32 %v5926, %v6097
    %v6099 = vpop.f32.mrf.mxu0
    %6100 = vmatprep.mubr.f32.mxu0 0.0
    %6101 = vmatmul.mubr.f32.gmra.mxu0 %v5965
    %v6102 = vpop.f32.mrf.mxu0
    %v6103 = vadd.f32 %v5926, %v6102
    %v6104 = vpop.f32.mrf.mxu0
    %6105 = vmatprep.mubr.f32.mxu0 0.0
    %6106 = vmatmul.mubr.f32.gmra.mxu0 %v5968
    %v6107 = vpop.f32.mrf.mxu0
    %v6108 = vadd.f32 %v5926, %v6107
    %v6109 = vpop.f32.mrf.mxu0
    %6110 = vmatprep.mubr.f32.mxu0 0.0
    %6111 = vmatmul.mubr.f32.gmra.mxu0 %v5971
    %v6112 = vpop.f32.mrf.mxu0
    %v6113 = vadd.f32 %v5926, %v6112
    %v6114 = vpop.f32.mrf.mxu0
    %6115 = vmatprep.mubr.f32.mxu0 0.0
    %6116 = vmatmul.mubr.f32.gmra.mxu0 %v5974
    %v6117 = vpop.f32.mrf.mxu0
    %v6118 = vadd.f32 %v5926, %v6117
    %v6119 = vpop.f32.mrf.mxu0
    %6120 = vdwg.mxu0
    %v6121 = vmax.f32 %v6043, 0.0
    %v6122 = vmax.f32 %v6048, 0.0
    %v6123 = vmax.f32 %v6053, 0.0
    %v6124 = vmax.f32 %v6058, 0.0
    %v6125 = vmax.f32 %v6063, 0.0
    %v6126 = vmax.f32 %v6068, 0.0
    %v6127 = vmax.f32 %v6073, 0.0
    %v6128 = vmax.f32 %v6078, 0.0
    %v6129 = vmax.f32 %v6083, 0.0
    %v6130 = vmax.f32 %v6088, 0.0
    %v6131 = vmax.f32 %v6093, 0.0
    %v6132 = vmax.f32 %v6098, 0.0
    %v6133 = vmax.f32 %v6103, 0.0
    %v6134 = vmax.f32 %v6108, 0.0
    %v6135 = vmax.f32 %v6113, 0.0
    %v6136 = vmax.f32 %v6118, 0.0
    %s6137 = scalar_lea.vmem %s10, 96
    %v6138 = vld [vmem:[%s6137] sm:$0xff]
    %v6139 = vld [vmem:[%s6137 + $0x8] sm:$0xff]
    %v6140 = vld [vmem:[%s6137 + $0x10] sm:$0xff]
    %v6141 = vld [vmem:[%s6137 + $0x18] sm:$0xff]
    %s6142 = scalar_lea.vmem %s11, 3
    %v6143 = vld [vmem:[%s6142] sm:$0x1]
    %v6145 = vlaneseq
    %v6146 = vshrl.u32 %v6145, 7
    %v6147 = vsub.s32 0, %v6146
    %v6148 = vrot.slane %v6143, %v6147
    %v6151 = vsel %vm926, %v6121, 0
    %v6154 = vsel %vm926, %v6122, 0
    %v6157 = vsel %vm926, %v6123, 0
    %v6160 = vsel %vm926, %v6124, 0
    %v6163 = vsel %vm926, %v6125, 0
    %v6166 = vsel %vm926, %v6126, 0
    %v6169 = vsel %vm926, %v6127, 0
    %v6172 = vsel %vm926, %v6128, 0
    %v6175 = vsel %vm926, %v6129, 0
    %v6178 = vsel %vm926, %v6130, 0
    %v6181 = vsel %vm926, %v6131, 0
    %v6184 = vsel %vm926, %v6132, 0
    %v6187 = vsel %vm926, %v6133, 0
    %v6190 = vsel %vm926, %v6134, 0
    %v6193 = vsel %vm926, %v6135, 0
    %v6196 = vsel %vm926, %v6136, 0
    %6198 = vmatprep.subr.mxu0 0.0
    %6199 = vmatpush1.msra.mxu0 0.0
    %6200 = vmatprep.subr.mxu0 0.0
    %6201 = vmatpush1.msra.mxu0 0.0
    %6202 = vmatprep.subr.mxu0 0.0
    %6203 = vmatpush1.msra.mxu0 0.0
    %6204 = vmatprep.subr.mxu0 0.0
    %6205 = vmatpush1.msra.mxu0 0.0
    %6206 = vmatprep.subr.mxu0 0.0
    %6207 = vmatpush1.msra.mxu0 0.0
    %6208 = vmatprep.subr.mxu0 0.0
    %6209 = vmatpush1.msra.mxu0 0.0
    %6210 = vmatprep.subr.mxu0 0.0
    %6211 = vmatpush1.msra.mxu0 0.0
    %6212 = vmatprep.subr.mxu0 0.0
    %6213 = vmatpush1.msra.mxu0 0.0
    %6214 = vmatprep.subr.mxu0 0.0
    %6215 = vmatpush1.msra.mxu0 0.0
    %6216 = vmatprep.subr.mxu0 0.0
    %6217 = vmatpush1.msra.mxu0 0.0
    %6218 = vmatprep.subr.mxu0 0.0
    %6219 = vmatpush1.msra.mxu0 0.0
    %6220 = vmatprep.subr.mxu0 0.0
    %6221 = vmatpush1.msra.mxu0 0.0
    %6222 = vmatprep.subr.mxu0 0.0
    %6223 = vmatpush1.msra.mxu0 %v6141
    %6224 = vmatprep.subr.mxu0 0.0
    %6225 = vmatpush1.msra.mxu0 %v6140
    %6226 = vmatprep.subr.mxu0 0.0
    %6227 = vmatpush1.msra.mxu0 %v6139
    %6228 = vmatprep.subr.mxu0 0.0
    %6229 = vmatpush1.msra.mxu0 %v6138
    %6230 = vmatprep.subr.mxu0 0.0
    %6231 = vmatpush2.msra.mxu0 0.0
    %6232 = vmatprep.subr.mxu0 0.0
    %6233 = vmatpush2.msra.mxu0 0.0
    %6234 = vmatprep.subr.mxu0 0.0
    %6235 = vmatpush2.msra.mxu0 0.0
    %6236 = vmatprep.subr.mxu0 0.0
    %6237 = vmatpush2.msra.mxu0 0.0
    %6238 = vmatprep.subr.mxu0 0.0
    %6239 = vmatpush2.msra.mxu0 0.0
    %6240 = vmatprep.subr.mxu0 0.0
    %6241 = vmatpush2.msra.mxu0 0.0
    %6242 = vmatprep.subr.mxu0 0.0
    %6243 = vmatpush2.msra.mxu0 0.0
    %6244 = vmatprep.subr.mxu0 0.0
    %6245 = vmatpush2.msra.mxu0 0.0
    %6246 = vmatprep.subr.mxu0 0.0
    %6247 = vmatpush2.msra.mxu0 0.0
    %6248 = vmatprep.subr.mxu0 0.0
    %6249 = vmatpush2.msra.mxu0 0.0
    %6250 = vmatprep.subr.mxu0 0.0
    %6251 = vmatpush2.msra.mxu0 0.0
    %6252 = vmatprep.subr.mxu0 0.0
    %6253 = vmatpush2.msra.mxu0 0.0
    %6254 = vmatprep.subr.mxu0 0.0
    %6255 = vmatpush2.msra.mxu0 0.0
    %6256 = vmatprep.subr.mxu0 0.0
    %6257 = vmatpush2.msra.mxu0 0.0
    %6258 = vmatprep.subr.mxu0 0.0
    %6259 = vmatpush2.msra.mxu0 0.0
    %6260 = vmatprep.subr.mxu0 0.0
    %6261 = vmatpush2.msra.mxu0 0.0
    %6262 = vmatprep.mubr.f32.mxu0 0.0
    %6263 = vmatmul.mubr.f32.gmra.mxu0 %v6151
    %v6264 = vpop.f32.mrf.mxu0
    %v6265 = vadd.f32 %v6148, %v6264
    %v6266 = vpop.f32.mrf.mxu0
    %6267 = vmatprep.mubr.f32.mxu0 0.0
    %6268 = vmatmul.mubr.f32.gmra.mxu0 %v6154
    %v6269 = vpop.f32.mrf.mxu0
    %v6270 = vadd.f32 %v6148, %v6269
    %v6271 = vpop.f32.mrf.mxu0
    %6272 = vmatprep.mubr.f32.mxu0 0.0
    %6273 = vmatmul.mubr.f32.gmra.mxu0 %v6157
    %v6274 = vpop.f32.mrf.mxu0
    %v6275 = vadd.f32 %v6148, %v6274
    %v6276 = vpop.f32.mrf.mxu0
    %6277 = vmatprep.mubr.f32.mxu0 0.0
    %6278 = vmatmul.mubr.f32.gmra.mxu0 %v6160
    %v6279 = vpop.f32.mrf.mxu0
    %v6280 = vadd.f32 %v6148, %v6279
    %v6281 = vpop.f32.mrf.mxu0
    %6282 = vmatprep.mubr.f32.mxu0 0.0
    %6283 = vmatmul.mubr.f32.gmra.mxu0 %v6163
    %v6284 = vpop.f32.mrf.mxu0
    %v6285 = vadd.f32 %v6148, %v6284
    %v6286 = vpop.f32.mrf.mxu0
    %6287 = vmatprep.mubr.f32.mxu0 0.0
    %6288 = vmatmul.mubr.f32.gmra.mxu0 %v6166
    %v6289 = vpop.f32.mrf.mxu0
    %v6290 = vadd.f32 %v6148, %v6289
    %v6291 = vpop.f32.mrf.mxu0
    %6292 = vmatprep.mubr.f32.mxu0 0.0
    %6293 = vmatmul.mubr.f32.gmra.mxu0 %v6169
    %v6294 = vpop.f32.mrf.mxu0
    %v6295 = vadd.f32 %v6148, %v6294
    %v6296 = vpop.f32.mrf.mxu0
    %6297 = vmatprep.mubr.f32.mxu0 0.0
    %6298 = vmatmul.mubr.f32.gmra.mxu0 %v6172
    %v6299 = vpop.f32.mrf.mxu0
    %v6300 = vadd.f32 %v6148, %v6299
    %v6301 = vpop.f32.mrf.mxu0
    %6302 = vmatprep.mubr.f32.mxu0 0.0
    %6303 = vmatmul.mubr.f32.gmra.mxu0 %v6175
    %v6304 = vpop.f32.mrf.mxu0
    %v6305 = vadd.f32 %v6148, %v6304
    %v6306 = vpop.f32.mrf.mxu0
    %6307 = vmatprep.mubr.f32.mxu0 0.0
    %6308 = vmatmul.mubr.f32.gmra.mxu0 %v6178
    %v6309 = vpop.f32.mrf.mxu0
    %v6310 = vadd.f32 %v6148, %v6309
    %v6311 = vpop.f32.mrf.mxu0
    %6312 = vmatprep.mubr.f32.mxu0 0.0
    %6313 = vmatmul.mubr.f32.gmra.mxu0 %v6181
    %v6314 = vpop.f32.mrf.mxu0
    %v6315 = vadd.f32 %v6148, %v6314
    %v6316 = vpop.f32.mrf.mxu0
    %6317 = vmatprep.mubr.f32.mxu0 0.0
    %6318 = vmatmul.mubr.f32.gmra.mxu0 %v6184
    %v6319 = vpop.f32.mrf.mxu0
    %v6320 = vadd.f32 %v6148, %v6319
    %v6321 = vpop.f32.mrf.mxu0
    %6322 = vmatprep.mubr.f32.mxu0 0.0
    %6323 = vmatmul.mubr.f32.gmra.mxu0 %v6187
    %v6324 = vpop.f32.mrf.mxu0
    %v6325 = vadd.f32 %v6148, %v6324
    %v6326 = vpop.f32.mrf.mxu0
    %6327 = vmatprep.mubr.f32.mxu0 0.0
    %6328 = vmatmul.mubr.f32.gmra.mxu0 %v6190
    %v6329 = vpop.f32.mrf.mxu0
    %v6330 = vadd.f32 %v6148, %v6329
    %v6331 = vpop.f32.mrf.mxu0
    %6332 = vmatprep.mubr.f32.mxu0 0.0
    %6333 = vmatmul.mubr.f32.gmra.mxu0 %v6193
    %v6334 = vpop.f32.mrf.mxu0
    %v6335 = vadd.f32 %v6148, %v6334
    %v6336 = vpop.f32.mrf.mxu0
    %6337 = vmatprep.mubr.f32.mxu0 0.0
    %6338 = vmatmul.mubr.f32.gmra.mxu0 %v6196
    %v6339 = vpop.f32.mrf.mxu0
    %v6340 = vadd.f32 %v6148, %v6339
    %v6341 = vpop.f32.mrf.mxu0
    %6342 = vdwg.mxu0
    %v6343 = vadd.f32 %v6265, %v4845
    %v6344 = vadd.f32 %v6270, %v4846
    %v6345 = vadd.f32 %v6275, %v4847
    %v6346 = vadd.f32 %v6280, %v4848
    %v6347 = vadd.f32 %v6285, %v4849
    %v6348 = vadd.f32 %v6290, %v4850
    %v6349 = vadd.f32 %v6295, %v4851
    %v6350 = vadd.f32 %v6300, %v4852
    %v6351 = vadd.f32 %v6305, %v4853
    %v6352 = vadd.f32 %v6310, %v4854
    %v6353 = vadd.f32 %v6315, %v4855
    %v6354 = vadd.f32 %v6320, %v4856
    %v6355 = vadd.f32 %v6325, %v4857
    %v6356 = vadd.f32 %v6330, %v4858
    %v6357 = vadd.f32 %v6335, %v4859
    %v6358 = vadd.f32 %v6340, %v4860
    %v6359 = vld [vmem:[%s12] sm:$0xff]
    %v6360 = vld [vmem:[%s12 + $0x8] sm:$0xff]
    %v6361 = vld [vmem:[%s12 + $0x10] sm:$0xff]
    %v6362 = vld [vmem:[%s12 + $0x18] sm:$0xff]
    %v6363 = vld [vmem:[%s13] sm:$0x1]
    %v6365 = vlaneseq
    %v6366 = vshrl.u32 %v6365, 7
    %v6367 = vsub.s32 0, %v6366
    %v6368 = vrot.slane %v6363, %v6367
    %v6371 = vsel %vm926, %v6343, 0
    %v6374 = vsel %vm926, %v6344, 0
    %v6377 = vsel %vm926, %v6345, 0
    %v6380 = vsel %vm926, %v6346, 0
    %v6383 = vsel %vm926, %v6347, 0
    %v6386 = vsel %vm926, %v6348, 0
    %v6389 = vsel %vm926, %v6349, 0
    %v6392 = vsel %vm926, %v6350, 0
    %v6395 = vsel %vm926, %v6351, 0
    %v6398 = vsel %vm926, %v6352, 0
    %v6401 = vsel %vm926, %v6353, 0
    %v6404 = vsel %vm926, %v6354, 0
    %v6407 = vsel %vm926, %v6355, 0
    %v6410 = vsel %vm926, %v6356, 0
    %v6413 = vsel %vm926, %v6357, 0
    %v6416 = vsel %vm926, %v6358, 0
    %6418 = vmatprep.subr.mxu0 0.0
    %6419 = vmatpush1.msra.mxu0 0.0
    %6420 = vmatprep.subr.mxu0 0.0
    %6421 = vmatpush1.msra.mxu0 0.0
    %6422 = vmatprep.subr.mxu0 0.0
    %6423 = vmatpush1.msra.mxu0 0.0
    %6424 = vmatprep.subr.mxu0 0.0
    %6425 = vmatpush1.msra.mxu0 0.0
    %6426 = vmatprep.subr.mxu0 0.0
    %6427 = vmatpush1.msra.mxu0 0.0
    %6428 = vmatprep.subr.mxu0 0.0
    %6429 = vmatpush1.msra.mxu0 0.0
    %6430 = vmatprep.subr.mxu0 0.0
    %6431 = vmatpush1.msra.mxu0 0.0
    %6432 = vmatprep.subr.mxu0 0.0
    %6433 = vmatpush1.msra.mxu0 0.0
    %6434 = vmatprep.subr.mxu0 0.0
    %6435 = vmatpush1.msra.mxu0 0.0
    %6436 = vmatprep.subr.mxu0 0.0
    %6437 = vmatpush1.msra.mxu0 0.0
    %6438 = vmatprep.subr.mxu0 0.0
    %6439 = vmatpush1.msra.mxu0 0.0
    %6440 = vmatprep.subr.mxu0 0.0
    %6441 = vmatpush1.msra.mxu0 0.0
    %6442 = vmatprep.subr.mxu0 0.0
    %6443 = vmatpush1.msra.mxu0 %v6362
    %6444 = vmatprep.subr.mxu0 0.0
    %6445 = vmatpush1.msra.mxu0 %v6361
    %6446 = vmatprep.subr.mxu0 0.0
    %6447 = vmatpush1.msra.mxu0 %v6360
    %6448 = vmatprep.subr.mxu0 0.0
    %6449 = vmatpush1.msra.mxu0 %v6359
    %6450 = vmatprep.subr.mxu0 0.0
    %6451 = vmatpush2.msra.mxu0 0.0
    %6452 = vmatprep.subr.mxu0 0.0
    %6453 = vmatpush2.msra.mxu0 0.0
    %6454 = vmatprep.subr.mxu0 0.0
    %6455 = vmatpush2.msra.mxu0 0.0
    %6456 = vmatprep.subr.mxu0 0.0
    %6457 = vmatpush2.msra.mxu0 0.0
    %6458 = vmatprep.subr.mxu0 0.0
    %6459 = vmatpush2.msra.mxu0 0.0
    %6460 = vmatprep.subr.mxu0 0.0
    %6461 = vmatpush2.msra.mxu0 0.0
    %6462 = vmatprep.subr.mxu0 0.0
    %6463 = vmatpush2.msra.mxu0 0.0
    %6464 = vmatprep.subr.mxu0 0.0
    %6465 = vmatpush2.msra.mxu0 0.0
    %6466 = vmatprep.subr.mxu0 0.0
    %6467 = vmatpush2.msra.mxu0 0.0
    %6468 = vmatprep.subr.mxu0 0.0
    %6469 = vmatpush2.msra.mxu0 0.0
    %6470 = vmatprep.subr.mxu0 0.0
    %6471 = vmatpush2.msra.mxu0 0.0
    %6472 = vmatprep.subr.mxu0 0.0
    %6473 = vmatpush2.msra.mxu0 0.0
    %6474 = vmatprep.subr.mxu0 0.0
    %6475 = vmatpush2.msra.mxu0 0.0
    %6476 = vmatprep.subr.mxu0 0.0
    %6477 = vmatpush2.msra.mxu0 0.0
    %6478 = vmatprep.subr.mxu0 0.0
    %6479 = vmatpush2.msra.mxu0 0.0
    %6480 = vmatprep.subr.mxu0 0.0
    %6481 = vmatpush2.msra.mxu0 0.0
    %6482 = vmatprep.mubr.f32.mxu0 0.0
    %6483 = vmatmul.mubr.f32.gmra.mxu0 %v6371
    %v6484 = vpop.f32.mrf.mxu0
    %v6485 = vadd.f32 %v6368, %v6484
    %v6486 = vpop.f32.mrf.mxu0
    %6487 = vmatprep.mubr.f32.mxu0 0.0
    %6488 = vmatmul.mubr.f32.gmra.mxu0 %v6374
    %v6489 = vpop.f32.mrf.mxu0
    %v6490 = vadd.f32 %v6368, %v6489
    %v6491 = vpop.f32.mrf.mxu0
    %6492 = vmatprep.mubr.f32.mxu0 0.0
    %6493 = vmatmul.mubr.f32.gmra.mxu0 %v6377
    %v6494 = vpop.f32.mrf.mxu0
    %v6495 = vadd.f32 %v6368, %v6494
    %v6496 = vpop.f32.mrf.mxu0
    %6497 = vmatprep.mubr.f32.mxu0 0.0
    %6498 = vmatmul.mubr.f32.gmra.mxu0 %v6380
    %v6499 = vpop.f32.mrf.mxu0
    %v6500 = vadd.f32 %v6368, %v6499
    %v6501 = vpop.f32.mrf.mxu0
    %6502 = vmatprep.mubr.f32.mxu0 0.0
    %6503 = vmatmul.mubr.f32.gmra.mxu0 %v6383
    %v6504 = vpop.f32.mrf.mxu0
    %v6505 = vadd.f32 %v6368, %v6504
    %v6506 = vpop.f32.mrf.mxu0
    %6507 = vmatprep.mubr.f32.mxu0 0.0
    %6508 = vmatmul.mubr.f32.gmra.mxu0 %v6386
    %v6509 = vpop.f32.mrf.mxu0
    %v6510 = vadd.f32 %v6368, %v6509
    %v6511 = vpop.f32.mrf.mxu0
    %6512 = vmatprep.mubr.f32.mxu0 0.0
    %6513 = vmatmul.mubr.f32.gmra.mxu0 %v6389
    %v6514 = vpop.f32.mrf.mxu0
    %v6515 = vadd.f32 %v6368, %v6514
    %v6516 = vpop.f32.mrf.mxu0
    %6517 = vmatprep.mubr.f32.mxu0 0.0
    %6518 = vmatmul.mubr.f32.gmra.mxu0 %v6392
    %v6519 = vpop.f32.mrf.mxu0
    %v6520 = vadd.f32 %v6368, %v6519
    %v6521 = vpop.f32.mrf.mxu0
    %6522 = vmatprep.mubr.f32.mxu0 0.0
    %6523 = vmatmul.mubr.f32.gmra.mxu0 %v6395
    %v6524 = vpop.f32.mrf.mxu0
    %v6525 = vadd.f32 %v6368, %v6524
    %v6526 = vpop.f32.mrf.mxu0
    %6527 = vmatprep.mubr.f32.mxu0 0.0
    %6528 = vmatmul.mubr.f32.gmra.mxu0 %v6398
    %v6529 = vpop.f32.mrf.mxu0
    %v6530 = vadd.f32 %v6368, %v6529
    %v6531 = vpop.f32.mrf.mxu0
    %6532 = vmatprep.mubr.f32.mxu0 0.0
    %6533 = vmatmul.mubr.f32.gmra.mxu0 %v6401
    %v6534 = vpop.f32.mrf.mxu0
    %v6535 = vadd.f32 %v6368, %v6534
    %v6536 = vpop.f32.mrf.mxu0
    %6537 = vmatprep.mubr.f32.mxu0 0.0
    %6538 = vmatmul.mubr.f32.gmra.mxu0 %v6404
    %v6539 = vpop.f32.mrf.mxu0
    %v6540 = vadd.f32 %v6368, %v6539
    %v6541 = vpop.f32.mrf.mxu0
    %6542 = vmatprep.mubr.f32.mxu0 0.0
    %6543 = vmatmul.mubr.f32.gmra.mxu0 %v6407
    %v6544 = vpop.f32.mrf.mxu0
    %v6545 = vadd.f32 %v6368, %v6544
    %v6546 = vpop.f32.mrf.mxu0
    %6547 = vmatprep.mubr.f32.mxu0 0.0
    %6548 = vmatmul.mubr.f32.gmra.mxu0 %v6410
    %v6549 = vpop.f32.mrf.mxu0
    %v6550 = vadd.f32 %v6368, %v6549
    %v6551 = vpop.f32.mrf.mxu0
    %6552 = vmatprep.mubr.f32.mxu0 0.0
    %6553 = vmatmul.mubr.f32.gmra.mxu0 %v6413
    %v6554 = vpop.f32.mrf.mxu0
    %v6555 = vadd.f32 %v6368, %v6554
    %v6556 = vpop.f32.mrf.mxu0
    %6557 = vmatprep.mubr.f32.mxu0 0.0
    %6558 = vmatmul.mubr.f32.gmra.mxu0 %v6416
    %v6559 = vpop.f32.mrf.mxu0
    %v6560 = vadd.f32 %v6368, %v6559
    %v6561 = vpop.f32.mrf.mxu0
    %6562 = vdwg.mxu0
    %6563 = vst [vmem:[#allocation2] sm:$0xff] %v6485
    %6564 = vst [vmem:[#allocation2 + $0x8] sm:$0xff] %v6490
    %6565 = vst [vmem:[#allocation2 + $0x10] sm:$0xff] %v6495
    %6566 = vst [vmem:[#allocation2 + $0x18] sm:$0xff] %v6500
    %6567 = vst [vmem:[#allocation2 + $0x20] sm:$0xff] %v6505
    %6568 = vst [vmem:[#allocation2 + $0x28] sm:$0xff] %v6510
    %6569 = vst [vmem:[#allocation2 + $0x30] sm:$0xff] %v6515
    %6570 = vst [vmem:[#allocation2 + $0x38] sm:$0xff] %v6520
    %6571 = vst [vmem:[#allocation2 + $0x40] sm:$0xff] %v6525
    %6572 = vst [vmem:[#allocation2 + $0x48] sm:$0xff] %v6530
    %6573 = vst [vmem:[#allocation2 + $0x50] sm:$0xff] %v6535
    %6574 = vst [vmem:[#allocation2 + $0x58] sm:$0xff] %v6540
    %6575 = vst [vmem:[#allocation2 + $0x60] sm:$0xff] %v6545
    %6576 = vst [vmem:[#allocation2 + $0x68] sm:$0xff] %v6550
    %6577 = vst [vmem:[#allocation2 + $0x70] sm:$0xff] %v6555
    %6578 = vst [vmem:[#allocation2 + $0x78] sm:$0xff] %v6560
    // Predicated region
    $region58: #{tpu_custom_call.1} parent=1 // pred_check
      _
    $region59: #{tpu_custom_call.1} parent=1 // pred_check_branch
      %6580 = sbr.rel (0) target = $region61
    $region60: #{tpu_custom_call.1} parent=1 // pred_region
      %s6582 = ssub.s32 2048, 2048
      %6583 = vsyncadd [#allocation3], %s6582
      %s6584 = sshll.u32 [#allocation2], 4
      %s6585 = int_to_ptr.vmem [resolvable:$true] %s6584
      %6590 = dma.vmem_to_hbm [thread:$0]  %s6585, 2048, %s14, [#allocation3], 128, 128, 8
    $region61: #{tpu_custom_call.1} parent=1 // pred_fallthru
      _
    // Predicated region
    $region62: #{tpu_custom_call.1} parent=1 // pred_check
      _
    $region63: #{tpu_custom_call.1} parent=1 // pred_check_branch
      %6592 = sbr.rel (0) target = $region65
    $region64: #{tpu_custom_call.1} parent=1 // pred_region
      %6593 = dma.done [#allocation3], 2048
    $region65: #{tpu_custom_call.1} parent=1 // pred_fallthru
      _
    %6594 = vsyncpa [#allocation3], 1

</llo_original>
